<compile_context>
chip_gen: v6e
topology: v6e:2x2x1
jax: 0.10.0
libtpu: 0.0.40
codegen_flags: <defaults>
</compile_context>

<pallas_src>
import functools
import math

import jax
import jax.numpy as jnp
from jax.experimental import pallas as pl
from jax.experimental.pallas import tpu as pltpu


_EPS = 1e-5
# v7x has 64 MiB/TC physical VMEM -> leave headroom for double buffering.
_VMEM_LIMIT = 48 * 1024 * 1024


# ---------------------------------------------------------------------------
# Kernel 1: generic fused conv layer
#   y[m] = bias + sum_t shift_{s_t}( x @ W_t )[m]
#   (+ optional InstanceNorm with phase-paired stats, + activation)
# shift s means "take the dot result of row m - s", rows outside [0, L) are 0.
# ---------------------------------------------------------------------------
def _fused_conv_kernel(x_ref, w_ref, b_ref, o_ref, *, shifts, norm_phases, act):
    # x_ref : (1, L, Cin)      bf16
    # w_ref : (T, Cin, Cout)   bf16
    # b_ref : (1, Cout)        f32
    # o_ref : (1, L, Cout)
    l = o_ref.shape[1]
    cout = o_ref.shape[2]
    x = x_ref[0]                                              # (L, Cin) bf16
    rows = jax.lax.broadcasted_iota(jnp.int32, (l, cout), 0)

    acc = jnp.zeros((l, cout), jnp.float32)
    for t, s in enumerate(shifts):
        a = jnp.dot(x, w_ref[t], preferred_element_type=jnp.float32)
        if s == 0:
            acc = acc + a
        elif s > 0:
            # value from row m - s, rows m < s contribute 0
            acc = acc + jnp.where(rows < s, 0.0, pltpu.roll(a, s, axis=0))
        else:
            # value from row m + |s|, rows m >= L + s contribute 0
            acc = acc + jnp.where(rows >= l + s, 0.0,
                                  pltpu.roll(a, l + s, axis=0))
    y = acc + b_ref[...]

    if norm_phases:
        # InstanceNorm1d: per-(sample, channel) stats over length, biased var,
        # eps=1e-5, no affine.  For norm_phases == 2, columns c and c+cout/2
        # hold the even/odd phases of the SAME channel (stem pairing /
        # polyphase ConvTranspose) and their statistics are combined via a
        # lane roll.  Exact because both phases have equal length (L even).
        mu = jnp.mean(y, axis=0, keepdims=True)
        if norm_phases == 2:
            mu = 0.5 * (mu + pltpu.roll(mu, cout // 2, axis=1))
        d = y - mu
        var = jnp.mean(d * d, axis=0, keepdims=True)
        if norm_phases == 2:
            var = 0.5 * (var + pltpu.roll(var, cout // 2, axis=1))
        y = d * jax.lax.rsqrt(var + _EPS)

    if act == "relu":
        y = jnp.maximum(y, 0.0)
    elif act == "tanh":
        y = jnp.tanh(y)

    o_ref[0] = y.astype(o_ref.dtype)


def _fused_conv(x, w_taps, bias, *, shifts, norm_phases, act,
                out_dtype=jnp.bfloat16):
    """x: (N, L, Cin); w_taps: (T, Cin, Cout) bf16 (prepared); bias: (1, Cout) f32."""
    n, l, cin = x.shape
    taps, _, cout = w_taps.shape
    assert taps == len(shifts)

    kernel = functools.partial(_fused_conv_kernel, shifts=tuple(shifts),
                               norm_phases=norm_phases, act=act)
    cost = pl.CostEstimate(
        flops=2 * n * l * taps * cin * cout,
        transcendentals=(n * l * cout) if act == "tanh" else 0,
        bytes_accessed=(n * l * cin * 2 + taps * cin * cout * 2 + cout * 4
                        + n * l * cout * jnp.dtype(out_dtype).itemsize),
    )
    return pl.pallas_call(
        kernel,
        out_shape=jax.ShapeDtypeStruct((n, l, cout), out_dtype),
        grid_spec=pltpu.PrefetchScalarGridSpec(
            num_scalar_prefetch=0,
            grid=(n,),
            in_specs=[
                pl.BlockSpec((1, l, cin), lambda i: (i, 0, 0)),
                pl.BlockSpec((taps, cin, cout), lambda i: (0, 0, 0)),
                pl.BlockSpec((1, cout), lambda i: (0, 0)),
            ],
            out_specs=pl.BlockSpec((1, l, cout), lambda i: (i, 0, 0)),
        ),
        compiler_params=pltpu.CompilerParams(
            dimension_semantics=("parallel",),
            vmem_limit_bytes=_VMEM_LIMIT),
        cost_estimate=cost,
    )(x.astype(jnp.bfloat16), w_taps, bias)


# ---------------------------------------------------------------------------
# Kernel 2: fully fused residual-block CHAIN
#   grid = (N, n_res); the activation lives in a (L+1, C) VMEM halo scratch
#   across the whole chain (one HBM read + one HBM write per sample total),
#   per-block weights are streamed by the BlockSpec pipeline.
# ---------------------------------------------------------------------------
def _resblock_chain_kernel(x_ref, w_ref, b_ref, o_ref, xs_ref, hs_ref):
    # x_ref : (1, L, C) bf16      w_ref : (6, C, C) bf16 (this block's 2 convs)
    # b_ref : (2, 1, C) f32       o_ref : (1, L, C) bf16
    # xs_ref/hs_ref : (L+1, C) bf16 scratch, row L stays zero (right halo).
    r = pl.program_id(1)
    l = o_ref.shape[1]
    c = o_ref.shape[2]

    @pl.when(r == 0)
    def _init():
        zero_row = jnp.zeros((1, c), xs_ref.dtype)
        xs_ref[pl.ds(l, 1), :] = zero_row
        hs_ref[pl.ds(l, 1), :] = zero_row
        xs_ref[pl.ds(0, l), :] = x_ref[0]

    rows = jax.lax.broadcasted_iota(jnp.int32, (l, c), 0)

    def conv3(src, w0, w1, w2, b):
        # 'same' K=3 pad=1 conv: out[j] = x[j-1]@W0 + x[j]@W1 + x[j+1]@W2
        # (right boundary via the zero halo row, left boundary via one roll).
        a1 = jnp.dot(src[pl.ds(0, l), :], w1, preferred_element_type=jnp.float32)
        a2 = jnp.dot(src[pl.ds(1, l), :], w2, preferred_element_type=jnp.float32)
        a0 = jnp.dot(src[pl.ds(0, l), :], w0, preferred_element_type=jnp.float32)
        y = a1 + a2 + b
        return y + jnp.where(rows == 0, 0.0, pltpu.roll(a0, 1, axis=0))

    def inorm(y):
        mu = jnp.mean(y, axis=0, keepdims=True)
        d = y - mu
        var = jnp.mean(d * d, axis=0, keepdims=True)
        return d * jax.lax.rsqrt(var + _EPS)

    # conv1 + IN + ReLU  (intermediate never leaves VMEM)
    h = jnp.maximum(inorm(conv3(xs_ref, w_ref[0], w_ref[1], w_ref[2],
                                b_ref[0])), 0.0)
    hs_ref[pl.ds(0, l), :] = h.astype(hs_ref.dtype)

    # conv2 + IN + residual add (f32), carried activation stays bf16 in VMEM
    y = inorm(conv3(hs_ref, w_ref[3], w_ref[4], w_ref[5], b_ref[1]))
    xs_ref[pl.ds(0, l), :] = (
        xs_ref[pl.ds(0, l), :].astype(jnp.float32) + y).astype(xs_ref.dtype)

    @pl.when(r == pl.num_programs(1) - 1)
    def _finalize():
        o_ref[0] = xs_ref[pl.ds(0, l), :]


def _resblock_chain(x, w_all, b_all):
    """x: (N, L, C) bf16; w_all: (n_res*6, C, C) bf16; b_all: (n_res*2, 1, C) f32."""
    n, l, c = x.shape
    n_res = w_all.shape[0] // 6
    if n_res == 0:
        return x
    cost = pl.CostEstimate(
        flops=2 * 2 * 3 * n * n_res * l * c * c,
        transcendentals=0,
        bytes_accessed=2 * n * l * c * 2 + n_res * (6 * c * c * 2 + 2 * c * 4),
    )
    return pl.pallas_call(
        _resblock_chain_kernel,
        out_shape=jax.ShapeDtypeStruct((n, l, c), jnp.bfloat16),
        grid_spec=pltpu.PrefetchScalarGridSpec(
            num_scalar_prefetch=0,
            grid=(n, n_res),
            in_specs=[
                pl.BlockSpec((1, l, c), lambda i, r: (i, 0, 0)),
                pl.BlockSpec((6, c, c), lambda i, r: (r, 0, 0)),
                pl.BlockSpec((2, 1, c), lambda i, r: (r, 0, 0)),
            ],
            out_specs=pl.BlockSpec((1, l, c), lambda i, r: (i, 0, 0)),
            scratch_shapes=[pltpu.VMEM((l + 1, c), jnp.bfloat16),
                            pltpu.VMEM((l + 1, c), jnp.bfloat16)],
        ),
        compiler_params=pltpu.CompilerParams(
            dimension_semantics=("parallel", "arbitrary"),
            vmem_limit_bytes=_VMEM_LIMIT),
        cost_estimate=cost,
    )(x.astype(jnp.bfloat16), w_all, b_all)


# ---------------------------------------------------------------------------
# Parameter init (PyTorch layouts) and one-time kernel-layout preparation
# ---------------------------------------------------------------------------
def _init_conv(key, cout, cin, k):
    kw, kb = jax.random.split(key)
    bound = 1.0 / math.sqrt(cin * k)
    w = jax.random.uniform(kw, (cout, cin, k), jnp.float32, -bound, bound)
    b = jax.random.uniform(kb, (cout,), jnp.float32, -bound, bound)
    return w, b


def _init_convT(key, cin, cout, k):
    kw, kb = jax.random.split(key)
    bound = 1.0 / math.sqrt(cin * k)
    w = jax.random.uniform(kw, (cin, cout, k), jnp.float32, -bound, bound)
    b = jax.random.uniform(kb, (cout,), jnp.float32, -bound, bound)
    return w, b


def init_generator_params(key, input_channels=1, output_channels=1,
                          n_residual_blocks=9):
    n_keys = 6 + 2 * n_residual_blocks
    keys = jax.random.split(key, n_keys)
    p = {}
    ki = iter(range(n_keys))
    p["c0_w"], p["c0_b"] = _init_conv(keys[next(ki)], 64, input_channels, 7)
    p["c1_w"], p["c1_b"] = _init_conv(keys[next(ki)], 128, 64, 3)
    p["c2_w"], p["c2_b"] = _init_conv(keys[next(ki)], 256, 128, 3)
    for i in range(n_residual_blocks):
        p[f"r{i}_w1"], p[f"r{i}_b1"] = _init_conv(keys[next(ki)], 256, 256, 3)
        p[f"r{i}_w2"], p[f"r{i}_b2"] = _init_conv(keys[next(ki)], 256, 256, 3)
    p["t0_w"], p["t0_b"] = _init_convT(keys[next(ki)], 256, 128, 3)
    p["t1_w"], p["t1_b"] = _init_convT(keys[next(ki)], 128, 64, 3)
    p["c3_w"], p["c3_b"] = _init_conv(keys[next(ki)], output_channels, 64, 7)
    return p, n_residual_blocks


def prepare_params(params, n_res):
    """Convert PyTorch-layout f32 params to kernel-ready (pre-transposed,
    pre-cast bf16) arrays.  Run ONCE, outside the jitted forward."""
    bf16 = jnp.bfloat16
    p = {}

    # stem Conv1d(Cin->64, k=7, p=3): block-diagonal weight so the kernel
    # emits a length-paired, lane-dense (N, L/2, 128) output.
    w0, b0 = params["c0_w"], params["c0_b"]                    # (64, Cin, 7)
    cout0, cin0, k0 = w0.shape
    wmat = jnp.transpose(w0, (2, 1, 0)).reshape(k0 * cin0, cout0)
    z = jnp.zeros_like(wmat)
    wpair = jnp.concatenate(
        [jnp.concatenate([wmat, z], axis=1),
         jnp.concatenate([z, wmat], axis=1)], axis=0)          # (2*7*Cin, 128)
    p["c0_w"] = wpair[None].astype(bf16)
    p["c0_b"] = jnp.concatenate([b0, b0]).reshape(1, -1).astype(jnp.float32)

    # stride-2 downsample convs (k=3, p=1) on channel-paired input:
    #   y[m] = p[m]@[W1;W2] + p[m-1]@[0;W0]
    def prep_down(w, b):
        t = jnp.transpose(w, (2, 1, 0))                        # (3, Cin, Cout)
        wa = jnp.concatenate([t[1], t[2]], axis=0)
        wb = jnp.concatenate([jnp.zeros_like(t[0]), t[0]], axis=0)
        return (jnp.stack([wa, wb]).astype(bf16),
                b.reshape(1, -1).astype(jnp.float32))

    p["c1_w"], p["c1_b"] = prep_down(params["c1_w"], params["c1_b"])
    p["c2_w"], p["c2_b"] = prep_down(params["c2_w"], params["c2_b"])

    # residual blocks, stacked for the fused chain kernel
    if n_res > 0:
        ws, bs = [], []
        for i in range(n_res):
            for j in (1, 2):
                ws.append(jnp.transpose(params[f"r{i}_w{j}"], (2, 1, 0)))
                bs.append(params[f"r{i}_b{j}"].reshape(1, -1))
        p["res_w"] = jnp.concatenate(ws, axis=0).astype(bf16)   # (n_res*6, C, C)
        p["res_b"] = jnp.stack(bs, axis=0).astype(jnp.float32)  # (n_res*2, 1, C)

    # polyphase ConvTranspose1d(k=3, s=2, p=1, op=1):
    #   even/odd phase columns: y[m] = x[m]@[W1|W2] + x[m+1]@[0|W0]
    def prep_up(w, b):
        w0_, w1_, w2_ = w[:, :, 0], w[:, :, 1], w[:, :, 2]     # (Cin, Cout)
        wa = jnp.concatenate([w1_, w2_], axis=1)
        wb = jnp.concatenate([jnp.zeros_like(w0_), w0_], axis=1)
        return (jnp.stack([wa, wb]).astype(bf16),
                jnp.concatenate([b, b]).reshape(1, -1).astype(jnp.float32))

    p["t0_w"], p["t0_b"] = prep_up(params["t0_w"], params["t0_b"])
    p["t1_w"], p["t1_b"] = prep_up(params["t1_w"], params["t1_b"])

    # head Conv1d(64->Cout, k=7, p=3) + Tanh, as 7 shifted taps
    p["c3_w"] = jnp.transpose(params["c3_w"], (2, 1, 0)).astype(bf16)
    p["c3_b"] = params["c3_b"].reshape(1, -1).astype(jnp.float32)
    return p


# ---------------------------------------------------------------------------
# Generator forward: all heavy math in Pallas; glue is only FREE reshapes,
# the tiny stem tap-stack and the tiny final transpose.
# ---------------------------------------------------------------------------
def generator_forward(prep, x_ncl):
    """x_ncl: PyTorch layout (N, C_in, L) float32 -> (N, C_out, L) float32."""
    x = jnp.transpose(x_ncl, (0, 2, 1)).astype(jnp.float32)     # (N, L, Cin), tiny
    n, l, cin = x.shape
    assert l % 4 == 0, "sequence length must be divisible by 4"
    k, pad = 7, 3

    # stem: tap-stack the tiny input and pair adjacent positions -> the kernel
    # emits (N, L/2, 128) already in the first down-conv's paired layout.
    xp = jnp.pad(x, ((0, 0), (pad, pad), (0, 0)))
    patches = jnp.concatenate([xp[:, t:t + l, :] for t in range(k)], axis=-1)
    patches = patches.reshape(n, l // 2, 2 * k * cin)
    h = _fused_conv(patches, prep["c0_w"], prep["c0_b"],
                    shifts=(0,), norm_phases=2, act="relu")     # (N, L/2, 128)

    # downsample 64->128 and 128->256 (re-pairing is a free reshape)
    h = _fused_conv(h, prep["c1_w"], prep["c1_b"],
                    shifts=(0, 1), norm_phases=1, act="relu")   # (N, L/2, 128)
    h = h.reshape(n, h.shape[1] // 2, h.shape[2] * 2)           # (N, L/4, 256)
    h = _fused_conv(h, prep["c2_w"], prep["c2_b"],
                    shifts=(0, 1), norm_phases=1, act="relu")   # (N, L/4, 256)

    # fused residual chain (single pallas_call)
    if "res_w" in prep:
        h = _resblock_chain(h, prep["res_w"], prep["res_b"])    # (N, L/4, 256)

    # polyphase transpose-conv upsampling; phase interleave is a free reshape
    h = _fused_conv(h, prep["t0_w"], prep["t0_b"],
                    shifts=(0, -1), norm_phases=2, act="relu")  # (N, L/4, 2*128)
    h = h.reshape(n, h.shape[1] * 2, h.shape[2] // 2)           # (N, L/2, 128)
    h = _fused_conv(h, prep["t1_w"], prep["t1_b"],
                    shifts=(0, -1), norm_phases=2, act="relu")  # (N, L/2, 2*64)
    h = h.reshape(n, h.shape[1] * 2, h.shape[2] // 2)           # (N, L, 64)

    # head conv + Tanh on channel-last activation; only the tiny result is
    # transposed to PyTorch (N, C_out, L).
    y = _fused_conv(h, prep["c3_w"], prep["c3_b"],
                    shifts=(3, 2, 1, 0, -1, -2, -3), norm_phases=0,
                    act="tanh", out_dtype=jnp.float32)          # (N, L, C_out)
    return jnp.transpose(y, (0, 2, 1))


# ---------------------------------------------------------------------------
if __name__ == "__main__":
    key = jax.random.PRNGKey(0)
    k_param, k_x = jax.random.split(key)

    # small demo config (module default n_residual_blocks=9; 3 keeps the demo
    # compile short — the architecture is fully parametric)
    N, C_IN, L = 2, 1, 32
    params, n_res = init_generator_params(
        k_param, input_channels=C_IN, output_channels=1, n_residual_blocks=3)
    prep = prepare_params(params, n_res)                         # one-time

    x = jax.random.normal(k_x, (N, C_IN, L), jnp.float32)        # PyTorch (N,C,L)

    fwd = jax.jit(generator_forward)
    y = jax.block_until_ready(fwd(prep, x))

    assert y.shape == (N, 1, L), y.shape
    assert bool(jnp.all(jnp.isfinite(y)))
    assert bool(jnp.all(jnp.abs(y) <= 1.0))                      # tanh output

    print("KERNEL_OK")
</pallas_src>

<mosaic_0001>
module attributes {stable_mosaic.version = 11 : i64} {
  func.func @_fused_conv_kernel(%arg0: i32, %arg1: memref<1x16x14xbf16, #tpu.memory_space<vmem>>, %arg2: memref<1x14x128xbf16, #tpu.memory_space<vmem>>, %arg3: memref<1x128xf32, #tpu.memory_space<vmem>>, %arg4: memref<1x16x128xbf16, #tpu.memory_space<vmem>>) attributes {dimension_semantics = [#tpu.dimension_semantics<parallel>], iteration_bounds = array<i64: 2>, scalar_prefetch = 0 : i64, scratch_operands = 0 : i64, tpu.core_type = #tpu.core_type<tc>, window_params = [{transform_indices = @transform_0, window_bounds = array<i64: 1, 16, 14>}, {pipeline_mode = #tpu.pipeline_mode<synchronous>, transform_indices = @transform_1, window_bounds = array<i64: 1, 14, 128>}, {pipeline_mode = #tpu.pipeline_mode<synchronous>, transform_indices = @transform_2, window_bounds = array<i64: 1, 128>}, {transform_indices = @transform_3, window_bounds = array<i64: 1, 16, 128>}]} {
    %c0 = arith.constant 0 : index
    %c0_0 = arith.constant 0 : index
    %c0_1 = arith.constant 0 : index
    %0 = vector.load %arg1[%c0, %c0_0, %c0_1] : memref<1x16x14xbf16, #tpu.memory_space<vmem>>, vector<1x16x14xbf16>
    %1 = vector.shape_cast %0 : vector<1x16x14xbf16> to vector<16x14xbf16>
    %cst = arith.constant 0.000000e+00 : f32
    %2 = vector.broadcast %cst : f32 to vector<16x128xf32>
    %c0_2 = arith.constant 0 : index
    %c0_3 = arith.constant 0 : index
    %c0_4 = arith.constant 0 : index
    %3 = vector.load %arg2[%c0_2, %c0_3, %c0_4] : memref<1x14x128xbf16, #tpu.memory_space<vmem>>, vector<1x14x128xbf16>
    %4 = vector.shape_cast %3 : vector<1x14x128xbf16> to vector<14x128xbf16>
    %cst_5 = arith.constant dense<0.000000e+00> : vector<16x128xf32>
    %5 = tpu.matmul %1, %4, %cst_5 {dimension_numbers = #tpu.dot_dimension_numbers<[1], [0], [0], [1], [0, 0, 1, 1], [], []>} : vector<16x14xbf16>, vector<14x128xbf16>, vector<16x128xf32> -> vector<16x128xf32>
    %6 = arith.addf %2, %5 : vector<16x128xf32>
    %c0_6 = arith.constant 0 : index
    %c0_7 = arith.constant 0 : index
    %7 = vector.load %arg3[%c0_6, %c0_7] : memref<1x128xf32, #tpu.memory_space<vmem>>, vector<1x128xf32>
    %8 = vector.broadcast %7 : vector<1x128xf32> to vector<16x128xf32>
    %9 = arith.addf %6, %8 : vector<16x128xf32>
    %cst_8 = arith.constant dense<0.000000e+00> : vector<128xf32>
    %10 = vector.multi_reduction <add>, %9, %cst_8 [0] : vector<16x128xf32> to vector<128xf32>
    %11 = vector.shape_cast %10 : vector<128xf32> to vector<1x128xf32>
    %cst_9 = arith.constant 1.600000e+01 : f32
    %12 = vector.broadcast %cst_9 : f32 to vector<1x128xf32>
    %13 = arith.divf %11, %12 : vector<1x128xf32>
    %c64_i32 = arith.constant 64 : i32
    %14 = tpu.dynamic_rotate %13 by %c64_i32 dim 1 : vector<1x128xf32>, i32 -> vector<1x128xf32>
    %15 = arith.addf %13, %14 : vector<1x128xf32>
    %cst_10 = arith.constant 5.000000e-01 : f32
    %16 = vector.broadcast %cst_10 : f32 to vector<1x128xf32>
    %17 = arith.mulf %16, %15 : vector<1x128xf32>
    %18 = vector.broadcast %17 : vector<1x128xf32> to vector<16x128xf32>
    %19 = arith.subf %9, %18 : vector<16x128xf32>
    %20 = arith.mulf %19, %19 : vector<16x128xf32>
    %cst_11 = arith.constant dense<0.000000e+00> : vector<128xf32>
    %21 = vector.multi_reduction <add>, %20, %cst_11 [0] : vector<16x128xf32> to vector<128xf32>
    %22 = vector.shape_cast %21 : vector<128xf32> to vector<1x128xf32>
    %cst_12 = arith.constant 1.600000e+01 : f32
    %23 = vector.broadcast %cst_12 : f32 to vector<1x128xf32>
    %24 = arith.divf %22, %23 : vector<1x128xf32>
    %c64_i32_13 = arith.constant 64 : i32
    %25 = tpu.dynamic_rotate %24 by %c64_i32_13 dim 1 : vector<1x128xf32>, i32 -> vector<1x128xf32>
    %26 = arith.addf %24, %25 : vector<1x128xf32>
    %cst_14 = arith.constant 5.000000e-01 : f32
    %27 = vector.broadcast %cst_14 : f32 to vector<1x128xf32>
    %28 = arith.mulf %27, %26 : vector<1x128xf32>
    %cst_15 = arith.constant 9.99999974E-6 : f32
    %29 = vector.broadcast %cst_15 : f32 to vector<1x128xf32>
    %30 = arith.addf %28, %29 : vector<1x128xf32>
    %31 = math.rsqrt %30 : vector<1x128xf32>
    %32 = vector.broadcast %31 : vector<1x128xf32> to vector<16x128xf32>
    %33 = arith.mulf %19, %32 : vector<16x128xf32>
    %cst_16 = arith.constant 0.000000e+00 : f32
    %34 = vector.broadcast %cst_16 : f32 to vector<16x128xf32>
    %35 = arith.maximumf %33, %34 : vector<16x128xf32>
    %36 = arith.truncf %35 : vector<16x128xf32> to vector<16x128xbf16>
    %c0_17 = arith.constant 0 : index
    %c0_18 = arith.constant 0 : index
    %c0_19 = arith.constant 0 : index
    %37 = vector.load %arg4[%c0_17, %c0_18, %c0_19] : memref<1x16x128xbf16, #tpu.memory_space<vmem>>, vector<1x16x128xbf16>
    %38 = vector.shape_cast %37 : vector<1x16x128xbf16> to vector<16x128xbf16>
    %39 = vector.shape_cast %36 : vector<16x128xbf16> to vector<1x16x128xbf16>
    tpu.vector_store %arg4[%c0_17, %c0_18, %c0_19], %39 {strides = array<i32>} : memref<1x16x128xbf16, #tpu.memory_space<vmem>>, vector<1x16x128xbf16>,
    return
  }
  func.func @transform_0(%arg0: i32) -> (i32, i32, i32) {
    %c0_i32 = arith.constant 0 : i32
    %c0_i32_0 = arith.constant 0 : i32
    %c0_i32_1 = arith.constant 0 : i32
    return %arg0, %c0_i32, %c0_i32_0 : i32, i32, i32
  }
  func.func @transform_1(%arg0: i32) -> (i32, i32, i32) {
    %c0_i32 = arith.constant 0 : i32
    %c0_i32_0 = arith.constant 0 : i32
    %c0_i32_1 = arith.constant 0 : i32
    %c0_i32_2 = arith.constant 0 : i32
    return %c0_i32, %c0_i32_0, %c0_i32_1 : i32, i32, i32
  }
  func.func @transform_2(%arg0: i32) -> (i32, i32) {
    %c0_i32 = arith.constant 0 : i32
    %c0_i32_0 = arith.constant 0 : i32
    %c0_i32_1 = arith.constant 0 : i32
    return %c0_i32, %c0_i32_0 : i32, i32
  }
  func.func @transform_3(%arg0: i32) -> (i32, i32, i32) {
    %c0_i32 = arith.constant 0 : i32
    %c0_i32_0 = arith.constant 0 : i32
    %c0_i32_1 = arith.constant 0 : i32
    return %arg0, %c0_i32, %c0_i32_0 : i32, i32, i32
  }
}

module attributes {stable_mosaic.version = 11 : i64} {
  func.func @_fused_conv_kernel(%arg0: i32, %arg1: memref<1x16x128xbf16, #tpu.memory_space<vmem>>, %arg2: memref<2x128x128xbf16, #tpu.memory_space<vmem>>, %arg3: memref<1x128xf32, #tpu.memory_space<vmem>>, %arg4: memref<1x16x128xbf16, #tpu.memory_space<vmem>>) attributes {dimension_semantics = [#tpu.dimension_semantics<parallel>], iteration_bounds = array<i64: 2>, scalar_prefetch = 0 : i64, scratch_operands = 0 : i64, tpu.core_type = #tpu.core_type<tc>, window_params = [{transform_indices = @transform_0, window_bounds = array<i64: 1, 16, 128>}, {pipeline_mode = #tpu.pipeline_mode<synchronous>, transform_indices = @transform_1, window_bounds = array<i64: 2, 128, 128>}, {pipeline_mode = #tpu.pipeline_mode<synchronous>, transform_indices = @transform_2, window_bounds = array<i64: 1, 128>}, {transform_indices = @transform_3, window_bounds = array<i64: 1, 16, 128>}]} {
    %c0 = arith.constant 0 : index
    %c0_0 = arith.constant 0 : index
    %c0_1 = arith.constant 0 : index
    %0 = vector.load %arg1[%c0, %c0_0, %c0_1] : memref<1x16x128xbf16, #tpu.memory_space<vmem>>, vector<1x16x128xbf16>
    %1 = vector.shape_cast %0 : vector<1x16x128xbf16> to vector<16x128xbf16>
    %2 = tpu.iota {dimensions = array<i32: 0>} : vector<16x128xi32>
    %cst = arith.constant 0.000000e+00 : f32
    %3 = vector.broadcast %cst : f32 to vector<16x128xf32>
    %c0_2 = arith.constant 0 : index
    %c0_3 = arith.constant 0 : index
    %c0_4 = arith.constant 0 : index
    %4 = vector.load %arg2[%c0_2, %c0_3, %c0_4] : memref<2x128x128xbf16, #tpu.memory_space<vmem>>, vector<1x128x128xbf16>
    %5 = vector.shape_cast %4 : vector<1x128x128xbf16> to vector<128x128xbf16>
    %cst_5 = arith.constant dense<0.000000e+00> : vector<16x128xf32>
    %6 = tpu.matmul %1, %5, %cst_5 {dimension_numbers = #tpu.dot_dimension_numbers<[1], [0], [0], [1], [0, 0, 1, 1], [], []>} : vector<16x128xbf16>, vector<128x128xbf16>, vector<16x128xf32> -> vector<16x128xf32>
    %7 = arith.addf %3, %6 : vector<16x128xf32>
    %c1 = arith.constant 1 : index
    %c0_6 = arith.constant 0 : index
    %c0_7 = arith.constant 0 : index
    %8 = vector.load %arg2[%c1, %c0_6, %c0_7] : memref<2x128x128xbf16, #tpu.memory_space<vmem>>, vector<1x128x128xbf16>
    %9 = vector.shape_cast %8 : vector<1x128x128xbf16> to vector<128x128xbf16>
    %cst_8 = arith.constant dense<0.000000e+00> : vector<16x128xf32>
    %10 = tpu.matmul %1, %9, %cst_8 {dimension_numbers = #tpu.dot_dimension_numbers<[1], [0], [0], [1], [0, 0, 1, 1], [], []>} : vector<16x128xbf16>, vector<128x128xbf16>, vector<16x128xf32> -> vector<16x128xf32>
    %c1_i32 = arith.constant 1 : i32
    %11 = vector.broadcast %c1_i32 : i32 to vector<16x128xi32>
    %12 = arith.cmpi slt, %2, %11 : vector<16x128xi32>
    %c1_i32_9 = arith.constant 1 : i32
    %13 = tpu.dynamic_rotate %10 by %c1_i32_9 dim 0 : vector<16x128xf32>, i32 -> vector<16x128xf32>
    %cst_10 = arith.constant 0.000000e+00 : f32
    %14 = vector.broadcast %cst_10 : f32 to vector<16x128xf32>
    %15 = arith.select %12, %14, %13 : vector<16x128xi1>, vector<16x128xf32>
    %16 = arith.addf %7, %15 : vector<16x128xf32>
    %c0_11 = arith.constant 0 : index
    %c0_12 = arith.constant 0 : index
    %17 = vector.load %arg3[%c0_11, %c0_12] : memref<1x128xf32, #tpu.memory_space<vmem>>, vector<1x128xf32>
    %18 = vector.broadcast %17 : vector<1x128xf32> to vector<16x128xf32>
    %19 = arith.addf %16, %18 : vector<16x128xf32>
    %cst_13 = arith.constant dense<0.000000e+00> : vector<128xf32>
    %20 = vector.multi_reduction <add>, %19, %cst_13 [0] : vector<16x128xf32> to vector<128xf32>
    %21 = vector.shape_cast %20 : vector<128xf32> to vector<1x128xf32>
    %cst_14 = arith.constant 1.600000e+01 : f32
    %22 = vector.broadcast %cst_14 : f32 to vector<1x128xf32>
    %23 = arith.divf %21, %22 : vector<1x128xf32>
    %24 = vector.broadcast %23 : vector<1x128xf32> to vector<16x128xf32>
    %25 = arith.subf %19, %24 : vector<16x128xf32>
    %26 = arith.mulf %25, %25 : vector<16x128xf32>
    %cst_15 = arith.constant dense<0.000000e+00> : vector<128xf32>
    %27 = vector.multi_reduction <add>, %26, %cst_15 [0] : vector<16x128xf32> to vector<128xf32>
    %28 = vector.shape_cast %27 : vector<128xf32> to vector<1x128xf32>
    %cst_16 = arith.constant 1.600000e+01 : f32
    %29 = vector.broadcast %cst_16 : f32 to vector<1x128xf32>
    %30 = arith.divf %28, %29 : vector<1x128xf32>
    %cst_17 = arith.constant 9.99999974E-6 : f32
    %31 = vector.broadcast %cst_17 : f32 to vector<1x128xf32>
    %32 = arith.addf %30, %31 : vector<1x128xf32>
    %33 = math.rsqrt %32 : vector<1x128xf32>
    %34 = vector.broadcast %33 : vector<1x128xf32> to vector<16x128xf32>
    %35 = arith.mulf %25, %34 : vector<16x128xf32>
    %cst_18 = arith.constant 0.000000e+00 : f32
    %36 = vector.broadcast %cst_18 : f32 to vector<16x128xf32>
    %37 = arith.maximumf %35, %36 : vector<16x128xf32>
    %38 = arith.truncf %37 : vector<16x128xf32> to vector<16x128xbf16>
    %c0_19 = arith.constant 0 : index
    %c0_20 = arith.constant 0 : index
    %c0_21 = arith.constant 0 : index
    %39 = vector.load %arg4[%c0_19, %c0_20, %c0_21] : memref<1x16x128xbf16, #tpu.memory_space<vmem>>, vector<1x16x128xbf16>
    %40 = vector.shape_cast %39 : vector<1x16x128xbf16> to vector<16x128xbf16>
    %41 = vector.shape_cast %38 : vector<16x128xbf16> to vector<1x16x128xbf16>
    tpu.vector_store %arg4[%c0_19, %c0_20, %c0_21], %41 {strides = array<i32>} : memref<1x16x128xbf16, #tpu.memory_space<vmem>>, vector<1x16x128xbf16>,
    return
  }
  func.func @transform_0(%arg0: i32) -> (i32, i32, i32) {
    %c0_i32 = arith.constant 0 : i32
    %c0_i32_0 = arith.constant 0 : i32
    %c0_i32_1 = arith.constant 0 : i32
    return %arg0, %c0_i32, %c0_i32_0 : i32, i32, i32
  }
  func.func @transform_1(%arg0: i32) -> (i32, i32, i32) {
    %c0_i32 = arith.constant 0 : i32
    %c0_i32_0 = arith.constant 0 : i32
    %c0_i32_1 = arith.constant 0 : i32
    %c0_i32_2 = arith.constant 0 : i32
    return %c0_i32, %c0_i32_0, %c0_i32_1 : i32, i32, i32
  }
  func.func @transform_2(%arg0: i32) -> (i32, i32) {
    %c0_i32 = arith.constant 0 : i32
    %c0_i32_0 = arith.constant 0 : i32
    %c0_i32_1 = arith.constant 0 : i32
    return %c0_i32, %c0_i32_0 : i32, i32
  }
  func.func @transform_3(%arg0: i32) -> (i32, i32, i32) {
    %c0_i32 = arith.constant 0 : i32
    %c0_i32_0 = arith.constant 0 : i32
    %c0_i32_1 = arith.constant 0 : i32
    return %arg0, %c0_i32, %c0_i32_0 : i32, i32, i32
  }
}

module attributes {stable_mosaic.version = 11 : i64} {
  func.func @_fused_conv_kernel(%arg0: i32, %arg1: memref<1x8x256xbf16, #tpu.memory_space<vmem>>, %arg2: memref<2x256x256xbf16, #tpu.memory_space<vmem>>, %arg3: memref<1x256xf32, #tpu.memory_space<vmem>>, %arg4: memref<1x8x256xbf16, #tpu.memory_space<vmem>>) attributes {dimension_semantics = [#tpu.dimension_semantics<parallel>], iteration_bounds = array<i64: 2>, scalar_prefetch = 0 : i64, scratch_operands = 0 : i64, tpu.core_type = #tpu.core_type<tc>, window_params = [{transform_indices = @transform_0, window_bounds = array<i64: 1, 8, 256>}, {pipeline_mode = #tpu.pipeline_mode<synchronous>, transform_indices = @transform_1, window_bounds = array<i64: 2, 256, 256>}, {pipeline_mode = #tpu.pipeline_mode<synchronous>, transform_indices = @transform_2, window_bounds = array<i64: 1, 256>}, {transform_indices = @transform_3, window_bounds = array<i64: 1, 8, 256>}]} {
    %c0 = arith.constant 0 : index
    %c0_0 = arith.constant 0 : index
    %c0_1 = arith.constant 0 : index
    %0 = vector.load %arg1[%c0, %c0_0, %c0_1] : memref<1x8x256xbf16, #tpu.memory_space<vmem>>, vector<1x8x256xbf16>
    %1 = vector.shape_cast %0 : vector<1x8x256xbf16> to vector<8x256xbf16>
    %2 = tpu.iota {dimensions = array<i32: 0>} : vector<8x256xi32>
    %cst = arith.constant 0.000000e+00 : f32
    %3 = vector.broadcast %cst : f32 to vector<8x256xf32>
    %c0_2 = arith.constant 0 : index
    %c0_3 = arith.constant 0 : index
    %c0_4 = arith.constant 0 : index
    %4 = vector.load %arg2[%c0_2, %c0_3, %c0_4] : memref<2x256x256xbf16, #tpu.memory_space<vmem>>, vector<1x256x256xbf16>
    %5 = vector.shape_cast %4 : vector<1x256x256xbf16> to vector<256x256xbf16>
    %cst_5 = arith.constant dense<0.000000e+00> : vector<8x256xf32>
    %6 = tpu.matmul %1, %5, %cst_5 {dimension_numbers = #tpu.dot_dimension_numbers<[1], [0], [0], [1], [0, 0, 1, 1], [], []>} : vector<8x256xbf16>, vector<256x256xbf16>, vector<8x256xf32> -> vector<8x256xf32>
    %7 = arith.addf %3, %6 : vector<8x256xf32>
    %c1 = arith.constant 1 : index
    %c0_6 = arith.constant 0 : index
    %c0_7 = arith.constant 0 : index
    %8 = vector.load %arg2[%c1, %c0_6, %c0_7] : memref<2x256x256xbf16, #tpu.memory_space<vmem>>, vector<1x256x256xbf16>
    %9 = vector.shape_cast %8 : vector<1x256x256xbf16> to vector<256x256xbf16>
    %cst_8 = arith.constant dense<0.000000e+00> : vector<8x256xf32>
    %10 = tpu.matmul %1, %9, %cst_8 {dimension_numbers = #tpu.dot_dimension_numbers<[1], [0], [0], [1], [0, 0, 1, 1], [], []>} : vector<8x256xbf16>, vector<256x256xbf16>, vector<8x256xf32> -> vector<8x256xf32>
    %c1_i32 = arith.constant 1 : i32
    %11 = vector.broadcast %c1_i32 : i32 to vector<8x256xi32>
    %12 = arith.cmpi slt, %2, %11 : vector<8x256xi32>
    %c1_i32_9 = arith.constant 1 : i32
    %13 = tpu.dynamic_rotate %10 by %c1_i32_9 dim 0 : vector<8x256xf32>, i32 -> vector<8x256xf32>
    %cst_10 = arith.constant 0.000000e+00 : f32
    %14 = vector.broadcast %cst_10 : f32 to vector<8x256xf32>
    %15 = arith.select %12, %14, %13 : vector<8x256xi1>, vector<8x256xf32>
    %16 = arith.addf %7, %15 : vector<8x256xf32>
    %c0_11 = arith.constant 0 : index
    %c0_12 = arith.constant 0 : index
    %17 = vector.load %arg3[%c0_11, %c0_12] : memref<1x256xf32, #tpu.memory_space<vmem>>, vector<1x256xf32>
    %18 = vector.broadcast %17 : vector<1x256xf32> to vector<8x256xf32>
    %19 = arith.addf %16, %18 : vector<8x256xf32>
    %cst_13 = arith.constant dense<0.000000e+00> : vector<256xf32>
    %20 = vector.multi_reduction <add>, %19, %cst_13 [0] : vector<8x256xf32> to vector<256xf32>
    %21 = vector.shape_cast %20 : vector<256xf32> to vector<1x256xf32>
    %cst_14 = arith.constant 8.000000e+00 : f32
    %22 = vector.broadcast %cst_14 : f32 to vector<1x256xf32>
    %23 = arith.divf %21, %22 : vector<1x256xf32>
    %24 = vector.broadcast %23 : vector<1x256xf32> to vector<8x256xf32>
    %25 = arith.subf %19, %24 : vector<8x256xf32>
    %26 = arith.mulf %25, %25 : vector<8x256xf32>
    %cst_15 = arith.constant dense<0.000000e+00> : vector<256xf32>
    %27 = vector.multi_reduction <add>, %26, %cst_15 [0] : vector<8x256xf32> to vector<256xf32>
    %28 = vector.shape_cast %27 : vector<256xf32> to vector<1x256xf32>
    %cst_16 = arith.constant 8.000000e+00 : f32
    %29 = vector.broadcast %cst_16 : f32 to vector<1x256xf32>
    %30 = arith.divf %28, %29 : vector<1x256xf32>
    %cst_17 = arith.constant 9.99999974E-6 : f32
    %31 = vector.broadcast %cst_17 : f32 to vector<1x256xf32>
    %32 = arith.addf %30, %31 : vector<1x256xf32>
    %33 = math.rsqrt %32 : vector<1x256xf32>
    %34 = vector.broadcast %33 : vector<1x256xf32> to vector<8x256xf32>
    %35 = arith.mulf %25, %34 : vector<8x256xf32>
    %cst_18 = arith.constant 0.000000e+00 : f32
    %36 = vector.broadcast %cst_18 : f32 to vector<8x256xf32>
    %37 = arith.maximumf %35, %36 : vector<8x256xf32>
    %38 = arith.truncf %37 : vector<8x256xf32> to vector<8x256xbf16>
    %c0_19 = arith.constant 0 : index
    %c0_20 = arith.constant 0 : index
    %c0_21 = arith.constant 0 : index
    %39 = vector.load %arg4[%c0_19, %c0_20, %c0_21] : memref<1x8x256xbf16, #tpu.memory_space<vmem>>, vector<1x8x256xbf16>
    %40 = vector.shape_cast %39 : vector<1x8x256xbf16> to vector<8x256xbf16>
    %41 = vector.shape_cast %38 : vector<8x256xbf16> to vector<1x8x256xbf16>
    tpu.vector_store %arg4[%c0_19, %c0_20, %c0_21], %41 {strides = array<i32>} : memref<1x8x256xbf16, #tpu.memory_space<vmem>>, vector<1x8x256xbf16>,
    return
  }
  func.func @transform_0(%arg0: i32) -> (i32, i32, i32) {
    %c0_i32 = arith.constant 0 : i32
    %c0_i32_0 = arith.constant 0 : i32
    %c0_i32_1 = arith.constant 0 : i32
    return %arg0, %c0_i32, %c0_i32_0 : i32, i32, i32
  }
  func.func @transform_1(%arg0: i32) -> (i32, i32, i32) {
    %c0_i32 = arith.constant 0 : i32
    %c0_i32_0 = arith.constant 0 : i32
    %c0_i32_1 = arith.constant 0 : i32
    %c0_i32_2 = arith.constant 0 : i32
    return %c0_i32, %c0_i32_0, %c0_i32_1 : i32, i32, i32
  }
  func.func @transform_2(%arg0: i32) -> (i32, i32) {
    %c0_i32 = arith.constant 0 : i32
    %c0_i32_0 = arith.constant 0 : i32
    %c0_i32_1 = arith.constant 0 : i32
    return %c0_i32, %c0_i32_0 : i32, i32
  }
  func.func @transform_3(%arg0: i32) -> (i32, i32, i32) {
    %c0_i32 = arith.constant 0 : i32
    %c0_i32_0 = arith.constant 0 : i32
    %c0_i32_1 = arith.constant 0 : i32
    return %arg0, %c0_i32, %c0_i32_0 : i32, i32, i32
  }
}

module attributes {stable_mosaic.version = 11 : i64} {
  func.func @_resblock_chain_kernel(%arg0: i32, %arg1: i32, %arg2: memref<1x8x256xbf16, #tpu.memory_space<vmem>>, %arg3: memref<6x256x256xbf16, #tpu.memory_space<vmem>>, %arg4: memref<2x1x256xf32, #tpu.memory_space<vmem>>, %arg5: memref<1x8x256xbf16, #tpu.memory_space<vmem>>, %arg6: memref<9x256xbf16, #tpu.memory_space<vmem>>, %arg7: memref<9x256xbf16, #tpu.memory_space<vmem>>) attributes {dimension_semantics = [#tpu.dimension_semantics<parallel>, #tpu.dimension_semantics<arbitrary>], iteration_bounds = array<i64: 2, 3>, scalar_prefetch = 0 : i64, scratch_operands = 2 : i64, tpu.core_type = #tpu.core_type<tc>, window_params = [{transform_indices = @transform_0, window_bounds = array<i64: 1, 8, 256>}, {transform_indices = @transform_1, window_bounds = array<i64: 6, 256, 256>}, {transform_indices = @transform_2, window_bounds = array<i64: 2, 1, 256>}, {transform_indices = @transform_3, window_bounds = array<i64: 1, 8, 256>}]} {
    %c0_i32 = arith.constant 0 : i32
    %0 = arith.cmpi eq, %arg1, %c0_i32 : i32
    %1 = arith.extui %0 : i1 to i32
    %c0_i32_0 = arith.constant 0 : i32
    %2 = arith.cmpi ne, %1, %c0_i32_0 : i32
    scf.if %2 {
      %cst_59 = arith.constant 0.000000e+00 : bf16
      %94 = vector.broadcast %cst_59 : bf16 to vector<1x256xbf16>
      %c8 = arith.constant 8 : index
      %c0_60 = arith.constant 0 : index
      %95 = vector.load %arg6[%c8, %c0_60] : memref<9x256xbf16, #tpu.memory_space<vmem>>, vector<1x256xbf16>
      tpu.vector_store %arg6[%c8, %c0_60], %94 {strides = array<i32>} : memref<9x256xbf16, #tpu.memory_space<vmem>>, vector<1x256xbf16>,
      %c8_61 = arith.constant 8 : index
      %c0_62 = arith.constant 0 : index
      %96 = vector.load %arg7[%c8_61, %c0_62] : memref<9x256xbf16, #tpu.memory_space<vmem>>, vector<1x256xbf16>
      tpu.vector_store %arg7[%c8_61, %c0_62], %94 {strides = array<i32>} : memref<9x256xbf16, #tpu.memory_space<vmem>>, vector<1x256xbf16>,
      %c0_63 = arith.constant 0 : index
      %c0_64 = arith.constant 0 : index
      %c0_65 = arith.constant 0 : index
      %97 = vector.load %arg2[%c0_63, %c0_64, %c0_65] : memref<1x8x256xbf16, #tpu.memory_space<vmem>>, vector<1x8x256xbf16>
      %98 = vector.shape_cast %97 : vector<1x8x256xbf16> to vector<8x256xbf16>
      %c0_66 = arith.constant 0 : index
      %c0_67 = arith.constant 0 : index
      %99 = vector.load %arg6[%c0_66, %c0_67] : memref<9x256xbf16, #tpu.memory_space<vmem>>, vector<8x256xbf16>
      tpu.vector_store %arg6[%c0_66, %c0_67], %98 {strides = array<i32>} : memref<9x256xbf16, #tpu.memory_space<vmem>>, vector<8x256xbf16>,
    } else {
    }
    %3 = tpu.iota {dimensions = array<i32: 0>} : vector<8x256xi32>
    %c0 = arith.constant 0 : index
    %c0_1 = arith.constant 0 : index
    %c0_2 = arith.constant 0 : index
    %4 = vector.load %arg3[%c0, %c0_1, %c0_2] : memref<6x256x256xbf16, #tpu.memory_space<vmem>>, vector<1x256x256xbf16>
    %5 = vector.shape_cast %4 : vector<1x256x256xbf16> to vector<256x256xbf16>
    %c1 = arith.constant 1 : index
    %c0_3 = arith.constant 0 : index
    %c0_4 = arith.constant 0 : index
    %6 = vector.load %arg3[%c1, %c0_3, %c0_4] : memref<6x256x256xbf16, #tpu.memory_space<vmem>>, vector<1x256x256xbf16>
    %7 = vector.shape_cast %6 : vector<1x256x256xbf16> to vector<256x256xbf16>
    %c2 = arith.constant 2 : index
    %c0_5 = arith.constant 0 : index
    %c0_6 = arith.constant 0 : index
    %8 = vector.load %arg3[%c2, %c0_5, %c0_6] : memref<6x256x256xbf16, #tpu.memory_space<vmem>>, vector<1x256x256xbf16>
    %9 = vector.shape_cast %8 : vector<1x256x256xbf16> to vector<256x256xbf16>
    %c0_7 = arith.constant 0 : index
    %c0_8 = arith.constant 0 : index
    %c0_9 = arith.constant 0 : index
    %10 = vector.load %arg4[%c0_7, %c0_8, %c0_9] : memref<2x1x256xf32, #tpu.memory_space<vmem>>, vector<1x1x256xf32>
    %11 = vector.shape_cast %10 : vector<1x1x256xf32> to vector<1x256xf32>
    %c0_10 = arith.constant 0 : index
    %c0_11 = arith.constant 0 : index
    %12 = vector.load %arg6[%c0_10, %c0_11] : memref<9x256xbf16, #tpu.memory_space<vmem>>, vector<8x256xbf16>
    %cst = arith.constant dense<0.000000e+00> : vector<8x256xf32>
    %13 = tpu.matmul %12, %7, %cst {dimension_numbers = #tpu.dot_dimension_numbers<[1], [0], [0], [1], [0, 0, 1, 1], [], []>} : vector<8x256xbf16>, vector<256x256xbf16>, vector<8x256xf32> -> vector<8x256xf32>
    %c1_12 = arith.constant 1 : index
    %c0_13 = arith.constant 0 : index
    %14 = vector.load %arg6[%c1_12, %c0_13] : memref<9x256xbf16, #tpu.memory_space<vmem>>, vector<8x256xbf16>
    %cst_14 = arith.constant dense<0.000000e+00> : vector<8x256xf32>
    %15 = tpu.matmul %14, %9, %cst_14 {dimension_numbers = #tpu.dot_dimension_numbers<[1], [0], [0], [1], [0, 0, 1, 1], [], []>} : vector<8x256xbf16>, vector<256x256xbf16>, vector<8x256xf32> -> vector<8x256xf32>
    %c0_15 = arith.constant 0 : index
    %c0_16 = arith.constant 0 : index
    %16 = vector.load %arg6[%c0_15, %c0_16] : memref<9x256xbf16, #tpu.memory_space<vmem>>, vector<8x256xbf16>
    %cst_17 = arith.constant dense<0.000000e+00> : vector<8x256xf32>
    %17 = tpu.matmul %16, %5, %cst_17 {dimension_numbers = #tpu.dot_dimension_numbers<[1], [0], [0], [1], [0, 0, 1, 1], [], []>} : vector<8x256xbf16>, vector<256x256xbf16>, vector<8x256xf32> -> vector<8x256xf32>
    %18 = arith.addf %13, %15 : vector<8x256xf32>
    %19 = vector.broadcast %11 : vector<1x256xf32> to vector<8x256xf32>
    %20 = arith.addf %18, %19 : vector<8x256xf32>
    %c0_i32_18 = arith.constant 0 : i32
    %21 = vector.broadcast %c0_i32_18 : i32 to vector<8x256xi32>
    %22 = arith.cmpi eq, %3, %21 : vector<8x256xi32>
    %c1_i32 = arith.constant 1 : i32
    %23 = tpu.dynamic_rotate %17 by %c1_i32 dim 0 : vector<8x256xf32>, i32 -> vector<8x256xf32>
    %cst_19 = arith.constant 0.000000e+00 : f32
    %24 = vector.broadcast %cst_19 : f32 to vector<8x256xf32>
    %25 = arith.select %22, %24, %23 : vector<8x256xi1>, vector<8x256xf32>
    %26 = arith.addf %20, %25 : vector<8x256xf32>
    %cst_20 = arith.constant dense<0.000000e+00> : vector<256xf32>
    %27 = vector.multi_reduction <add>, %26, %cst_20 [0] : vector<8x256xf32> to vector<256xf32>
    %28 = vector.shape_cast %27 : vector<256xf32> to vector<1x256xf32>
    %cst_21 = arith.constant 8.000000e+00 : f32
    %29 = vector.broadcast %cst_21 : f32 to vector<1x256xf32>
    %30 = arith.divf %28, %29 : vector<1x256xf32>
    %31 = vector.broadcast %30 : vector<1x256xf32> to vector<8x256xf32>
    %32 = arith.subf %26, %31 : vector<8x256xf32>
    %33 = arith.mulf %32, %32 : vector<8x256xf32>
    %cst_22 = arith.constant dense<0.000000e+00> : vector<256xf32>
    %34 = vector.multi_reduction <add>, %33, %cst_22 [0] : vector<8x256xf32> to vector<256xf32>
    %35 = vector.shape_cast %34 : vector<256xf32> to vector<1x256xf32>
    %cst_23 = arith.constant 8.000000e+00 : f32
    %36 = vector.broadcast %cst_23 : f32 to vector<1x256xf32>
    %37 = arith.divf %35, %36 : vector<1x256xf32>
    %cst_24 = arith.constant 9.99999974E-6 : f32
    %38 = vector.broadcast %cst_24 : f32 to vector<1x256xf32>
    %39 = arith.addf %37, %38 : vector<1x256xf32>
    %40 = math.rsqrt %39 : vector<1x256xf32>
    %41 = vector.broadcast %40 : vector<1x256xf32> to vector<8x256xf32>
    %42 = arith.mulf %32, %41 : vector<8x256xf32>
    %cst_25 = arith.constant 0.000000e+00 : f32
    %43 = vector.broadcast %cst_25 : f32 to vector<8x256xf32>
    %44 = arith.maximumf %42, %43 : vector<8x256xf32>
    %45 = arith.truncf %44 : vector<8x256xf32> to vector<8x256xbf16>
    %c0_26 = arith.constant 0 : index
    %c0_27 = arith.constant 0 : index
    %46 = vector.load %arg7[%c0_26, %c0_27] : memref<9x256xbf16, #tpu.memory_space<vmem>>, vector<8x256xbf16>
    tpu.vector_store %arg7[%c0_26, %c0_27], %45 {strides = array<i32>} : memref<9x256xbf16, #tpu.memory_space<vmem>>, vector<8x256xbf16>,
    %c3 = arith.constant 3 : index
    %c0_28 = arith.constant 0 : index
    %c0_29 = arith.constant 0 : index
    %47 = vector.load %arg3[%c3, %c0_28, %c0_29] : memref<6x256x256xbf16, #tpu.memory_space<vmem>>, vector<1x256x256xbf16>
    %48 = vector.shape_cast %47 : vector<1x256x256xbf16> to vector<256x256xbf16>
    %c4 = arith.constant 4 : index
    %c0_30 = arith.constant 0 : index
    %c0_31 = arith.constant 0 : index
    %49 = vector.load %arg3[%c4, %c0_30, %c0_31] : memref<6x256x256xbf16, #tpu.memory_space<vmem>>, vector<1x256x256xbf16>
    %50 = vector.shape_cast %49 : vector<1x256x256xbf16> to vector<256x256xbf16>
    %c5 = arith.constant 5 : index
    %c0_32 = arith.constant 0 : index
    %c0_33 = arith.constant 0 : index
    %51 = vector.load %arg3[%c5, %c0_32, %c0_33] : memref<6x256x256xbf16, #tpu.memory_space<vmem>>, vector<1x256x256xbf16>
    %52 = vector.shape_cast %51 : vector<1x256x256xbf16> to vector<256x256xbf16>
    %c1_34 = arith.constant 1 : index
    %c0_35 = arith.constant 0 : index
    %c0_36 = arith.constant 0 : index
    %53 = vector.load %arg4[%c1_34, %c0_35, %c0_36] : memref<2x1x256xf32, #tpu.memory_space<vmem>>, vector<1x1x256xf32>
    %54 = vector.shape_cast %53 : vector<1x1x256xf32> to vector<1x256xf32>
    %c0_37 = arith.constant 0 : index
    %c0_38 = arith.constant 0 : index
    %55 = vector.load %arg7[%c0_37, %c0_38] : memref<9x256xbf16, #tpu.memory_space<vmem>>, vector<8x256xbf16>
    %cst_39 = arith.constant dense<0.000000e+00> : vector<8x256xf32>
    %56 = tpu.matmul %55, %50, %cst_39 {dimension_numbers = #tpu.dot_dimension_numbers<[1], [0], [0], [1], [0, 0, 1, 1], [], []>} : vector<8x256xbf16>, vector<256x256xbf16>, vector<8x256xf32> -> vector<8x256xf32>
    %c1_40 = arith.constant 1 : index
    %c0_41 = arith.constant 0 : index
    %57 = vector.load %arg7[%c1_40, %c0_41] : memref<9x256xbf16, #tpu.memory_space<vmem>>, vector<8x256xbf16>
    %cst_42 = arith.constant dense<0.000000e+00> : vector<8x256xf32>
    %58 = tpu.matmul %57, %52, %cst_42 {dimension_numbers = #tpu.dot_dimension_numbers<[1], [0], [0], [1], [0, 0, 1, 1], [], []>} : vector<8x256xbf16>, vector<256x256xbf16>, vector<8x256xf32> -> vector<8x256xf32>
    %c0_43 = arith.constant 0 : index
    %c0_44 = arith.constant 0 : index
    %59 = vector.load %arg7[%c0_43, %c0_44] : memref<9x256xbf16, #tpu.memory_space<vmem>>, vector<8x256xbf16>
    %cst_45 = arith.constant dense<0.000000e+00> : vector<8x256xf32>
    %60 = tpu.matmul %59, %48, %cst_45 {dimension_numbers = #tpu.dot_dimension_numbers<[1], [0], [0], [1], [0, 0, 1, 1], [], []>} : vector<8x256xbf16>, vector<256x256xbf16>, vector<8x256xf32> -> vector<8x256xf32>
    %61 = arith.addf %56, %58 : vector<8x256xf32>
    %62 = vector.broadcast %54 : vector<1x256xf32> to vector<8x256xf32>
    %63 = arith.addf %61, %62 : vector<8x256xf32>
    %c0_i32_46 = arith.constant 0 : i32
    %64 = vector.broadcast %c0_i32_46 : i32 to vector<8x256xi32>
    %65 = arith.cmpi eq, %3, %64 : vector<8x256xi32>
    %c1_i32_47 = arith.constant 1 : i32
    %66 = tpu.dynamic_rotate %60 by %c1_i32_47 dim 0 : vector<8x256xf32>, i32 -> vector<8x256xf32>
    %cst_48 = arith.constant 0.000000e+00 : f32
    %67 = vector.broadcast %cst_48 : f32 to vector<8x256xf32>
    %68 = arith.select %65, %67, %66 : vector<8x256xi1>, vector<8x256xf32>
    %69 = arith.addf %63, %68 : vector<8x256xf32>
    %cst_49 = arith.constant dense<0.000000e+00> : vector<256xf32>
    %70 = vector.multi_reduction <add>, %69, %cst_49 [0] : vector<8x256xf32> to vector<256xf32>
    %71 = vector.shape_cast %70 : vector<256xf32> to vector<1x256xf32>
    %cst_50 = arith.constant 8.000000e+00 : f32
    %72 = vector.broadcast %cst_50 : f32 to vector<1x256xf32>
    %73 = arith.divf %71, %72 : vector<1x256xf32>
    %74 = vector.broadcast %73 : vector<1x256xf32> to vector<8x256xf32>
    %75 = arith.subf %69, %74 : vector<8x256xf32>
    %76 = arith.mulf %75, %75 : vector<8x256xf32>
    %cst_51 = arith.constant dense<0.000000e+00> : vector<256xf32>
    %77 = vector.multi_reduction <add>, %76, %cst_51 [0] : vector<8x256xf32> to vector<256xf32>
    %78 = vector.shape_cast %77 : vector<256xf32> to vector<1x256xf32>
    %cst_52 = arith.constant 8.000000e+00 : f32
    %79 = vector.broadcast %cst_52 : f32 to vector<1x256xf32>
    %80 = arith.divf %78, %79 : vector<1x256xf32>
    %cst_53 = arith.constant 9.99999974E-6 : f32
    %81 = vector.broadcast %cst_53 : f32 to vector<1x256xf32>
    %82 = arith.addf %80, %81 : vector<1x256xf32>
    %83 = math.rsqrt %82 : vector<1x256xf32>
    %84 = vector.broadcast %83 : vector<1x256xf32> to vector<8x256xf32>
    %85 = arith.mulf %75, %84 : vector<8x256xf32>
    %c0_54 = arith.constant 0 : index
    %c0_55 = arith.constant 0 : index
    %86 = vector.load %arg6[%c0_54, %c0_55] : memref<9x256xbf16, #tpu.memory_space<vmem>>, vector<8x256xbf16>
    %87 = arith.extf %86 : vector<8x256xbf16> to vector<8x256xf32>
    %88 = arith.addf %87, %85 : vector<8x256xf32>
    %89 = arith.truncf %88 : vector<8x256xf32> to vector<8x256xbf16>
    %c0_56 = arith.constant 0 : index
    %c0_57 = arith.constant 0 : index
    %90 = vector.load %arg6[%c0_56, %c0_57] : memref<9x256xbf16, #tpu.memory_space<vmem>>, vector<8x256xbf16>
    tpu.vector_store %arg6[%c0_56, %c0_57], %89 {strides = array<i32>} : memref<9x256xbf16, #tpu.memory_space<vmem>>, vector<8x256xbf16>,
    %c2_i32 = arith.constant 2 : i32
    %91 = arith.cmpi eq, %arg1, %c2_i32 : i32
    %92 = arith.extui %91 : i1 to i32
    %c0_i32_58 = arith.constant 0 : i32
    %93 = arith.cmpi ne, %92, %c0_i32_58 : i32
    scf.if %93 {
      %c0_59 = arith.constant 0 : index
      %c0_60 = arith.constant 0 : index
      %94 = vector.load %arg6[%c0_59, %c0_60] : memref<9x256xbf16, #tpu.memory_space<vmem>>, vector<8x256xbf16>
      %c0_61 = arith.constant 0 : index
      %c0_62 = arith.constant 0 : index
      %c0_63 = arith.constant 0 : index
      %95 = vector.load %arg5[%c0_61, %c0_62, %c0_63] : memref<1x8x256xbf16, #tpu.memory_space<vmem>>, vector<1x8x256xbf16>
      %96 = vector.shape_cast %95 : vector<1x8x256xbf16> to vector<8x256xbf16>
      %97 = vector.shape_cast %94 : vector<8x256xbf16> to vector<1x8x256xbf16>
      tpu.vector_store %arg5[%c0_61, %c0_62, %c0_63], %97 {strides = array<i32>} : memref<1x8x256xbf16, #tpu.memory_space<vmem>>, vector<1x8x256xbf16>,
    } else {
    }
    return
  }
  func.func @transform_0(%arg0: i32, %arg1: i32) -> (i32, i32, i32) {
    %c0_i32 = arith.constant 0 : i32
    %c0_i32_0 = arith.constant 0 : i32
    %c0_i32_1 = arith.constant 0 : i32
    return %arg0, %c0_i32, %c0_i32_0 : i32, i32, i32
  }
  func.func @transform_1(%arg0: i32, %arg1: i32) -> (i32, i32, i32) {
    %c0_i32 = arith.constant 0 : i32
    %c0_i32_0 = arith.constant 0 : i32
    %c0_i32_1 = arith.constant 0 : i32
    return %arg1, %c0_i32, %c0_i32_0 : i32, i32, i32
  }
  func.func @transform_2(%arg0: i32, %arg1: i32) -> (i32, i32, i32) {
    %c0_i32 = arith.constant 0 : i32
    %c0_i32_0 = arith.constant 0 : i32
    %c0_i32_1 = arith.constant 0 : i32
    return %arg1, %c0_i32, %c0_i32_0 : i32, i32, i32
  }
  func.func @transform_3(%arg0: i32, %arg1: i32) -> (i32, i32, i32) {
    %c0_i32 = arith.constant 0 : i32
    %c0_i32_0 = arith.constant 0 : i32
    %c0_i32_1 = arith.constant 0 : i32
    return %arg0, %c0_i32, %c0_i32_0 : i32, i32, i32
  }
}

module attributes {stable_mosaic.version = 11 : i64} {
  func.func @_fused_conv_kernel(%arg0: i32, %arg1: memref<1x8x256xbf16, #tpu.memory_space<vmem>>, %arg2: memref<2x256x256xbf16, #tpu.memory_space<vmem>>, %arg3: memref<1x256xf32, #tpu.memory_space<vmem>>, %arg4: memref<1x8x256xbf16, #tpu.memory_space<vmem>>) attributes {dimension_semantics = [#tpu.dimension_semantics<parallel>], iteration_bounds = array<i64: 2>, scalar_prefetch = 0 : i64, scratch_operands = 0 : i64, tpu.core_type = #tpu.core_type<tc>, window_params = [{transform_indices = @transform_0, window_bounds = array<i64: 1, 8, 256>}, {pipeline_mode = #tpu.pipeline_mode<synchronous>, transform_indices = @transform_1, window_bounds = array<i64: 2, 256, 256>}, {pipeline_mode = #tpu.pipeline_mode<synchronous>, transform_indices = @transform_2, window_bounds = array<i64: 1, 256>}, {transform_indices = @transform_3, window_bounds = array<i64: 1, 8, 256>}]} {
    %c0 = arith.constant 0 : index
    %c0_0 = arith.constant 0 : index
    %c0_1 = arith.constant 0 : index
    %0 = vector.load %arg1[%c0, %c0_0, %c0_1] : memref<1x8x256xbf16, #tpu.memory_space<vmem>>, vector<1x8x256xbf16>
    %1 = vector.shape_cast %0 : vector<1x8x256xbf16> to vector<8x256xbf16>
    %2 = tpu.iota {dimensions = array<i32: 0>} : vector<8x256xi32>
    %cst = arith.constant 0.000000e+00 : f32
    %3 = vector.broadcast %cst : f32 to vector<8x256xf32>
    %c0_2 = arith.constant 0 : index
    %c0_3 = arith.constant 0 : index
    %c0_4 = arith.constant 0 : index
    %4 = vector.load %arg2[%c0_2, %c0_3, %c0_4] : memref<2x256x256xbf16, #tpu.memory_space<vmem>>, vector<1x256x256xbf16>
    %5 = vector.shape_cast %4 : vector<1x256x256xbf16> to vector<256x256xbf16>
    %cst_5 = arith.constant dense<0.000000e+00> : vector<8x256xf32>
    %6 = tpu.matmul %1, %5, %cst_5 {dimension_numbers = #tpu.dot_dimension_numbers<[1], [0], [0], [1], [0, 0, 1, 1], [], []>} : vector<8x256xbf16>, vector<256x256xbf16>, vector<8x256xf32> -> vector<8x256xf32>
    %7 = arith.addf %3, %6 : vector<8x256xf32>
    %c1 = arith.constant 1 : index
    %c0_6 = arith.constant 0 : index
    %c0_7 = arith.constant 0 : index
    %8 = vector.load %arg2[%c1, %c0_6, %c0_7] : memref<2x256x256xbf16, #tpu.memory_space<vmem>>, vector<1x256x256xbf16>
    %9 = vector.shape_cast %8 : vector<1x256x256xbf16> to vector<256x256xbf16>
    %cst_8 = arith.constant dense<0.000000e+00> : vector<8x256xf32>
    %10 = tpu.matmul %1, %9, %cst_8 {dimension_numbers = #tpu.dot_dimension_numbers<[1], [0], [0], [1], [0, 0, 1, 1], [], []>} : vector<8x256xbf16>, vector<256x256xbf16>, vector<8x256xf32> -> vector<8x256xf32>
    %c7_i32 = arith.constant 7 : i32
    %11 = vector.broadcast %c7_i32 : i32 to vector<8x256xi32>
    %12 = arith.cmpi sge, %2, %11 : vector<8x256xi32>
    %c7_i32_9 = arith.constant 7 : i32
    %13 = tpu.dynamic_rotate %10 by %c7_i32_9 dim 0 : vector<8x256xf32>, i32 -> vector<8x256xf32>
    %cst_10 = arith.constant 0.000000e+00 : f32
    %14 = vector.broadcast %cst_10 : f32 to vector<8x256xf32>
    %15 = arith.select %12, %14, %13 : vector<8x256xi1>, vector<8x256xf32>
    %16 = arith.addf %7, %15 : vector<8x256xf32>
    %c0_11 = arith.constant 0 : index
    %c0_12 = arith.constant 0 : index
    %17 = vector.load %arg3[%c0_11, %c0_12] : memref<1x256xf32, #tpu.memory_space<vmem>>, vector<1x256xf32>
    %18 = vector.broadcast %17 : vector<1x256xf32> to vector<8x256xf32>
    %19 = arith.addf %16, %18 : vector<8x256xf32>
    %cst_13 = arith.constant dense<0.000000e+00> : vector<256xf32>
    %20 = vector.multi_reduction <add>, %19, %cst_13 [0] : vector<8x256xf32> to vector<256xf32>
    %21 = vector.shape_cast %20 : vector<256xf32> to vector<1x256xf32>
    %cst_14 = arith.constant 8.000000e+00 : f32
    %22 = vector.broadcast %cst_14 : f32 to vector<1x256xf32>
    %23 = arith.divf %21, %22 : vector<1x256xf32>
    %c128_i32 = arith.constant 128 : i32
    %24 = tpu.dynamic_rotate %23 by %c128_i32 dim 1 : vector<1x256xf32>, i32 -> vector<1x256xf32>
    %25 = arith.addf %23, %24 : vector<1x256xf32>
    %cst_15 = arith.constant 5.000000e-01 : f32
    %26 = vector.broadcast %cst_15 : f32 to vector<1x256xf32>
    %27 = arith.mulf %26, %25 : vector<1x256xf32>
    %28 = vector.broadcast %27 : vector<1x256xf32> to vector<8x256xf32>
    %29 = arith.subf %19, %28 : vector<8x256xf32>
    %30 = arith.mulf %29, %29 : vector<8x256xf32>
    %cst_16 = arith.constant dense<0.000000e+00> : vector<256xf32>
    %31 = vector.multi_reduction <add>, %30, %cst_16 [0] : vector<8x256xf32> to vector<256xf32>
    %32 = vector.shape_cast %31 : vector<256xf32> to vector<1x256xf32>
    %cst_17 = arith.constant 8.000000e+00 : f32
    %33 = vector.broadcast %cst_17 : f32 to vector<1x256xf32>
    %34 = arith.divf %32, %33 : vector<1x256xf32>
    %c128_i32_18 = arith.constant 128 : i32
    %35 = tpu.dynamic_rotate %34 by %c128_i32_18 dim 1 : vector<1x256xf32>, i32 -> vector<1x256xf32>
    %36 = arith.addf %34, %35 : vector<1x256xf32>
    %cst_19 = arith.constant 5.000000e-01 : f32
    %37 = vector.broadcast %cst_19 : f32 to vector<1x256xf32>
    %38 = arith.mulf %37, %36 : vector<1x256xf32>
    %cst_20 = arith.constant 9.99999974E-6 : f32
    %39 = vector.broadcast %cst_20 : f32 to vector<1x256xf32>
    %40 = arith.addf %38, %39 : vector<1x256xf32>
    %41 = math.rsqrt %40 : vector<1x256xf32>
    %42 = vector.broadcast %41 : vector<1x256xf32> to vector<8x256xf32>
    %43 = arith.mulf %29, %42 : vector<8x256xf32>
    %cst_21 = arith.constant 0.000000e+00 : f32
    %44 = vector.broadcast %cst_21 : f32 to vector<8x256xf32>
    %45 = arith.maximumf %43, %44 : vector<8x256xf32>
    %46 = arith.truncf %45 : vector<8x256xf32> to vector<8x256xbf16>
    %c0_22 = arith.constant 0 : index
    %c0_23 = arith.constant 0 : index
    %c0_24 = arith.constant 0 : index
    %47 = vector.load %arg4[%c0_22, %c0_23, %c0_24] : memref<1x8x256xbf16, #tpu.memory_space<vmem>>, vector<1x8x256xbf16>
    %48 = vector.shape_cast %47 : vector<1x8x256xbf16> to vector<8x256xbf16>
    %49 = vector.shape_cast %46 : vector<8x256xbf16> to vector<1x8x256xbf16>
    tpu.vector_store %arg4[%c0_22, %c0_23, %c0_24], %49 {strides = array<i32>} : memref<1x8x256xbf16, #tpu.memory_space<vmem>>, vector<1x8x256xbf16>,
    return
  }
  func.func @transform_0(%arg0: i32) -> (i32, i32, i32) {
    %c0_i32 = arith.constant 0 : i32
    %c0_i32_0 = arith.constant 0 : i32
    %c0_i32_1 = arith.constant 0 : i32
    return %arg0, %c0_i32, %c0_i32_0 : i32, i32, i32
  }
  func.func @transform_1(%arg0: i32) -> (i32, i32, i32) {
    %c0_i32 = arith.constant 0 : i32
    %c0_i32_0 = arith.constant 0 : i32
    %c0_i32_1 = arith.constant 0 : i32
    %c0_i32_2 = arith.constant 0 : i32
    return %c0_i32, %c0_i32_0, %c0_i32_1 : i32, i32, i32
  }
  func.func @transform_2(%arg0: i32) -> (i32, i32) {
    %c0_i32 = arith.constant 0 : i32
    %c0_i32_0 = arith.constant 0 : i32
    %c0_i32_1 = arith.constant 0 : i32
    return %c0_i32, %c0_i32_0 : i32, i32
  }
  func.func @transform_3(%arg0: i32) -> (i32, i32, i32) {
    %c0_i32 = arith.constant 0 : i32
    %c0_i32_0 = arith.constant 0 : i32
    %c0_i32_1 = arith.constant 0 : i32
    return %arg0, %c0_i32, %c0_i32_0 : i32, i32, i32
  }
}

module attributes {stable_mosaic.version = 11 : i64} {
  func.func @_fused_conv_kernel(%arg0: i32, %arg1: memref<1x32x64xbf16, #tpu.memory_space<vmem>>, %arg2: memref<7x64x1xbf16, #tpu.memory_space<vmem>>, %arg3: memref<1x1xf32, #tpu.memory_space<vmem>>, %arg4: memref<1x32x1xf32, #tpu.memory_space<vmem>>) attributes {dimension_semantics = [#tpu.dimension_semantics<parallel>], iteration_bounds = array<i64: 2>, scalar_prefetch = 0 : i64, scratch_operands = 0 : i64, tpu.core_type = #tpu.core_type<tc>, window_params = [{transform_indices = @transform_0, window_bounds = array<i64: 1, 32, 64>}, {pipeline_mode = #tpu.pipeline_mode<synchronous>, transform_indices = @transform_1, window_bounds = array<i64: 7, 64, 1>}, {pipeline_mode = #tpu.pipeline_mode<synchronous>, transform_indices = @transform_2, window_bounds = array<i64: 1, 1>}, {transform_indices = @transform_3, window_bounds = array<i64: 1, 32, 1>}]} {
    %c0 = arith.constant 0 : index
    %c0_0 = arith.constant 0 : index
    %c0_1 = arith.constant 0 : index
    %0 = vector.load %arg1[%c0, %c0_0, %c0_1] : memref<1x32x64xbf16, #tpu.memory_space<vmem>>, vector<1x32x64xbf16>
    %1 = vector.shape_cast %0 : vector<1x32x64xbf16> to vector<32x64xbf16>
    %2 = tpu.iota {dimensions = array<i32: 0>} : vector<32x1xi32>
    %cst = arith.constant 0.000000e+00 : f32
    %3 = vector.broadcast %cst : f32 to vector<32x1xf32>
    %c0_2 = arith.constant 0 : index
    %c0_3 = arith.constant 0 : index
    %c0_4 = arith.constant 0 : index
    %4 = vector.load %arg2[%c0_2, %c0_3, %c0_4] : memref<7x64x1xbf16, #tpu.memory_space<vmem>>, vector<1x64x1xbf16>
    %5 = vector.shape_cast %4 : vector<1x64x1xbf16> to vector<64x1xbf16>
    %cst_5 = arith.constant dense<0.000000e+00> : vector<32x1xf32>
    %6 = tpu.matmul %1, %5, %cst_5 {dimension_numbers = #tpu.dot_dimension_numbers<[1], [0], [0], [1], [0, 0, 1, 1], [], []>} : vector<32x64xbf16>, vector<64x1xbf16>, vector<32x1xf32> -> vector<32x1xf32>
    %c3_i32 = arith.constant 3 : i32
    %7 = vector.broadcast %c3_i32 : i32 to vector<32x1xi32>
    %8 = arith.cmpi slt, %2, %7 : vector<32x1xi32>
    %c3_i32_6 = arith.constant 3 : i32
    %9 = tpu.dynamic_rotate %6 by %c3_i32_6 dim 0 : vector<32x1xf32>, i32 -> vector<32x1xf32>
    %cst_7 = arith.constant 0.000000e+00 : f32
    %10 = vector.broadcast %cst_7 : f32 to vector<32x1xf32>
    %11 = arith.select %8, %10, %9 : vector<32x1xi1>, vector<32x1xf32>
    %12 = arith.addf %3, %11 : vector<32x1xf32>
    %c1 = arith.constant 1 : index
    %c0_8 = arith.constant 0 : index
    %c0_9 = arith.constant 0 : index
    %13 = vector.load %arg2[%c1, %c0_8, %c0_9] : memref<7x64x1xbf16, #tpu.memory_space<vmem>>, vector<1x64x1xbf16>
    %14 = vector.shape_cast %13 : vector<1x64x1xbf16> to vector<64x1xbf16>
    %cst_10 = arith.constant dense<0.000000e+00> : vector<32x1xf32>
    %15 = tpu.matmul %1, %14, %cst_10 {dimension_numbers = #tpu.dot_dimension_numbers<[1], [0], [0], [1], [0, 0, 1, 1], [], []>} : vector<32x64xbf16>, vector<64x1xbf16>, vector<32x1xf32> -> vector<32x1xf32>
    %c2_i32 = arith.constant 2 : i32
    %16 = vector.broadcast %c2_i32 : i32 to vector<32x1xi32>
    %17 = arith.cmpi slt, %2, %16 : vector<32x1xi32>
    %c2_i32_11 = arith.constant 2 : i32
    %18 = tpu.dynamic_rotate %15 by %c2_i32_11 dim 0 : vector<32x1xf32>, i32 -> vector<32x1xf32>
    %cst_12 = arith.constant 0.000000e+00 : f32
    %19 = vector.broadcast %cst_12 : f32 to vector<32x1xf32>
    %20 = arith.select %17, %19, %18 : vector<32x1xi1>, vector<32x1xf32>
    %21 = arith.addf %12, %20 : vector<32x1xf32>
    %c2 = arith.constant 2 : index
    %c0_13 = arith.constant 0 : index
    %c0_14 = arith.constant 0 : index
    %22 = vector.load %arg2[%c2, %c0_13, %c0_14] : memref<7x64x1xbf16, #tpu.memory_space<vmem>>, vector<1x64x1xbf16>
    %23 = vector.shape_cast %22 : vector<1x64x1xbf16> to vector<64x1xbf16>
    %cst_15 = arith.constant dense<0.000000e+00> : vector<32x1xf32>
    %24 = tpu.matmul %1, %23, %cst_15 {dimension_numbers = #tpu.dot_dimension_numbers<[1], [0], [0], [1], [0, 0, 1, 1], [], []>} : vector<32x64xbf16>, vector<64x1xbf16>, vector<32x1xf32> -> vector<32x1xf32>
    %c1_i32 = arith.constant 1 : i32
    %25 = vector.broadcast %c1_i32 : i32 to vector<32x1xi32>
    %26 = arith.cmpi slt, %2, %25 : vector<32x1xi32>
    %c1_i32_16 = arith.constant 1 : i32
    %27 = tpu.dynamic_rotate %24 by %c1_i32_16 dim 0 : vector<32x1xf32>, i32 -> vector<32x1xf32>
    %cst_17 = arith.constant 0.000000e+00 : f32
    %28 = vector.broadcast %cst_17 : f32 to vector<32x1xf32>
    %29 = arith.select %26, %28, %27 : vector<32x1xi1>, vector<32x1xf32>
    %30 = arith.addf %21, %29 : vector<32x1xf32>
    %c3 = arith.constant 3 : index
    %c0_18 = arith.constant 0 : index
    %c0_19 = arith.constant 0 : index
    %31 = vector.load %arg2[%c3, %c0_18, %c0_19] : memref<7x64x1xbf16, #tpu.memory_space<vmem>>, vector<1x64x1xbf16>
    %32 = vector.shape_cast %31 : vector<1x64x1xbf16> to vector<64x1xbf16>
    %cst_20 = arith.constant dense<0.000000e+00> : vector<32x1xf32>
    %33 = tpu.matmul %1, %32, %cst_20 {dimension_numbers = #tpu.dot_dimension_numbers<[1], [0], [0], [1], [0, 0, 1, 1], [], []>} : vector<32x64xbf16>, vector<64x1xbf16>, vector<32x1xf32> -> vector<32x1xf32>
    %34 = arith.addf %30, %33 : vector<32x1xf32>
    %c4 = arith.constant 4 : index
    %c0_21 = arith.constant 0 : index
    %c0_22 = arith.constant 0 : index
    %35 = vector.load %arg2[%c4, %c0_21, %c0_22] : memref<7x64x1xbf16, #tpu.memory_space<vmem>>, vector<1x64x1xbf16>
    %36 = vector.shape_cast %35 : vector<1x64x1xbf16> to vector<64x1xbf16>
    %cst_23 = arith.constant dense<0.000000e+00> : vector<32x1xf32>
    %37 = tpu.matmul %1, %36, %cst_23 {dimension_numbers = #tpu.dot_dimension_numbers<[1], [0], [0], [1], [0, 0, 1, 1], [], []>} : vector<32x64xbf16>, vector<64x1xbf16>, vector<32x1xf32> -> vector<32x1xf32>
    %c31_i32 = arith.constant 31 : i32
    %38 = vector.broadcast %c31_i32 : i32 to vector<32x1xi32>
    %39 = arith.cmpi sge, %2, %38 : vector<32x1xi32>
    %c31_i32_24 = arith.constant 31 : i32
    %40 = tpu.dynamic_rotate %37 by %c31_i32_24 dim 0 : vector<32x1xf32>, i32 -> vector<32x1xf32>
    %cst_25 = arith.constant 0.000000e+00 : f32
    %41 = vector.broadcast %cst_25 : f32 to vector<32x1xf32>
    %42 = arith.select %39, %41, %40 : vector<32x1xi1>, vector<32x1xf32>
    %43 = arith.addf %34, %42 : vector<32x1xf32>
    %c5 = arith.constant 5 : index
    %c0_26 = arith.constant 0 : index
    %c0_27 = arith.constant 0 : index
    %44 = vector.load %arg2[%c5, %c0_26, %c0_27] : memref<7x64x1xbf16, #tpu.memory_space<vmem>>, vector<1x64x1xbf16>
    %45 = vector.shape_cast %44 : vector<1x64x1xbf16> to vector<64x1xbf16>
    %cst_28 = arith.constant dense<0.000000e+00> : vector<32x1xf32>
    %46 = tpu.matmul %1, %45, %cst_28 {dimension_numbers = #tpu.dot_dimension_numbers<[1], [0], [0], [1], [0, 0, 1, 1], [], []>} : vector<32x64xbf16>, vector<64x1xbf16>, vector<32x1xf32> -> vector<32x1xf32>
    %c30_i32 = arith.constant 30 : i32
    %47 = vector.broadcast %c30_i32 : i32 to vector<32x1xi32>
    %48 = arith.cmpi sge, %2, %47 : vector<32x1xi32>
    %c30_i32_29 = arith.constant 30 : i32
    %49 = tpu.dynamic_rotate %46 by %c30_i32_29 dim 0 : vector<32x1xf32>, i32 -> vector<32x1xf32>
    %cst_30 = arith.constant 0.000000e+00 : f32
    %50 = vector.broadcast %cst_30 : f32 to vector<32x1xf32>
    %51 = arith.select %48, %50, %49 : vector<32x1xi1>, vector<32x1xf32>
    %52 = arith.addf %43, %51 : vector<32x1xf32>
    %c6 = arith.constant 6 : index
    %c0_31 = arith.constant 0 : index
    %c0_32 = arith.constant 0 : index
    %53 = vector.load %arg2[%c6, %c0_31, %c0_32] : memref<7x64x1xbf16, #tpu.memory_space<vmem>>, vector<1x64x1xbf16>
    %54 = vector.shape_cast %53 : vector<1x64x1xbf16> to vector<64x1xbf16>
    %cst_33 = arith.constant dense<0.000000e+00> : vector<32x1xf32>
    %55 = tpu.matmul %1, %54, %cst_33 {dimension_numbers = #tpu.dot_dimension_numbers<[1], [0], [0], [1], [0, 0, 1, 1], [], []>} : vector<32x64xbf16>, vector<64x1xbf16>, vector<32x1xf32> -> vector<32x1xf32>
    %c29_i32 = arith.constant 29 : i32
    %56 = vector.broadcast %c29_i32 : i32 to vector<32x1xi32>
    %57 = arith.cmpi sge, %2, %56 : vector<32x1xi32>
    %c29_i32_34 = arith.constant 29 : i32
    %58 = tpu.dynamic_rotate %55 by %c29_i32_34 dim 0 : vector<32x1xf32>, i32 -> vector<32x1xf32>
    %cst_35 = arith.constant 0.000000e+00 : f32
    %59 = vector.broadcast %cst_35 : f32 to vector<32x1xf32>
    %60 = arith.select %57, %59, %58 : vector<32x1xi1>, vector<32x1xf32>
    %61 = arith.addf %52, %60 : vector<32x1xf32>
    %c0_36 = arith.constant 0 : index
    %c0_37 = arith.constant 0 : index
    %62 = vector.load %arg3[%c0_36, %c0_37] : memref<1x1xf32, #tpu.memory_space<vmem>>, vector<1x1xf32>
    %63 = vector.broadcast %62 : vector<1x1xf32> to vector<32x1xf32>
    %64 = arith.addf %61, %63 : vector<32x1xf32>
    %65 = math.tanh %64 : vector<32x1xf32>
    %c0_38 = arith.constant 0 : index
    %c0_39 = arith.constant 0 : index
    %c0_40 = arith.constant 0 : index
    %66 = vector.load %arg4[%c0_38, %c0_39, %c0_40] : memref<1x32x1xf32, #tpu.memory_space<vmem>>, vector<1x32x1xf32>
    %67 = vector.shape_cast %66 : vector<1x32x1xf32> to vector<32x1xf32>
    %68 = vector.shape_cast %65 : vector<32x1xf32> to vector<1x32x1xf32>
    tpu.vector_store %arg4[%c0_38, %c0_39, %c0_40], %68 {strides = array<i32>} : memref<1x32x1xf32, #tpu.memory_space<vmem>>, vector<1x32x1xf32>,
    return
  }
  func.func @transform_0(%arg0: i32) -> (i32, i32, i32) {
    %c0_i32 = arith.constant 0 : i32
    %c0_i32_0 = arith.constant 0 : i32
    %c0_i32_1 = arith.constant 0 : i32
    return %arg0, %c0_i32, %c0_i32_0 : i32, i32, i32
  }
  func.func @transform_1(%arg0: i32) -> (i32, i32, i32) {
    %c0_i32 = arith.constant 0 : i32
    %c0_i32_0 = arith.constant 0 : i32
    %c0_i32_1 = arith.constant 0 : i32
    %c0_i32_2 = arith.constant 0 : i32
    return %c0_i32, %c0_i32_0, %c0_i32_1 : i32, i32, i32
  }
  func.func @transform_2(%arg0: i32) -> (i32, i32) {
    %c0_i32 = arith.constant 0 : i32
    %c0_i32_0 = arith.constant 0 : i32
    %c0_i32_1 = arith.constant 0 : i32
    return %c0_i32, %c0_i32_0 : i32, i32
  }
  func.func @transform_3(%arg0: i32) -> (i32, i32, i32) {
    %c0_i32 = arith.constant 0 : i32
    %c0_i32_0 = arith.constant 0 : i32
    %c0_i32_1 = arith.constant 0 : i32
    return %arg0, %c0_i32, %c0_i32_0 : i32, i32, i32
  }
}

module attributes {stable_mosaic.version = 11 : i64} {
  func.func @_fused_conv_kernel(%arg0: i32, %arg1: memref<1x16x128xbf16, #tpu.memory_space<vmem>>, %arg2: memref<2x128x128xbf16, #tpu.memory_space<vmem>>, %arg3: memref<1x128xf32, #tpu.memory_space<vmem>>, %arg4: memref<1x16x128xbf16, #tpu.memory_space<vmem>>) attributes {dimension_semantics = [#tpu.dimension_semantics<parallel>], iteration_bounds = array<i64: 2>, scalar_prefetch = 0 : i64, scratch_operands = 0 : i64, tpu.core_type = #tpu.core_type<tc>, window_params = [{transform_indices = @transform_0, window_bounds = array<i64: 1, 16, 128>}, {pipeline_mode = #tpu.pipeline_mode<synchronous>, transform_indices = @transform_1, window_bounds = array<i64: 2, 128, 128>}, {pipeline_mode = #tpu.pipeline_mode<synchronous>, transform_indices = @transform_2, window_bounds = array<i64: 1, 128>}, {transform_indices = @transform_3, window_bounds = array<i64: 1, 16, 128>}]} {
    %c0 = arith.constant 0 : index
    %c0_0 = arith.constant 0 : index
    %c0_1 = arith.constant 0 : index
    %0 = vector.load %arg1[%c0, %c0_0, %c0_1] : memref<1x16x128xbf16, #tpu.memory_space<vmem>>, vector<1x16x128xbf16>
    %1 = vector.shape_cast %0 : vector<1x16x128xbf16> to vector<16x128xbf16>
    %2 = tpu.iota {dimensions = array<i32: 0>} : vector<16x128xi32>
    %cst = arith.constant 0.000000e+00 : f32
    %3 = vector.broadcast %cst : f32 to vector<16x128xf32>
    %c0_2 = arith.constant 0 : index
    %c0_3 = arith.constant 0 : index
    %c0_4 = arith.constant 0 : index
    %4 = vector.load %arg2[%c0_2, %c0_3, %c0_4] : memref<2x128x128xbf16, #tpu.memory_space<vmem>>, vector<1x128x128xbf16>
    %5 = vector.shape_cast %4 : vector<1x128x128xbf16> to vector<128x128xbf16>
    %cst_5 = arith.constant dense<0.000000e+00> : vector<16x128xf32>
    %6 = tpu.matmul %1, %5, %cst_5 {dimension_numbers = #tpu.dot_dimension_numbers<[1], [0], [0], [1], [0, 0, 1, 1], [], []>} : vector<16x128xbf16>, vector<128x128xbf16>, vector<16x128xf32> -> vector<16x128xf32>
    %7 = arith.addf %3, %6 : vector<16x128xf32>
    %c1 = arith.constant 1 : index
    %c0_6 = arith.constant 0 : index
    %c0_7 = arith.constant 0 : index
    %8 = vector.load %arg2[%c1, %c0_6, %c0_7] : memref<2x128x128xbf16, #tpu.memory_space<vmem>>, vector<1x128x128xbf16>
    %9 = vector.shape_cast %8 : vector<1x128x128xbf16> to vector<128x128xbf16>
    %cst_8 = arith.constant dense<0.000000e+00> : vector<16x128xf32>
    %10 = tpu.matmul %1, %9, %cst_8 {dimension_numbers = #tpu.dot_dimension_numbers<[1], [0], [0], [1], [0, 0, 1, 1], [], []>} : vector<16x128xbf16>, vector<128x128xbf16>, vector<16x128xf32> -> vector<16x128xf32>
    %c15_i32 = arith.constant 15 : i32
    %11 = vector.broadcast %c15_i32 : i32 to vector<16x128xi32>
    %12 = arith.cmpi sge, %2, %11 : vector<16x128xi32>
    %c15_i32_9 = arith.constant 15 : i32
    %13 = tpu.dynamic_rotate %10 by %c15_i32_9 dim 0 : vector<16x128xf32>, i32 -> vector<16x128xf32>
    %cst_10 = arith.constant 0.000000e+00 : f32
    %14 = vector.broadcast %cst_10 : f32 to vector<16x128xf32>
    %15 = arith.select %12, %14, %13 : vector<16x128xi1>, vector<16x128xf32>
    %16 = arith.addf %7, %15 : vector<16x128xf32>
    %c0_11 = arith.constant 0 : index
    %c0_12 = arith.constant 0 : index
    %17 = vector.load %arg3[%c0_11, %c0_12] : memref<1x128xf32, #tpu.memory_space<vmem>>, vector<1x128xf32>
    %18 = vector.broadcast %17 : vector<1x128xf32> to vector<16x128xf32>
    %19 = arith.addf %16, %18 : vector<16x128xf32>
    %cst_13 = arith.constant dense<0.000000e+00> : vector<128xf32>
    %20 = vector.multi_reduction <add>, %19, %cst_13 [0] : vector<16x128xf32> to vector<128xf32>
    %21 = vector.shape_cast %20 : vector<128xf32> to vector<1x128xf32>
    %cst_14 = arith.constant 1.600000e+01 : f32
    %22 = vector.broadcast %cst_14 : f32 to vector<1x128xf32>
    %23 = arith.divf %21, %22 : vector<1x128xf32>
    %c64_i32 = arith.constant 64 : i32
    %24 = tpu.dynamic_rotate %23 by %c64_i32 dim 1 : vector<1x128xf32>, i32 -> vector<1x128xf32>
    %25 = arith.addf %23, %24 : vector<1x128xf32>
    %cst_15 = arith.constant 5.000000e-01 : f32
    %26 = vector.broadcast %cst_15 : f32 to vector<1x128xf32>
    %27 = arith.mulf %26, %25 : vector<1x128xf32>
    %28 = vector.broadcast %27 : vector<1x128xf32> to vector<16x128xf32>
    %29 = arith.subf %19, %28 : vector<16x128xf32>
    %30 = arith.mulf %29, %29 : vector<16x128xf32>
    %cst_16 = arith.constant dense<0.000000e+00> : vector<128xf32>
    %31 = vector.multi_reduction <add>, %30, %cst_16 [0] : vector<16x128xf32> to vector<128xf32>
    %32 = vector.shape_cast %31 : vector<128xf32> to vector<1x128xf32>
    %cst_17 = arith.constant 1.600000e+01 : f32
    %33 = vector.broadcast %cst_17 : f32 to vector<1x128xf32>
    %34 = arith.divf %32, %33 : vector<1x128xf32>
    %c64_i32_18 = arith.constant 64 : i32
    %35 = tpu.dynamic_rotate %34 by %c64_i32_18 dim 1 : vector<1x128xf32>, i32 -> vector<1x128xf32>
    %36 = arith.addf %34, %35 : vector<1x128xf32>
    %cst_19 = arith.constant 5.000000e-01 : f32
    %37 = vector.broadcast %cst_19 : f32 to vector<1x128xf32>
    %38 = arith.mulf %37, %36 : vector<1x128xf32>
    %cst_20 = arith.constant 9.99999974E-6 : f32
    %39 = vector.broadcast %cst_20 : f32 to vector<1x128xf32>
    %40 = arith.addf %38, %39 : vector<1x128xf32>
    %41 = math.rsqrt %40 : vector<1x128xf32>
    %42 = vector.broadcast %41 : vector<1x128xf32> to vector<16x128xf32>
    %43 = arith.mulf %29, %42 : vector<16x128xf32>
    %cst_21 = arith.constant 0.000000e+00 : f32
    %44 = vector.broadcast %cst_21 : f32 to vector<16x128xf32>
    %45 = arith.maximumf %43, %44 : vector<16x128xf32>
    %46 = arith.truncf %45 : vector<16x128xf32> to vector<16x128xbf16>
    %c0_22 = arith.constant 0 : index
    %c0_23 = arith.constant 0 : index
    %c0_24 = arith.constant 0 : index
    %47 = vector.load %arg4[%c0_22, %c0_23, %c0_24] : memref<1x16x128xbf16, #tpu.memory_space<vmem>>, vector<1x16x128xbf16>
    %48 = vector.shape_cast %47 : vector<1x16x128xbf16> to vector<16x128xbf16>
    %49 = vector.shape_cast %46 : vector<16x128xbf16> to vector<1x16x128xbf16>
    tpu.vector_store %arg4[%c0_22, %c0_23, %c0_24], %49 {strides = array<i32>} : memref<1x16x128xbf16, #tpu.memory_space<vmem>>, vector<1x16x128xbf16>,
    return
  }
  func.func @transform_0(%arg0: i32) -> (i32, i32, i32) {
    %c0_i32 = arith.constant 0 : i32
    %c0_i32_0 = arith.constant 0 : i32
    %c0_i32_1 = arith.constant 0 : i32
    return %arg0, %c0_i32, %c0_i32_0 : i32, i32, i32
  }
  func.func @transform_1(%arg0: i32) -> (i32, i32, i32) {
    %c0_i32 = arith.constant 0 : i32
    %c0_i32_0 = arith.constant 0 : i32
    %c0_i32_1 = arith.constant 0 : i32
    %c0_i32_2 = arith.constant 0 : i32
    return %c0_i32, %c0_i32_0, %c0_i32_1 : i32, i32, i32
  }
  func.func @transform_2(%arg0: i32) -> (i32, i32) {
    %c0_i32 = arith.constant 0 : i32
    %c0_i32_0 = arith.constant 0 : i32
    %c0_i32_1 = arith.constant 0 : i32
    return %c0_i32, %c0_i32_0 : i32, i32
  }
  func.func @transform_3(%arg0: i32) -> (i32, i32, i32) {
    %c0_i32 = arith.constant 0 : i32
    %c0_i32_0 = arith.constant 0 : i32
    %c0_i32_1 = arith.constant 0 : i32
    return %arg0, %c0_i32, %c0_i32_0 : i32, i32, i32
  }
}

</mosaic_0001>

<llo_original>
// kernel: generator_forward.8
$region0: #{generator_forward.8}
  #allocation0 [shape = 'u32[]', space=smem, size = 0x4, offset = 0x4, fixed_abs, tag = 'smem constant byte address 0x4 - core index']
  #allocation1 [shape = 'u32[144,128]{1,0:T(1,128)}', space=vmem, size = 0x12000, scoped, tag = 'internal scratch']
  %s0 = inlined_call_operand.vmem [shape: bf16[2,16,128], index: 0, kind: input, shape index: {}]
  %s1 = inlined_call_operand.hbm [shape: bf16[2,128,128], index: 1, kind: input, shape index: {}]
  %s2 = inlined_call_operand.hbm [shape: f32[1,128], index: 2, kind: input, shape index: {}]
  %s3 = inlined_call_operand.vmem [shape: bf16[2,16,128], index: 3, kind: output, shape index: {}]
  %s4 = sld [smem:[#allocation0]]
  $region53: #{generator_forward.8} parent=0
    _
  %s6 = ssub.s32 1, %s4
  %s7 = scalar_select 0, %s6, %s4
  $region1: #{generator_forward.8} parent=0
    #allocation2 [shape = 'u8[65536]{0}', space=vmem, size = 0x10000, scoped, tag = 'input window, operand 1, single buffered']
    #allocation3 [shape = 's32[2]{0}', space=sflag, size = 0x8, scoped, tag = 'scoped memory for generator_forward.8']
    #allocation4 [shape = 'u8[512]{0}', space=vmem, size = 0x400, scoped, tag = 'input window, operand 2, single buffered']
    #allocation5 [shape = 's32[1]{0}', space=sflag, size = 0x4, scoped, tag = 'scoped memory for generator_forward.8']
    %8 = vsyncpa [#allocation3], 0
    %9 = vsyncpa [#allocation5], 0
    loop: start=0, step=1, limit=4
    $region2: #{generator_forward.8} parent=1 // loop_pre_header
      _
    $region3: #{generator_forward.8} parent=1 // loop_header
      %s11 = sphi 0, %s15
      %p12 = scmp.ge.s32.totalorder %s11, 4
      %s21 = sphi 0, %s23
      %s24 = sphi 0, %s21
      %s25 = sphi 0, %s24
      %s41 = sphi 0, %s25
      %s45 = sphi 0, %s45
      %s47 = sphi 0, %s45
      %s48 = sphi 0, %s47
      %s62 = sphi 0, %s48
      %s66 = sphi 0, %s66
      %s68 = sphi 0, %s66
      %s69 = sphi 0, %s68
      %s83 = sphi 0, %s69
      %s89 = sphi 0, %s91
      %s92 = sphi 0, %s89
      %s93 = sphi 0, %s92
      %s109 = sphi 0, %s93
    $region4: #{generator_forward.8} parent=1 // loop_header_branch
      %14 = sbr.rel (%p12) target = $region8
    $region5: #{generator_forward.8} parent=1 // loop_body
      %s16 = ssub.s32 %s11, 1
      %s17 = ssub.s32 %s11, 2
      %s18 = sadd.s32 %s11, 1
      %s19 = ssub.s32 %s11, %s18
      %p20 = scmp.eq.s32.totalorder %s19, 0
      %s22 = sadd.s32 %s21, 1
      %s23 = scalar_select %p20, %s21, %s22
      %p26 = pneg %p20
      %p27 = scmp.eq.s32.totalorder %s11, 1
      %p28 = por %p26, %p27
      %p29 = scmp.ne.s32.totalorder %s21, %s24
      %p30 = scmp.eq.s32.totalorder %s11, 0
      %p31 = por %p29, %p30
      %p32 = scmp.ne.s32.totalorder %s21, %s24
      %p33 = scmp.eq.s32.totalorder %s16, 1
      %p34 = por %p32, %p33
      %p35 = scmp.ne.s32.totalorder %s24, %s25
      %p36 = scmp.eq.s32.totalorder %s16, 0
      %p37 = por %p35, %p36
      %p38 = scmp.ne.s32.totalorder %s24, %s25
      %p39 = scmp.eq.s32.totalorder %s17, 1
      %p40 = por %p38, %p39
      %p42 = scmp.ne.s32.totalorder %s25, %s41
      %p43 = scmp.eq.s32.totalorder %s17, 0
      %p44 = por %p42, %p43
      %s46 = sadd.s32 %s45, 1
      %p49 = scmp.eq.s32.totalorder %s11, 1
      %p50 = scmp.ne.s32.totalorder %s45, %s47
      %p51 = scmp.eq.s32.totalorder %s11, 0
      %p52 = por %p50, %p51
      %p53 = scmp.ne.s32.totalorder %s45, %s47
      %p54 = scmp.eq.s32.totalorder %s16, 1
      %p55 = por %p53, %p54
      %p56 = scmp.ne.s32.totalorder %s47, %s48
      %p57 = scmp.eq.s32.totalorder %s16, 0
      %p58 = por %p56, %p57
      %p59 = scmp.ne.s32.totalorder %s47, %s48
      %p60 = scmp.eq.s32.totalorder %s17, 1
      %p61 = por %p59, %p60
      %p63 = scmp.ne.s32.totalorder %s48, %s62
      %p64 = scmp.eq.s32.totalorder %s17, 0
      %p65 = por %p63, %p64
      %s67 = sadd.s32 %s66, 1
      %p70 = scmp.eq.s32.totalorder %s11, 1
      %p71 = scmp.ne.s32.totalorder %s66, %s68
      %p72 = scmp.eq.s32.totalorder %s11, 0
      %p73 = por %p71, %p72
      %p74 = scmp.ne.s32.totalorder %s66, %s68
      %p75 = scmp.eq.s32.totalorder %s16, 1
      %p76 = por %p74, %p75
      %p77 = scmp.ne.s32.totalorder %s68, %s69
      %p78 = scmp.eq.s32.totalorder %s16, 0
      %p79 = por %p77, %p78
      %p80 = scmp.ne.s32.totalorder %s68, %s69
      %p81 = scmp.eq.s32.totalorder %s17, 1
      %p82 = por %p80, %p81
      %p84 = scmp.ne.s32.totalorder %s69, %s83
      %p85 = scmp.eq.s32.totalorder %s17, 0
      %p86 = por %p84, %p85
      %s87 = ssub.s32 %s11, %s18
      %p88 = scmp.eq.s32.totalorder %s87, 0
      %s90 = sadd.s32 %s89, 1
      %s91 = scalar_select %p88, %s89, %s90
      %p94 = pneg %p88
      %p95 = scmp.eq.s32.totalorder %s11, 1
      %p96 = por %p94, %p95
      %p97 = scmp.ne.s32.totalorder %s89, %s92
      %p98 = scmp.eq.s32.totalorder %s11, 0
      %p99 = por %p97, %p98
      %p100 = scmp.ne.s32.totalorder %s89, %s92
      %p101 = scmp.eq.s32.totalorder %s16, 1
      %p102 = por %p100, %p101
      %p103 = scmp.ne.s32.totalorder %s92, %s93
      %p104 = scmp.eq.s32.totalorder %s16, 0
      %p105 = por %p103, %p104
      %p106 = scmp.ne.s32.totalorder %s92, %s93
      %p107 = scmp.eq.s32.totalorder %s17, 1
      %p108 = por %p106, %p107
      %p110 = scmp.ne.s32.totalorder %s93, %s109
      %p111 = scmp.eq.s32.totalorder %s17, 0
      %p112 = por %p110, %p111
      %p113 = scmp.le.s32.totalorder 1, %s11
      %p114 = scmp.lt.s32.totalorder %s11, 3
      %p115 = pnand %p113, %p114
      %p116 = pneg %p115
      // Predicated region
      $region9: #{generator_forward.8} parent=5 // pred_check
        _
      $region10: #{generator_forward.8} parent=5 // pred_check_branch
        %118 = sbr.rel (%p115) target = $region12
      $region11: #{generator_forward.8} parent=5 // pred_region
        %s119 = ssub.s32 %s11, 1
        // Predicated region
        $region13: #{generator_forward.8} parent=11 // pred_check
          %p120 = pneg %p58
        $region14: #{generator_forward.8} parent=11 // pred_check_branch
          %122 = sbr.rel (%p120) target = $region16
        $region15: #{generator_forward.8} parent=11 // pred_region
          %s124 = ssub.s32 2048, 2048
          %125 = vsyncadd [#allocation3], %s124
          %s126 = sshll.u32 [#allocation2], 4
          %s127 = int_to_ptr.vmem [resolvable:$true] %s126
          %132 = dma.hbm_to_vmem [thread:$0]  %s1, 2048, %s127, [#allocation3], 64, 64, 4
        $region16: #{generator_forward.8} parent=11 // pred_fallthru
          _
        // Predicated region
        $region17: #{generator_forward.8} parent=11 // pred_check
          %p133 = pneg %p79
        $region18: #{generator_forward.8} parent=11 // pred_check_branch
          %135 = sbr.rel (%p133) target = $region20
        $region19: #{generator_forward.8} parent=11 // pred_region
          %s137 = ssub.s32 16, 16
          %138 = vsyncadd [#allocation5], %s137
          %s140 = sshll.u32 [#allocation4], 4
          %s141 = int_to_ptr.vmem [resolvable:$true] %s140
          %143 = dma.hbm_to_vmem [thread:$0]  %s2, 16, %s141, [#allocation5]
        $region20: #{generator_forward.8} parent=11 // pred_fallthru
          _
      $region12: #{generator_forward.8} parent=5 // pred_fallthru
        _
      %p144 = scmp.lt.s32.totalorder %s11, 2
      // Predicated region
      $region21: #{generator_forward.8} parent=5 // pred_check
        %p145 = pneg %p144
      $region22: #{generator_forward.8} parent=5 // pred_check_branch
        %147 = sbr.rel (%p145) target = $region24
      $region23: #{generator_forward.8} parent=5 // pred_region
        // Predicated region
        $region25: #{generator_forward.8} parent=23 // pred_check
          %p148 = pneg %p31
        $region26: #{generator_forward.8} parent=23 // pred_check_branch
          %150 = sbr.rel (%p148) target = $region28
        $region27: #{generator_forward.8} parent=23 // pred_region
          %p151 = scmp.lt.s32.totalorder %s11, 1
          %s152 = scalar_select %p151, %s11, 1
          %s153 = smul.addr %s152, 2
          %s154 = smul.addr %s153, 4
          %s155 = scalar_lea.vmem %s0, %s154
        $region28: #{generator_forward.8} parent=23 // pred_fallthru
          _
      $region24: #{generator_forward.8} parent=5 // pred_fallthru
        _
      %p156 = scmp.le.s32.totalorder 1, %s11
      %p157 = scmp.lt.s32.totalorder %s11, 3
      %p158 = pnand %p156, %p157
      %p159 = pneg %p158
      // Predicated region
      $region29: #{generator_forward.8} parent=5 // pred_check
        _
      $region30: #{generator_forward.8} parent=5 // pred_check_branch
        %161 = sbr.rel (%p158) target = $region32
      $region31: #{generator_forward.8} parent=5 // pred_region
        %s162 = ssub.s32 %s11, 1
        // Predicated region
        $region33: #{generator_forward.8} parent=31 // pred_check
          %p163 = pneg %p58
        $region34: #{generator_forward.8} parent=31 // pred_check_branch
          %165 = sbr.rel (%p163) target = $region36
        $region35: #{generator_forward.8} parent=31 // pred_region
          %166 = dma.done [#allocation3], 2048
        $region36: #{generator_forward.8} parent=31 // pred_fallthru
          _
        // Predicated region
        $region37: #{generator_forward.8} parent=31 // pred_check
          %p167 = pneg %p79
        $region38: #{generator_forward.8} parent=31 // pred_check_branch
          %169 = sbr.rel (%p167) target = $region40
        $region39: #{generator_forward.8} parent=31 // pred_region
          %170 = dma.done [#allocation5], 16
        $region40: #{generator_forward.8} parent=31 // pred_fallthru
          _
        %p171 = scmp.lt.s32.totalorder %s16, 1
        %s172 = scalar_select %p171, %s16, 1
        %s173 = smul.addr %s172, 2
        %s174 = smul.addr %s173, 4
        %s175 = scalar_lea.vmem %s0, %s174
        %p176 = pneg %p37
        %p177 = pneg %p34
        %p178 = pneg %p58
        %p179 = pneg %p55
        %p180 = pneg %p79
        %p181 = pneg %p76
        %p182 = pneg %p105
        %p183 = pneg %p102
        %p184 = scmp.lt.s32.totalorder %s16, 1
        %s185 = scalar_select %p184, %s16, 1
        %s186 = smul.addr %s185, 2
        %s187 = smul.addr %s186, 4
        %s188 = scalar_lea.vmem %s3, %s187
        %p189 = scmp.lt.s32.totalorder %s16, 1
        %s190 = scalar_select %p189, %s16, 1
        %s191 = smul.addr %s190, 2
        %s192 = smul.addr %s191, 4
        %s193 = scalar_lea.vmem %s0, %s192
        %p194 = scmp.lt.s32.totalorder %s16, 1
        %s195 = scalar_select %p194, %s16, 1
        %s196 = smul.addr %s195, 2
        %s197 = smul.addr %s196, 4
        %s198 = scalar_lea.vmem %s3, %s197
        %v200 = vld [vmem:[%s193] sm:$0xf]
        %v201 = vld [vmem:[%s193 + $0x4] sm:$0xf]
        %v202 = vlaneseq
        %v203 = vshrl.u32 %v202, 7
        %v204 = vadd.s32 %v203, 8
        %v205 = vld [vmem:[#allocation2] sm:$0xf]
        %v206 = vld [vmem:[#allocation2 + $0x4] sm:$0xf]
        %v207 = vld [vmem:[#allocation2 + $0x8] sm:$0xf]
        %v208 = vld [vmem:[#allocation2 + $0xc] sm:$0xf]
        %v209 = vld [vmem:[#allocation2 + $0x10] sm:$0xf]
        %v210 = vld [vmem:[#allocation2 + $0x14] sm:$0xf]
        %v211 = vld [vmem:[#allocation2 + $0x18] sm:$0xf]
        %v212 = vld [vmem:[#allocation2 + $0x1c] sm:$0xf]
        %v213 = vld [vmem:[#allocation2 + $0x20] sm:$0xf]
        %v214 = vld [vmem:[#allocation2 + $0x24] sm:$0xf]
        %v215 = vld [vmem:[#allocation2 + $0x28] sm:$0xf]
        %v216 = vld [vmem:[#allocation2 + $0x2c] sm:$0xf]
        %v217 = vld [vmem:[#allocation2 + $0x30] sm:$0xf]
        %v218 = vld [vmem:[#allocation2 + $0x34] sm:$0xf]
        %v219 = vld [vmem:[#allocation2 + $0x38] sm:$0xf]
        %v220 = vld [vmem:[#allocation2 + $0x3c] sm:$0xf]
        %s221 = scalar_lea.vmem [#allocation2], 64
        %v222 = vld [vmem:[%s221] sm:$0xf]
        %v223 = vld [vmem:[%s221 + $0x4] sm:$0xf]
        %v224 = vld [vmem:[%s221 + $0x8] sm:$0xf]
        %v225 = vld [vmem:[%s221 + $0xc] sm:$0xf]
        %v226 = vld [vmem:[%s221 + $0x10] sm:$0xf]
        %v227 = vld [vmem:[%s221 + $0x14] sm:$0xf]
        %v228 = vld [vmem:[%s221 + $0x18] sm:$0xf]
        %v229 = vld [vmem:[%s221 + $0x1c] sm:$0xf]
        %v230 = vld [vmem:[%s221 + $0x20] sm:$0xf]
        %v231 = vld [vmem:[%s221 + $0x24] sm:$0xf]
        %v232 = vld [vmem:[%s221 + $0x28] sm:$0xf]
        %v233 = vld [vmem:[%s221 + $0x2c] sm:$0xf]
        %v234 = vld [vmem:[%s221 + $0x30] sm:$0xf]
        %v235 = vld [vmem:[%s221 + $0x34] sm:$0xf]
        %v236 = vld [vmem:[%s221 + $0x38] sm:$0xf]
        %v237 = vld [vmem:[%s221 + $0x3c] sm:$0xf]
        %v240 = vunpack.c.l.b16 %v200
        %v241 = vunpack.c.l.b16 %v201
        %v242 = vpack.c.b16 %v241, %v240
        %v260 = vunpack.c.l.b16 %v222
        %v261 = vunpack.c.l.b16 %v223
        %v262 = vunpack.c.l.b16 %v224
        %v263 = vunpack.c.l.b16 %v225
        %v264 = vunpack.c.l.b16 %v226
        %v265 = vunpack.c.l.b16 %v227
        %v266 = vunpack.c.l.b16 %v228
        %v267 = vunpack.c.l.b16 %v229
        %v268 = vunpack.c.l.b16 %v230
        %v269 = vunpack.c.l.b16 %v231
        %v270 = vunpack.c.l.b16 %v232
        %v271 = vunpack.c.l.b16 %v233
        %v272 = vunpack.c.l.b16 %v234
        %v273 = vunpack.c.l.b16 %v235
        %v274 = vunpack.c.l.b16 %v236
        %v275 = vunpack.c.l.b16 %v237
        %v276 = vpack.c.b16 %v261, %v260
        %v277 = vpack.c.b16 %v263, %v262
        %v278 = vpack.c.b16 %v265, %v264
        %v279 = vpack.c.b16 %v267, %v266
        %v280 = vpack.c.b16 %v269, %v268
        %v281 = vpack.c.b16 %v271, %v270
        %v282 = vpack.c.b16 %v273, %v272
        %v283 = vpack.c.b16 %v275, %v274
        %292 = vmatprep.subr.bf16.mxu0 0
        %293 = vmatpush1.bf16.msra.mxu0 %v283
        %294 = vmatprep.subr.bf16.mxu0 0
        %295 = vmatpush1.bf16.msra.mxu0 %v282
        %296 = vmatprep.subr.bf16.mxu0 0
        %297 = vmatpush1.bf16.msra.mxu0 %v281
        %298 = vmatprep.subr.bf16.mxu0 0
        %299 = vmatpush1.bf16.msra.mxu0 %v280
        %300 = vmatprep.subr.bf16.mxu0 0
        %301 = vmatpush1.bf16.msra.mxu0 %v279
        %302 = vmatprep.subr.bf16.mxu0 0
        %303 = vmatpush1.bf16.msra.mxu0 %v278
        %304 = vmatprep.subr.bf16.mxu0 0
        %305 = vmatpush1.bf16.msra.mxu0 %v277
        %306 = vmatprep.subr.bf16.mxu0 0
        %307 = vmatpush1.bf16.msra.mxu0 %v276
        %308 = vmatprep.subr.bf16.mxu0 0
        %309 = vmatpush2.bf16.msra.mxu0 0
        %310 = vmatprep.subr.bf16.mxu0 0
        %311 = vmatpush2.bf16.msra.mxu0 0
        %312 = vmatprep.subr.bf16.mxu0 0
        %313 = vmatpush2.bf16.msra.mxu0 0
        %314 = vmatprep.subr.bf16.mxu0 0
        %315 = vmatpush2.bf16.msra.mxu0 0
        %316 = vmatprep.subr.bf16.mxu0 0
        %317 = vmatpush2.bf16.msra.mxu0 0
        %318 = vmatprep.subr.bf16.mxu0 0
        %319 = vmatpush2.bf16.msra.mxu0 0
        %320 = vmatprep.subr.bf16.mxu0 0
        %321 = vmatpush2.bf16.msra.mxu0 0
        %322 = vmatprep.subr.bf16.mxu0 0
        %323 = vmatpush2.bf16.msra.mxu0 0
        %324 = vmatprep.mubr.bf16.mxu0 0
        %325 = vmatmul.mubr.bf16.gmra.mxu0 %v242
        %v326 = vpop.f32.mrf.mxu0
        %v327 = vadd.f32 0.0, %v326
        %v328 = vpop.f32.mrf.mxu0
        %v329 = vpop.f32.mrf.mxu0
        %v330 = vadd.f32 0.0, %v329
        %v331 = vpop.f32.mrf.mxu0
        %332 = vdwg.mxu0
        %vm333 = vcmp.lt.s32.totalorder %v203, 1
        %vm334 = vcmp.lt.s32.totalorder %v204, 1
        %v335 = vrot.slane %v327, 7
        %v336 = vrot.slane %v330, 7
        %v337 = vsel %vm333, %v335, %v336
        %v338 = vsel %vm333, %v336, %v335
        %v339 = vsel %vm333, 0.0, %v338
        %v340 = vsel %vm334, 0.0, %v337
        %v357 = vunpack.c.l.b16 %v205
        %v358 = vunpack.c.l.b16 %v206
        %v359 = vunpack.c.l.b16 %v207
        %v360 = vunpack.c.l.b16 %v208
        %v361 = vunpack.c.l.b16 %v209
        %v362 = vunpack.c.l.b16 %v210
        %v363 = vunpack.c.l.b16 %v211
        %v364 = vunpack.c.l.b16 %v212
        %v365 = vunpack.c.l.b16 %v213
        %v366 = vunpack.c.l.b16 %v214
        %v367 = vunpack.c.l.b16 %v215
        %v368 = vunpack.c.l.b16 %v216
        %v369 = vunpack.c.l.b16 %v217
        %v370 = vunpack.c.l.b16 %v218
        %v371 = vunpack.c.l.b16 %v219
        %v372 = vunpack.c.l.b16 %v220
        %v373 = vpack.c.b16 %v358, %v357
        %v374 = vpack.c.b16 %v360, %v359
        %v375 = vpack.c.b16 %v362, %v361
        %v376 = vpack.c.b16 %v364, %v363
        %v377 = vpack.c.b16 %v366, %v365
        %v378 = vpack.c.b16 %v368, %v367
        %v379 = vpack.c.b16 %v370, %v369
        %v380 = vpack.c.b16 %v372, %v371
        %389 = vmatprep.subr.bf16.mxu0 0
        %390 = vmatpush1.bf16.msra.mxu0 %v380
        %391 = vmatprep.subr.bf16.mxu0 0
        %392 = vmatpush1.bf16.msra.mxu0 %v379
        %393 = vmatprep.subr.bf16.mxu0 0
        %394 = vmatpush1.bf16.msra.mxu0 %v378
        %395 = vmatprep.subr.bf16.mxu0 0
        %396 = vmatpush1.bf16.msra.mxu0 %v377
        %397 = vmatprep.subr.bf16.mxu0 0
        %398 = vmatpush1.bf16.msra.mxu0 %v376
        %399 = vmatprep.subr.bf16.mxu0 0
        %400 = vmatpush1.bf16.msra.mxu0 %v375
        %401 = vmatprep.subr.bf16.mxu0 0
        %402 = vmatpush1.bf16.msra.mxu0 %v374
        %403 = vmatprep.subr.bf16.mxu0 0
        %404 = vmatpush1.bf16.msra.mxu0 %v373
        %405 = vmatprep.subr.bf16.mxu0 0
        %406 = vmatpush2.bf16.msra.mxu0 0
        %407 = vmatprep.subr.bf16.mxu0 0
        %408 = vmatpush2.bf16.msra.mxu0 0
        %409 = vmatprep.subr.bf16.mxu0 0
        %410 = vmatpush2.bf16.msra.mxu0 0
        %411 = vmatprep.subr.bf16.mxu0 0
        %412 = vmatpush2.bf16.msra.mxu0 0
        %413 = vmatprep.subr.bf16.mxu0 0
        %414 = vmatpush2.bf16.msra.mxu0 0
        %415 = vmatprep.subr.bf16.mxu0 0
        %416 = vmatpush2.bf16.msra.mxu0 0
        %417 = vmatprep.subr.bf16.mxu0 0
        %418 = vmatpush2.bf16.msra.mxu0 0
        %419 = vmatprep.subr.bf16.mxu0 0
        %420 = vmatpush2.bf16.msra.mxu0 0
        %421 = vmatprep.mubr.bf16.mxu0 0
        %422 = vmatmul.mubr.bf16.gmra.mxu0 %v242
        %v423 = vpop.f32.mrf.mxu0
        %v424 = vadd.f32 %v339, %v423
        %v425 = vpop.f32.mrf.mxu0
        %v426 = vpop.f32.mrf.mxu0
        %v427 = vadd.f32 %v340, %v426
        %v428 = vpop.f32.mrf.mxu0
        %429 = vdwg.mxu0
        %v430 = vld [vmem:[#allocation4] sm:$0x1]
        %v432 = vlaneseq
        %v433 = vshrl.u32 %v432, 7
        %v434 = vsub.s32 0, %v433
        %v435 = vrot.slane %v430, %v434
        %v437 = vadd.f32 %v424, %v435
        %v438 = vadd.f32 %v427, %v435
        %v439 = vadd.f32 %v437, %v438
        %v440 = vrot.slane %v439, 4
        %v441 = vadd.f32 %v439, %v440
        %v442 = vrot.slane %v441, 2
        %v443 = vadd.f32 %v441, %v442
        %v444 = vrot.slane %v443, 1
        %v445 = vadd.f32 %v443, %v444
        %v446 = vrcp.pop 16.0
        %v447 = vmul.f32 %v445, %v446
        %v448 = vsub.f32 %v437, %v447
        %v449 = vsub.f32 %v438, %v447
        %v450 = vmul.f32 %v448, %v448
        %v451 = vmul.f32 %v449, %v449
        %v452 = vadd.f32 %v450, %v451
        %v453 = vrot.slane %v452, 4
        %v454 = vadd.f32 %v452, %v453
        %v455 = vrot.slane %v454, 2
        %v456 = vadd.f32 %v454, %v455
        %v457 = vrot.slane %v456, 1
        %v458 = vadd.f32 %v456, %v457
        %v459 = vmul.f32 %v458, %v446
        %v460 = vadd.f32 %v459, 1e-05
        %v461 = vrsqrt.pop %v460
        %v462 = vmul.f32 %v448, %v461
        %v463 = vmul.f32 %v449, %v461
        %v464 = vmax.f32 %v462, 0.0
        %v465 = vmax.f32 %v463, 0.0
        %v466 = vpack.c.bf16 %v465, %v464
        %v468 = vunpack.c.l.b16 %v466
        %v469 = vunpack.c.h.b16 %v466
        %v470 = vpack.c.b16 %v468, %v468
        %v471 = vpack.c.b16 %v469, %v469
        %474 = vst [vmem:[%s198] sm:$0xf] %v470
        %475 = vst [vmem:[%s198 + $0x4] sm:$0xf] %v471
        %p476 = scmp.lt.s32.totalorder %s16, 1
        %s477 = scalar_select %p476, %s16, 1
        %s478 = smul.addr %s477, 2
        %s479 = smul.addr %s478, 4
        %s480 = scalar_lea.vmem %s3, %s479
        // Predicated region
        $region41: #{generator_forward.8} parent=31 // pred_check
          %p481 = pneg %p102
        $region42: #{generator_forward.8} parent=31 // pred_check_branch
          %483 = sbr.rel (%p481) target = $region44
        $region43: #{generator_forward.8} parent=31 // pred_region
          _
        $region44: #{generator_forward.8} parent=31 // pred_fallthru
          _
      $region32: #{generator_forward.8} parent=5 // pred_fallthru
        _
      %p484 = scmp.le.s32.totalorder 2, %s11
      // Predicated region
      $region45: #{generator_forward.8} parent=5 // pred_check
        %p485 = pneg %p484
      $region46: #{generator_forward.8} parent=5 // pred_check_branch
        %487 = sbr.rel (%p485) target = $region48
      $region47: #{generator_forward.8} parent=5 // pred_region
        %s488 = ssub.s32 %s11, 2
        // Predicated region
        $region49: #{generator_forward.8} parent=47 // pred_check
          %p489 = pneg %p108
        $region50: #{generator_forward.8} parent=47 // pred_check_branch
          %491 = sbr.rel (%p489) target = $region52
        $region51: #{generator_forward.8} parent=47 // pred_region
          %p492 = scmp.lt.s32.totalorder %s17, 1
          %s493 = scalar_select %p492, %s17, 1
          %s494 = smul.addr %s493, 2
          %s495 = smul.addr %s494, 4
          %s496 = scalar_lea.vmem %s3, %s495
        $region52: #{generator_forward.8} parent=47 // pred_fallthru
          _
      $region48: #{generator_forward.8} parent=5 // pred_fallthru
        _
    $region6: #{generator_forward.8} parent=1 // loop_footer
      %s15 = sadd.s32 1, %s11
    $region7: #{generator_forward.8} parent=1 // loop_footer_branch
      %10 = sbr.rel target = $region3
    $region8: #{generator_forward.8} parent=1 // loop_exit
      _
    %497 = vsyncpa [#allocation3], 1
    %s498 = scalar_lea.sflag [#allocation3], 1
    %499 = vsyncpa %s498, 1
    %500 = vsyncpa [#allocation5], 1

// kernel: generator_forward.7
$region0: #{generator_forward.7}
  #allocation0 [shape = 'u32[]', space=smem, size = 0x4, offset = 0x4, fixed_abs, tag = 'smem constant byte address 0x4 - core index']
  #allocation1 [shape = 'u32[144,128]{1,0:T(1,128)}', space=vmem, size = 0x12000, scoped, tag = 'internal scratch']
  %s0 = inlined_call_operand.vmem [shape: bf16[2,16,14], index: 0, kind: input, shape index: {}]
  %s1 = inlined_call_operand.hbm [shape: bf16[1,14,128], index: 1, kind: input, shape index: {}]
  %s2 = inlined_call_operand.hbm [shape: f32[1,128], index: 2, kind: input, shape index: {}]
  %s3 = inlined_call_operand.vmem [shape: bf16[2,16,128], index: 3, kind: output, shape index: {}]
  %s4 = sld [smem:[#allocation0]]
  $region53: #{generator_forward.7} parent=0
    _
  %s6 = ssub.s32 1, %s4
  %s7 = scalar_select 0, %s6, %s4
  $region1: #{generator_forward.7} parent=0
    #allocation2 [shape = 'u8[4096]{0}', space=vmem, size = 0x1000, scoped, tag = 'input window, operand 1, single buffered']
    #allocation3 [shape = 's32[2]{0}', space=sflag, size = 0x8, scoped, tag = 'scoped memory for generator_forward.7']
    #allocation4 [shape = 'u8[512]{0}', space=vmem, size = 0x400, scoped, tag = 'input window, operand 2, single buffered']
    #allocation5 [shape = 's32[1]{0}', space=sflag, size = 0x4, scoped, tag = 'scoped memory for generator_forward.7']
    %8 = vsyncpa [#allocation3], 0
    %9 = vsyncpa [#allocation5], 0
    loop: start=0, step=1, limit=4
    $region2: #{generator_forward.7} parent=1 // loop_pre_header
      _
    $region3: #{generator_forward.7} parent=1 // loop_header
      %s11 = sphi 0, %s15
      %p12 = scmp.ge.s32.totalorder %s11, 4
      %s21 = sphi 0, %s23
      %s24 = sphi 0, %s21
      %s25 = sphi 0, %s24
      %s41 = sphi 0, %s25
      %s45 = sphi 0, %s45
      %s47 = sphi 0, %s45
      %s48 = sphi 0, %s47
      %s62 = sphi 0, %s48
      %s66 = sphi 0, %s66
      %s68 = sphi 0, %s66
      %s69 = sphi 0, %s68
      %s83 = sphi 0, %s69
      %s89 = sphi 0, %s91
      %s92 = sphi 0, %s89
      %s93 = sphi 0, %s92
      %s109 = sphi 0, %s93
    $region4: #{generator_forward.7} parent=1 // loop_header_branch
      %14 = sbr.rel (%p12) target = $region8
    $region5: #{generator_forward.7} parent=1 // loop_body
      %s16 = ssub.s32 %s11, 1
      %s17 = ssub.s32 %s11, 2
      %s18 = sadd.s32 %s11, 1
      %s19 = ssub.s32 %s11, %s18
      %p20 = scmp.eq.s32.totalorder %s19, 0
      %s22 = sadd.s32 %s21, 1
      %s23 = scalar_select %p20, %s21, %s22
      %p26 = pneg %p20
      %p27 = scmp.eq.s32.totalorder %s11, 1
      %p28 = por %p26, %p27
      %p29 = scmp.ne.s32.totalorder %s21, %s24
      %p30 = scmp.eq.s32.totalorder %s11, 0
      %p31 = por %p29, %p30
      %p32 = scmp.ne.s32.totalorder %s21, %s24
      %p33 = scmp.eq.s32.totalorder %s16, 1
      %p34 = por %p32, %p33
      %p35 = scmp.ne.s32.totalorder %s24, %s25
      %p36 = scmp.eq.s32.totalorder %s16, 0
      %p37 = por %p35, %p36
      %p38 = scmp.ne.s32.totalorder %s24, %s25
      %p39 = scmp.eq.s32.totalorder %s17, 1
      %p40 = por %p38, %p39
      %p42 = scmp.ne.s32.totalorder %s25, %s41
      %p43 = scmp.eq.s32.totalorder %s17, 0
      %p44 = por %p42, %p43
      %s46 = sadd.s32 %s45, 1
      %p49 = scmp.eq.s32.totalorder %s11, 1
      %p50 = scmp.ne.s32.totalorder %s45, %s47
      %p51 = scmp.eq.s32.totalorder %s11, 0
      %p52 = por %p50, %p51
      %p53 = scmp.ne.s32.totalorder %s45, %s47
      %p54 = scmp.eq.s32.totalorder %s16, 1
      %p55 = por %p53, %p54
      %p56 = scmp.ne.s32.totalorder %s47, %s48
      %p57 = scmp.eq.s32.totalorder %s16, 0
      %p58 = por %p56, %p57
      %p59 = scmp.ne.s32.totalorder %s47, %s48
      %p60 = scmp.eq.s32.totalorder %s17, 1
      %p61 = por %p59, %p60
      %p63 = scmp.ne.s32.totalorder %s48, %s62
      %p64 = scmp.eq.s32.totalorder %s17, 0
      %p65 = por %p63, %p64
      %s67 = sadd.s32 %s66, 1
      %p70 = scmp.eq.s32.totalorder %s11, 1
      %p71 = scmp.ne.s32.totalorder %s66, %s68
      %p72 = scmp.eq.s32.totalorder %s11, 0
      %p73 = por %p71, %p72
      %p74 = scmp.ne.s32.totalorder %s66, %s68
      %p75 = scmp.eq.s32.totalorder %s16, 1
      %p76 = por %p74, %p75
      %p77 = scmp.ne.s32.totalorder %s68, %s69
      %p78 = scmp.eq.s32.totalorder %s16, 0
      %p79 = por %p77, %p78
      %p80 = scmp.ne.s32.totalorder %s68, %s69
      %p81 = scmp.eq.s32.totalorder %s17, 1
      %p82 = por %p80, %p81
      %p84 = scmp.ne.s32.totalorder %s69, %s83
      %p85 = scmp.eq.s32.totalorder %s17, 0
      %p86 = por %p84, %p85
      %s87 = ssub.s32 %s11, %s18
      %p88 = scmp.eq.s32.totalorder %s87, 0
      %s90 = sadd.s32 %s89, 1
      %s91 = scalar_select %p88, %s89, %s90
      %p94 = pneg %p88
      %p95 = scmp.eq.s32.totalorder %s11, 1
      %p96 = por %p94, %p95
      %p97 = scmp.ne.s32.totalorder %s89, %s92
      %p98 = scmp.eq.s32.totalorder %s11, 0
      %p99 = por %p97, %p98
      %p100 = scmp.ne.s32.totalorder %s89, %s92
      %p101 = scmp.eq.s32.totalorder %s16, 1
      %p102 = por %p100, %p101
      %p103 = scmp.ne.s32.totalorder %s92, %s93
      %p104 = scmp.eq.s32.totalorder %s16, 0
      %p105 = por %p103, %p104
      %p106 = scmp.ne.s32.totalorder %s92, %s93
      %p107 = scmp.eq.s32.totalorder %s17, 1
      %p108 = por %p106, %p107
      %p110 = scmp.ne.s32.totalorder %s93, %s109
      %p111 = scmp.eq.s32.totalorder %s17, 0
      %p112 = por %p110, %p111
      %p113 = scmp.le.s32.totalorder 1, %s11
      %p114 = scmp.lt.s32.totalorder %s11, 3
      %p115 = pnand %p113, %p114
      %p116 = pneg %p115
      // Predicated region
      $region9: #{generator_forward.7} parent=5 // pred_check
        _
      $region10: #{generator_forward.7} parent=5 // pred_check_branch
        %118 = sbr.rel (%p115) target = $region12
      $region11: #{generator_forward.7} parent=5 // pred_region
        %s119 = ssub.s32 %s11, 1
        // Predicated region
        $region13: #{generator_forward.7} parent=11 // pred_check
          %p120 = pneg %p58
        $region14: #{generator_forward.7} parent=11 // pred_check_branch
          %122 = sbr.rel (%p120) target = $region16
        $region15: #{generator_forward.7} parent=11 // pred_region
          %s124 = ssub.s32 128, 128
          %125 = vsyncadd [#allocation3], %s124
          %s126 = sshll.u32 [#allocation2], 4
          %s127 = int_to_ptr.vmem [resolvable:$true] %s126
          %132 = dma.hbm_to_vmem [thread:$0]  %s1, 128, %s127, [#allocation3], 64, 64, 4
        $region16: #{generator_forward.7} parent=11 // pred_fallthru
          _
        // Predicated region
        $region17: #{generator_forward.7} parent=11 // pred_check
          %p133 = pneg %p79
        $region18: #{generator_forward.7} parent=11 // pred_check_branch
          %135 = sbr.rel (%p133) target = $region20
        $region19: #{generator_forward.7} parent=11 // pred_region
          %s137 = ssub.s32 16, 16
          %138 = vsyncadd [#allocation5], %s137
          %s140 = sshll.u32 [#allocation4], 4
          %s141 = int_to_ptr.vmem [resolvable:$true] %s140
          %143 = dma.hbm_to_vmem [thread:$0]  %s2, 16, %s141, [#allocation5]
        $region20: #{generator_forward.7} parent=11 // pred_fallthru
          _
      $region12: #{generator_forward.7} parent=5 // pred_fallthru
        _
      %p144 = scmp.lt.s32.totalorder %s11, 2
      // Predicated region
      $region21: #{generator_forward.7} parent=5 // pred_check
        %p145 = pneg %p144
      $region22: #{generator_forward.7} parent=5 // pred_check_branch
        %147 = sbr.rel (%p145) target = $region24
      $region23: #{generator_forward.7} parent=5 // pred_region
        // Predicated region
        $region25: #{generator_forward.7} parent=23 // pred_check
          %p148 = pneg %p31
        $region26: #{generator_forward.7} parent=23 // pred_check_branch
          %150 = sbr.rel (%p148) target = $region28
        $region27: #{generator_forward.7} parent=23 // pred_region
          %p151 = scmp.lt.s32.totalorder %s11, 1
          %s152 = scalar_select %p151, %s11, 1
          %s153 = smul.addr %s152, 2
          %s154 = smul.addr %s153, 4
          %s155 = scalar_lea.vmem %s0, %s154
        $region28: #{generator_forward.7} parent=23 // pred_fallthru
          _
      $region24: #{generator_forward.7} parent=5 // pred_fallthru
        _
      %p156 = scmp.le.s32.totalorder 1, %s11
      %p157 = scmp.lt.s32.totalorder %s11, 3
      %p158 = pnand %p156, %p157
      %p159 = pneg %p158
      // Predicated region
      $region29: #{generator_forward.7} parent=5 // pred_check
        _
      $region30: #{generator_forward.7} parent=5 // pred_check_branch
        %161 = sbr.rel (%p158) target = $region32
      $region31: #{generator_forward.7} parent=5 // pred_region
        %s162 = ssub.s32 %s11, 1
        // Predicated region
        $region33: #{generator_forward.7} parent=31 // pred_check
          %p163 = pneg %p58
        $region34: #{generator_forward.7} parent=31 // pred_check_branch
          %165 = sbr.rel (%p163) target = $region36
        $region35: #{generator_forward.7} parent=31 // pred_region
          %166 = dma.done [#allocation3], 128
        $region36: #{generator_forward.7} parent=31 // pred_fallthru
          _
        // Predicated region
        $region37: #{generator_forward.7} parent=31 // pred_check
          %p167 = pneg %p79
        $region38: #{generator_forward.7} parent=31 // pred_check_branch
          %169 = sbr.rel (%p167) target = $region40
        $region39: #{generator_forward.7} parent=31 // pred_region
          %170 = dma.done [#allocation5], 16
        $region40: #{generator_forward.7} parent=31 // pred_fallthru
          _
        %p171 = scmp.lt.s32.totalorder %s16, 1
        %s172 = scalar_select %p171, %s16, 1
        %s173 = smul.addr %s172, 2
        %s174 = smul.addr %s173, 4
        %s175 = scalar_lea.vmem %s0, %s174
        %p176 = pneg %p37
        %p177 = pneg %p34
        %p178 = pneg %p58
        %p179 = pneg %p55
        %p180 = pneg %p79
        %p181 = pneg %p76
        %p182 = pneg %p105
        %p183 = pneg %p102
        %p184 = scmp.lt.s32.totalorder %s16, 1
        %s185 = scalar_select %p184, %s16, 1
        %s186 = smul.addr %s185, 2
        %s187 = smul.addr %s186, 4
        %s188 = scalar_lea.vmem %s3, %s187
        %p189 = scmp.lt.s32.totalorder %s16, 1
        %s190 = scalar_select %p189, %s16, 1
        %s191 = smul.addr %s190, 2
        %s192 = smul.addr %s191, 4
        %s193 = scalar_lea.vmem %s0, %s192
        %p194 = scmp.lt.s32.totalorder %s16, 1
        %s195 = scalar_select %p194, %s16, 1
        %s196 = smul.addr %s195, 2
        %s197 = smul.addr %s196, 4
        %s198 = scalar_lea.vmem %s3, %s197
        %v200 = vld [vmem:[%s193] sm:$0xf]
        %v201 = vld [vmem:[%s193 + $0x4] sm:$0xf]
        %v202 = vld [vmem:[#allocation2] sm:$0xf]
        %v203 = vld [vmem:[#allocation2 + $0x4] sm:$0x7]
        %v204 = vld [vmem:[#allocation4] sm:$0x1]
        %v206 = vlaneseq
        %v207 = vshrl.u32 %v206, 7
        %v208 = vsub.s32 0, %v207
        %v209 = vrot.slane %v204, %v208
        %v213 = vunpack.c.l.b16 %v200
        %v214 = vunpack.c.l.b16 %v201
        %v215 = vpack.c.b16 %v214, %v213
        %v218 = vunpack.c.l.b16 %v202
        %v219 = vunpack.c.l.b16 %v203
        %v220 = vpack.c.b16 %v219, %v218
        %vm221 = vcmask 113664
        %v223 = vsel %vm221, %v215, 0
        %vm225 = vcmask 1046528
        %v227 = vsel %vm225, %v220, 0
        %229 = vmatprep.subr.bf16.mxu0 0
        %230 = vmatpush1.bf16.msra.mxu0 0
        %231 = vmatprep.subr.bf16.mxu0 0
        %232 = vmatpush1.bf16.msra.mxu0 0
        %233 = vmatprep.subr.bf16.mxu0 0
        %234 = vmatpush1.bf16.msra.mxu0 0
        %235 = vmatprep.subr.bf16.mxu0 0
        %236 = vmatpush1.bf16.msra.mxu0 0
        %237 = vmatprep.subr.bf16.mxu0 0
        %238 = vmatpush1.bf16.msra.mxu0 0
        %239 = vmatprep.subr.bf16.mxu0 0
        %240 = vmatpush1.bf16.msra.mxu0 0
        %241 = vmatprep.subr.bf16.mxu0 0
        %242 = vmatpush1.bf16.msra.mxu0 0
        %243 = vmatprep.subr.bf16.mxu0 0
        %244 = vmatpush1.bf16.msra.mxu0 %v227
        %245 = vmatprep.subr.bf16.mxu0 0
        %246 = vmatpush2.bf16.msra.mxu0 0
        %247 = vmatprep.subr.bf16.mxu0 0
        %248 = vmatpush2.bf16.msra.mxu0 0
        %249 = vmatprep.subr.bf16.mxu0 0
        %250 = vmatpush2.bf16.msra.mxu0 0
        %251 = vmatprep.subr.bf16.mxu0 0
        %252 = vmatpush2.bf16.msra.mxu0 0
        %253 = vmatprep.subr.bf16.mxu0 0
        %254 = vmatpush2.bf16.msra.mxu0 0
        %255 = vmatprep.subr.bf16.mxu0 0
        %256 = vmatpush2.bf16.msra.mxu0 0
        %257 = vmatprep.subr.bf16.mxu0 0
        %258 = vmatpush2.bf16.msra.mxu0 0
        %259 = vmatprep.subr.bf16.mxu0 0
        %260 = vmatpush2.bf16.msra.mxu0 0
        %261 = vmatprep.mubr.bf16.mxu0 0
        %262 = vmatmul.mubr.bf16.gmra.mxu0 %v223
        %v263 = vpop.f32.mrf.mxu0
        %v264 = vadd.f32 %v209, %v263
        %v265 = vpop.f32.mrf.mxu0
        %v266 = vpop.f32.mrf.mxu0
        %v267 = vadd.f32 %v209, %v266
        %v268 = vpop.f32.mrf.mxu0
        %269 = vdwg.mxu0
        %v270 = vadd.f32 %v264, %v267
        %v271 = vrot.slane %v270, 4
        %v272 = vadd.f32 %v270, %v271
        %v273 = vrot.slane %v272, 2
        %v274 = vadd.f32 %v272, %v273
        %v275 = vrot.slane %v274, 1
        %v276 = vadd.f32 %v274, %v275
        %v277 = vrcp.pop 16.0
        %v278 = vmul.f32 %v276, %v277
        %279 = vrot.lane.b32.xlu0 %v278, 64
        %v280 = vpop.permute.xlu0 %279
        %v281 = vadd.f32 %v278, %v280
        %v282 = vmul.f32 %v281, 0.5
        %v283 = vlaneseq
        %v284 = vshrl.u32 %v283, 7
        %v285 = vsub.s32 0, %v284
        %v286 = vrot.slane %v282, %v285
        %v287 = vsub.f32 %v264, %v286
        %v288 = vsub.f32 %v267, %v286
        %v289 = vmul.f32 %v287, %v287
        %v290 = vmul.f32 %v288, %v288
        %v291 = vadd.f32 %v289, %v290
        %v292 = vrot.slane %v291, 4
        %v293 = vadd.f32 %v291, %v292
        %v294 = vrot.slane %v293, 2
        %v295 = vadd.f32 %v293, %v294
        %v296 = vrot.slane %v295, 1
        %v297 = vadd.f32 %v295, %v296
        %v298 = vmul.f32 %v297, %v277
        %299 = vrot.lane.b32.xlu0 %v298, 64
        %v300 = vpop.permute.xlu0 %299
        %v301 = vadd.f32 %v298, %v300
        %v302 = vmul.f32 %v301, 0.5
        %v303 = vadd.f32 %v302, 1e-05
        %v304 = vrsqrt.pop %v303
        %v305 = vlaneseq
        %v306 = vshrl.u32 %v305, 7
        %v307 = vsub.s32 0, %v306
        %v308 = vrot.slane %v304, %v307
        %v309 = vmul.f32 %v287, %v308
        %v310 = vmul.f32 %v288, %v308
        %v311 = vmax.f32 %v309, 0.0
        %v312 = vmax.f32 %v310, 0.0
        %v313 = vpack.c.bf16 %v312, %v311
        %v315 = vunpack.c.l.b16 %v313
        %v316 = vunpack.c.h.b16 %v313
        %v317 = vpack.c.b16 %v315, %v315
        %v318 = vpack.c.b16 %v316, %v316
        %321 = vst [vmem:[%s198] sm:$0xf] %v317
        %322 = vst [vmem:[%s198 + $0x4] sm:$0xf] %v318
        %p323 = scmp.lt.s32.totalorder %s16, 1
        %s324 = scalar_select %p323, %s16, 1
        %s325 = smul.addr %s324, 2
        %s326 = smul.addr %s325, 4
        %s327 = scalar_lea.vmem %s3, %s326
        // Predicated region
        $region41: #{generator_forward.7} parent=31 // pred_check
          %p328 = pneg %p102
        $region42: #{generator_forward.7} parent=31 // pred_check_branch
          %330 = sbr.rel (%p328) target = $region44
        $region43: #{generator_forward.7} parent=31 // pred_region
          _
        $region44: #{generator_forward.7} parent=31 // pred_fallthru
          _
      $region32: #{generator_forward.7} parent=5 // pred_fallthru
        _
      %p331 = scmp.le.s32.totalorder 2, %s11
      // Predicated region
      $region45: #{generator_forward.7} parent=5 // pred_check
        %p332 = pneg %p331
      $region46: #{generator_forward.7} parent=5 // pred_check_branch
        %334 = sbr.rel (%p332) target = $region48
      $region47: #{generator_forward.7} parent=5 // pred_region
        %s335 = ssub.s32 %s11, 2
        // Predicated region
        $region49: #{generator_forward.7} parent=47 // pred_check
          %p336 = pneg %p108
        $region50: #{generator_forward.7} parent=47 // pred_check_branch
          %338 = sbr.rel (%p336) target = $region52
        $region51: #{generator_forward.7} parent=47 // pred_region
          %p339 = scmp.lt.s32.totalorder %s17, 1
          %s340 = scalar_select %p339, %s17, 1
          %s341 = smul.addr %s340, 2
          %s342 = smul.addr %s341, 4
          %s343 = scalar_lea.vmem %s3, %s342
        $region52: #{generator_forward.7} parent=47 // pred_fallthru
          _
      $region48: #{generator_forward.7} parent=5 // pred_fallthru
        _
    $region6: #{generator_forward.7} parent=1 // loop_footer
      %s15 = sadd.s32 1, %s11
    $region7: #{generator_forward.7} parent=1 // loop_footer_branch
      %10 = sbr.rel target = $region3
    $region8: #{generator_forward.7} parent=1 // loop_exit
      _
    %344 = vsyncpa [#allocation3], 1
    %s345 = scalar_lea.sflag [#allocation3], 1
    %346 = vsyncpa %s345, 1
    %347 = vsyncpa [#allocation5], 1

// kernel: generator_forward.9
$region0: #{generator_forward.9}
  #allocation0 [shape = 'u32[]', space=smem, size = 0x4, offset = 0x4, fixed_abs, tag = 'smem constant byte address 0x4 - core index']
  #allocation1 [shape = 'u32[144,128]{1,0:T(1,128)}', space=vmem, size = 0x12000, scoped, tag = 'internal scratch']
  %s0 = inlined_call_operand.vmem [shape: bf16[2,8,256], index: 0, kind: input, shape index: {}]
  %s1 = inlined_call_operand.hbm [shape: bf16[2,256,256], index: 1, kind: input, shape index: {}]
  %s2 = inlined_call_operand.hbm [shape: f32[1,256], index: 2, kind: input, shape index: {}]
  %s3 = inlined_call_operand.vmem [shape: bf16[2,8,256], index: 3, kind: output, shape index: {}]
  %s4 = sld [smem:[#allocation0]]
  $region53: #{generator_forward.9} parent=0
    _
  %s6 = ssub.s32 1, %s4
  %s7 = scalar_select 0, %s6, %s4
  $region1: #{generator_forward.9} parent=0
    #allocation2 [shape = 'u8[262144]{0}', space=vmem, size = 0x40000, scoped, tag = 'input window, operand 1, single buffered']
    #allocation3 [shape = 's32[2]{0}', space=sflag, size = 0x8, scoped, tag = 'scoped memory for generator_forward.9']
    #allocation4 [shape = 'u8[1024]{0}', space=vmem, size = 0x400, scoped, tag = 'input window, operand 2, single buffered']
    #allocation5 [shape = 's32[1]{0}', space=sflag, size = 0x4, scoped, tag = 'scoped memory for generator_forward.9']
    %8 = vsyncpa [#allocation3], 0
    %9 = vsyncpa [#allocation5], 0
    loop: start=0, step=1, limit=4
    $region2: #{generator_forward.9} parent=1 // loop_pre_header
      _
    $region3: #{generator_forward.9} parent=1 // loop_header
      %s11 = sphi 0, %s15
      %p12 = scmp.ge.s32.totalorder %s11, 4
      %s21 = sphi 0, %s23
      %s24 = sphi 0, %s21
      %s25 = sphi 0, %s24
      %s41 = sphi 0, %s25
      %s45 = sphi 0, %s45
      %s47 = sphi 0, %s45
      %s48 = sphi 0, %s47
      %s62 = sphi 0, %s48
      %s66 = sphi 0, %s66
      %s68 = sphi 0, %s66
      %s69 = sphi 0, %s68
      %s83 = sphi 0, %s69
      %s89 = sphi 0, %s91
      %s92 = sphi 0, %s89
      %s93 = sphi 0, %s92
      %s109 = sphi 0, %s93
    $region4: #{generator_forward.9} parent=1 // loop_header_branch
      %14 = sbr.rel (%p12) target = $region8
    $region5: #{generator_forward.9} parent=1 // loop_body
      %s16 = ssub.s32 %s11, 1
      %s17 = ssub.s32 %s11, 2
      %s18 = sadd.s32 %s11, 1
      %s19 = ssub.s32 %s11, %s18
      %p20 = scmp.eq.s32.totalorder %s19, 0
      %s22 = sadd.s32 %s21, 1
      %s23 = scalar_select %p20, %s21, %s22
      %p26 = pneg %p20
      %p27 = scmp.eq.s32.totalorder %s11, 1
      %p28 = por %p26, %p27
      %p29 = scmp.ne.s32.totalorder %s21, %s24
      %p30 = scmp.eq.s32.totalorder %s11, 0
      %p31 = por %p29, %p30
      %p32 = scmp.ne.s32.totalorder %s21, %s24
      %p33 = scmp.eq.s32.totalorder %s16, 1
      %p34 = por %p32, %p33
      %p35 = scmp.ne.s32.totalorder %s24, %s25
      %p36 = scmp.eq.s32.totalorder %s16, 0
      %p37 = por %p35, %p36
      %p38 = scmp.ne.s32.totalorder %s24, %s25
      %p39 = scmp.eq.s32.totalorder %s17, 1
      %p40 = por %p38, %p39
      %p42 = scmp.ne.s32.totalorder %s25, %s41
      %p43 = scmp.eq.s32.totalorder %s17, 0
      %p44 = por %p42, %p43
      %s46 = sadd.s32 %s45, 1
      %p49 = scmp.eq.s32.totalorder %s11, 1
      %p50 = scmp.ne.s32.totalorder %s45, %s47
      %p51 = scmp.eq.s32.totalorder %s11, 0
      %p52 = por %p50, %p51
      %p53 = scmp.ne.s32.totalorder %s45, %s47
      %p54 = scmp.eq.s32.totalorder %s16, 1
      %p55 = por %p53, %p54
      %p56 = scmp.ne.s32.totalorder %s47, %s48
      %p57 = scmp.eq.s32.totalorder %s16, 0
      %p58 = por %p56, %p57
      %p59 = scmp.ne.s32.totalorder %s47, %s48
      %p60 = scmp.eq.s32.totalorder %s17, 1
      %p61 = por %p59, %p60
      %p63 = scmp.ne.s32.totalorder %s48, %s62
      %p64 = scmp.eq.s32.totalorder %s17, 0
      %p65 = por %p63, %p64
      %s67 = sadd.s32 %s66, 1
      %p70 = scmp.eq.s32.totalorder %s11, 1
      %p71 = scmp.ne.s32.totalorder %s66, %s68
      %p72 = scmp.eq.s32.totalorder %s11, 0
      %p73 = por %p71, %p72
      %p74 = scmp.ne.s32.totalorder %s66, %s68
      %p75 = scmp.eq.s32.totalorder %s16, 1
      %p76 = por %p74, %p75
      %p77 = scmp.ne.s32.totalorder %s68, %s69
      %p78 = scmp.eq.s32.totalorder %s16, 0
      %p79 = por %p77, %p78
      %p80 = scmp.ne.s32.totalorder %s68, %s69
      %p81 = scmp.eq.s32.totalorder %s17, 1
      %p82 = por %p80, %p81
      %p84 = scmp.ne.s32.totalorder %s69, %s83
      %p85 = scmp.eq.s32.totalorder %s17, 0
      %p86 = por %p84, %p85
      %s87 = ssub.s32 %s11, %s18
      %p88 = scmp.eq.s32.totalorder %s87, 0
      %s90 = sadd.s32 %s89, 1
      %s91 = scalar_select %p88, %s89, %s90
      %p94 = pneg %p88
      %p95 = scmp.eq.s32.totalorder %s11, 1
      %p96 = por %p94, %p95
      %p97 = scmp.ne.s32.totalorder %s89, %s92
      %p98 = scmp.eq.s32.totalorder %s11, 0
      %p99 = por %p97, %p98
      %p100 = scmp.ne.s32.totalorder %s89, %s92
      %p101 = scmp.eq.s32.totalorder %s16, 1
      %p102 = por %p100, %p101
      %p103 = scmp.ne.s32.totalorder %s92, %s93
      %p104 = scmp.eq.s32.totalorder %s16, 0
      %p105 = por %p103, %p104
      %p106 = scmp.ne.s32.totalorder %s92, %s93
      %p107 = scmp.eq.s32.totalorder %s17, 1
      %p108 = por %p106, %p107
      %p110 = scmp.ne.s32.totalorder %s93, %s109
      %p111 = scmp.eq.s32.totalorder %s17, 0
      %p112 = por %p110, %p111
      %p113 = scmp.le.s32.totalorder 1, %s11
      %p114 = scmp.lt.s32.totalorder %s11, 3
      %p115 = pnand %p113, %p114
      %p116 = pneg %p115
      // Predicated region
      $region9: #{generator_forward.9} parent=5 // pred_check
        _
      $region10: #{generator_forward.9} parent=5 // pred_check_branch
        %118 = sbr.rel (%p115) target = $region12
      $region11: #{generator_forward.9} parent=5 // pred_region
        %s119 = ssub.s32 %s11, 1
        // Predicated region
        $region13: #{generator_forward.9} parent=11 // pred_check
          %p120 = pneg %p58
        $region14: #{generator_forward.9} parent=11 // pred_check_branch
          %122 = sbr.rel (%p120) target = $region16
        $region15: #{generator_forward.9} parent=11 // pred_region
          %s124 = ssub.s32 8192, 8192
          %125 = vsyncadd [#allocation3], %s124
          %s126 = sshll.u32 [#allocation2], 4
          %s127 = int_to_ptr.vmem [resolvable:$true] %s126
          %132 = dma.hbm_to_vmem [thread:$0]  %s1, 8192, %s127, [#allocation3], 128, 128, 8
        $region16: #{generator_forward.9} parent=11 // pred_fallthru
          _
        // Predicated region
        $region17: #{generator_forward.9} parent=11 // pred_check
          %p133 = pneg %p79
        $region18: #{generator_forward.9} parent=11 // pred_check_branch
          %135 = sbr.rel (%p133) target = $region20
        $region19: #{generator_forward.9} parent=11 // pred_region
          %s137 = ssub.s32 32, 32
          %138 = vsyncadd [#allocation5], %s137
          %s140 = sshll.u32 [#allocation4], 4
          %s141 = int_to_ptr.vmem [resolvable:$true] %s140
          %143 = dma.hbm_to_vmem [thread:$0]  %s2, 32, %s141, [#allocation5]
        $region20: #{generator_forward.9} parent=11 // pred_fallthru
          _
      $region12: #{generator_forward.9} parent=5 // pred_fallthru
        _
      %p144 = scmp.lt.s32.totalorder %s11, 2
      // Predicated region
      $region21: #{generator_forward.9} parent=5 // pred_check
        %p145 = pneg %p144
      $region22: #{generator_forward.9} parent=5 // pred_check_branch
        %147 = sbr.rel (%p145) target = $region24
      $region23: #{generator_forward.9} parent=5 // pred_region
        // Predicated region
        $region25: #{generator_forward.9} parent=23 // pred_check
          %p148 = pneg %p31
        $region26: #{generator_forward.9} parent=23 // pred_check_branch
          %150 = sbr.rel (%p148) target = $region28
        $region27: #{generator_forward.9} parent=23 // pred_region
          %p151 = scmp.lt.s32.totalorder %s11, 1
          %s152 = scalar_select %p151, %s11, 1
          %s153 = smul.addr %s152, 2
          %s154 = smul.addr %s153, 4
          %s155 = scalar_lea.vmem %s0, %s154
        $region28: #{generator_forward.9} parent=23 // pred_fallthru
          _
      $region24: #{generator_forward.9} parent=5 // pred_fallthru
        _
      %p156 = scmp.le.s32.totalorder 1, %s11
      %p157 = scmp.lt.s32.totalorder %s11, 3
      %p158 = pnand %p156, %p157
      %p159 = pneg %p158
      // Predicated region
      $region29: #{generator_forward.9} parent=5 // pred_check
        _
      $region30: #{generator_forward.9} parent=5 // pred_check_branch
        %161 = sbr.rel (%p158) target = $region32
      $region31: #{generator_forward.9} parent=5 // pred_region
        %s162 = ssub.s32 %s11, 1
        // Predicated region
        $region33: #{generator_forward.9} parent=31 // pred_check
          %p163 = pneg %p58
        $region34: #{generator_forward.9} parent=31 // pred_check_branch
          %165 = sbr.rel (%p163) target = $region36
        $region35: #{generator_forward.9} parent=31 // pred_region
          %166 = dma.done [#allocation3], 8192
        $region36: #{generator_forward.9} parent=31 // pred_fallthru
          _
        // Predicated region
        $region37: #{generator_forward.9} parent=31 // pred_check
          %p167 = pneg %p79
        $region38: #{generator_forward.9} parent=31 // pred_check_branch
          %169 = sbr.rel (%p167) target = $region40
        $region39: #{generator_forward.9} parent=31 // pred_region
          %170 = dma.done [#allocation5], 32
        $region40: #{generator_forward.9} parent=31 // pred_fallthru
          _
        %p171 = scmp.lt.s32.totalorder %s16, 1
        %s172 = scalar_select %p171, %s16, 1
        %s173 = smul.addr %s172, 2
        %s174 = smul.addr %s173, 4
        %s175 = scalar_lea.vmem %s0, %s174
        %p176 = pneg %p37
        %p177 = pneg %p34
        %p178 = pneg %p58
        %p179 = pneg %p55
        %p180 = pneg %p79
        %p181 = pneg %p76
        %p182 = pneg %p105
        %p183 = pneg %p102
        %p184 = scmp.lt.s32.totalorder %s16, 1
        %s185 = scalar_select %p184, %s16, 1
        %s186 = smul.addr %s185, 2
        %s187 = smul.addr %s186, 4
        %s188 = scalar_lea.vmem %s3, %s187
        %p189 = scmp.lt.s32.totalorder %s16, 1
        %s190 = scalar_select %p189, %s16, 1
        %s191 = smul.addr %s190, 2
        %s192 = smul.addr %s191, 4
        %s193 = scalar_lea.vmem %s0, %s192
        %p194 = scmp.lt.s32.totalorder %s16, 1
        %s195 = scalar_select %p194, %s16, 1
        %s196 = smul.addr %s195, 2
        %s197 = smul.addr %s196, 4
        %s198 = scalar_lea.vmem %s3, %s197
        %v199 = vld [vmem:[%s193] sm:$0xff]
        %v200 = vlaneseq
        %v201 = vshrl.u32 %v200, 7
        %v202 = vld [vmem:[#allocation2] sm:$0xff]
        %v203 = vld [vmem:[#allocation2 + $0x8] sm:$0xff]
        %v204 = vld [vmem:[#allocation2 + $0x10] sm:$0xff]
        %v205 = vld [vmem:[#allocation2 + $0x18] sm:$0xff]
        %v206 = vld [vmem:[#allocation2 + $0x20] sm:$0xff]
        %v207 = vld [vmem:[#allocation2 + $0x28] sm:$0xff]
        %v208 = vld [vmem:[#allocation2 + $0x30] sm:$0xff]
        %v209 = vld [vmem:[#allocation2 + $0x38] sm:$0xff]
        %v210 = vld [vmem:[#allocation2 + $0x40] sm:$0xff]
        %v211 = vld [vmem:[#allocation2 + $0x48] sm:$0xff]
        %v212 = vld [vmem:[#allocation2 + $0x50] sm:$0xff]
        %v213 = vld [vmem:[#allocation2 + $0x58] sm:$0xff]
        %v214 = vld [vmem:[#allocation2 + $0x60] sm:$0xff]
        %v215 = vld [vmem:[#allocation2 + $0x68] sm:$0xff]
        %v216 = vld [vmem:[#allocation2 + $0x70] sm:$0xff]
        %v217 = vld [vmem:[#allocation2 + $0x78] sm:$0xff]
        %v218 = vld [vmem:[#allocation2 + $0x80] sm:$0xff]
        %v219 = vld [vmem:[#allocation2 + $0x88] sm:$0xff]
        %v220 = vld [vmem:[#allocation2 + $0x90] sm:$0xff]
        %v221 = vld [vmem:[#allocation2 + $0x98] sm:$0xff]
        %v222 = vld [vmem:[#allocation2 + $0xa0] sm:$0xff]
        %v223 = vld [vmem:[#allocation2 + $0xa8] sm:$0xff]
        %v224 = vld [vmem:[#allocation2 + $0xb0] sm:$0xff]
        %v225 = vld [vmem:[#allocation2 + $0xb8] sm:$0xff]
        %v226 = vld [vmem:[#allocation2 + $0xc0] sm:$0xff]
        %v227 = vld [vmem:[#allocation2 + $0xc8] sm:$0xff]
        %v228 = vld [vmem:[#allocation2 + $0xd0] sm:$0xff]
        %v229 = vld [vmem:[#allocation2 + $0xd8] sm:$0xff]
        %v230 = vld [vmem:[#allocation2 + $0xe0] sm:$0xff]
        %v231 = vld [vmem:[#allocation2 + $0xe8] sm:$0xff]
        %v232 = vld [vmem:[#allocation2 + $0xf0] sm:$0xff]
        %v233 = vld [vmem:[#allocation2 + $0xf8] sm:$0xff]
        %s234 = scalar_lea.vmem [#allocation2], 256
        %v235 = vld [vmem:[%s234] sm:$0xff]
        %v236 = vld [vmem:[%s234 + $0x8] sm:$0xff]
        %v237 = vld [vmem:[%s234 + $0x10] sm:$0xff]
        %v238 = vld [vmem:[%s234 + $0x18] sm:$0xff]
        %v239 = vld [vmem:[%s234 + $0x20] sm:$0xff]
        %v240 = vld [vmem:[%s234 + $0x28] sm:$0xff]
        %v241 = vld [vmem:[%s234 + $0x30] sm:$0xff]
        %v242 = vld [vmem:[%s234 + $0x38] sm:$0xff]
        %v243 = vld [vmem:[%s234 + $0x40] sm:$0xff]
        %v244 = vld [vmem:[%s234 + $0x48] sm:$0xff]
        %v245 = vld [vmem:[%s234 + $0x50] sm:$0xff]
        %v246 = vld [vmem:[%s234 + $0x58] sm:$0xff]
        %v247 = vld [vmem:[%s234 + $0x60] sm:$0xff]
        %v248 = vld [vmem:[%s234 + $0x68] sm:$0xff]
        %v249 = vld [vmem:[%s234 + $0x70] sm:$0xff]
        %v250 = vld [vmem:[%s234 + $0x78] sm:$0xff]
        %v251 = vld [vmem:[%s234 + $0x80] sm:$0xff]
        %v252 = vld [vmem:[%s234 + $0x88] sm:$0xff]
        %v253 = vld [vmem:[%s234 + $0x90] sm:$0xff]
        %v254 = vld [vmem:[%s234 + $0x98] sm:$0xff]
        %v255 = vld [vmem:[%s234 + $0xa0] sm:$0xff]
        %v256 = vld [vmem:[%s234 + $0xa8] sm:$0xff]
        %v257 = vld [vmem:[%s234 + $0xb0] sm:$0xff]
        %v258 = vld [vmem:[%s234 + $0xb8] sm:$0xff]
        %v259 = vld [vmem:[%s234 + $0xc0] sm:$0xff]
        %v260 = vld [vmem:[%s234 + $0xc8] sm:$0xff]
        %v261 = vld [vmem:[%s234 + $0xd0] sm:$0xff]
        %v262 = vld [vmem:[%s234 + $0xd8] sm:$0xff]
        %v263 = vld [vmem:[%s234 + $0xe0] sm:$0xff]
        %v264 = vld [vmem:[%s234 + $0xe8] sm:$0xff]
        %v265 = vld [vmem:[%s234 + $0xf0] sm:$0xff]
        %v266 = vld [vmem:[%s234 + $0xf8] sm:$0xff]
        %v268 = vunpack.c.l.b16 %v199
        %v269 = vunpack.c.h.b16 %v199
        %v270 = vpack.c.b16 %v268, %v268
        %v271 = vpack.c.b16 %v269, %v269
        %v306 = vunpack.c.l.b16 %v235
        %v307 = vunpack.c.h.b16 %v235
        %v308 = vunpack.c.l.b16 %v236
        %v309 = vunpack.c.h.b16 %v236
        %v310 = vunpack.c.l.b16 %v237
        %v311 = vunpack.c.h.b16 %v237
        %v312 = vunpack.c.l.b16 %v238
        %v313 = vunpack.c.h.b16 %v238
        %v314 = vunpack.c.l.b16 %v239
        %v315 = vunpack.c.h.b16 %v239
        %v316 = vunpack.c.l.b16 %v240
        %v317 = vunpack.c.h.b16 %v240
        %v318 = vunpack.c.l.b16 %v241
        %v319 = vunpack.c.h.b16 %v241
        %v320 = vunpack.c.l.b16 %v242
        %v321 = vunpack.c.h.b16 %v242
        %v322 = vunpack.c.l.b16 %v243
        %v323 = vunpack.c.h.b16 %v243
        %v324 = vunpack.c.l.b16 %v244
        %v325 = vunpack.c.h.b16 %v244
        %v326 = vunpack.c.l.b16 %v245
        %v327 = vunpack.c.h.b16 %v245
        %v328 = vunpack.c.l.b16 %v246
        %v329 = vunpack.c.h.b16 %v246
        %v330 = vunpack.c.l.b16 %v247
        %v331 = vunpack.c.h.b16 %v247
        %v332 = vunpack.c.l.b16 %v248
        %v333 = vunpack.c.h.b16 %v248
        %v334 = vunpack.c.l.b16 %v249
        %v335 = vunpack.c.h.b16 %v249
        %v336 = vunpack.c.l.b16 %v250
        %v337 = vunpack.c.h.b16 %v250
        %v338 = vunpack.c.l.b16 %v251
        %v339 = vunpack.c.h.b16 %v251
        %v340 = vunpack.c.l.b16 %v252
        %v341 = vunpack.c.h.b16 %v252
        %v342 = vunpack.c.l.b16 %v253
        %v343 = vunpack.c.h.b16 %v253
        %v344 = vunpack.c.l.b16 %v254
        %v345 = vunpack.c.h.b16 %v254
        %v346 = vunpack.c.l.b16 %v255
        %v347 = vunpack.c.h.b16 %v255
        %v348 = vunpack.c.l.b16 %v256
        %v349 = vunpack.c.h.b16 %v256
        %v350 = vunpack.c.l.b16 %v257
        %v351 = vunpack.c.h.b16 %v257
        %v352 = vunpack.c.l.b16 %v258
        %v353 = vunpack.c.h.b16 %v258
        %v354 = vunpack.c.l.b16 %v259
        %v355 = vunpack.c.h.b16 %v259
        %v356 = vunpack.c.l.b16 %v260
        %v357 = vunpack.c.h.b16 %v260
        %v358 = vunpack.c.l.b16 %v261
        %v359 = vunpack.c.h.b16 %v261
        %v360 = vunpack.c.l.b16 %v262
        %v361 = vunpack.c.h.b16 %v262
        %v362 = vunpack.c.l.b16 %v263
        %v363 = vunpack.c.h.b16 %v263
        %v364 = vunpack.c.l.b16 %v264
        %v365 = vunpack.c.h.b16 %v264
        %v366 = vunpack.c.l.b16 %v265
        %v367 = vunpack.c.h.b16 %v265
        %v368 = vunpack.c.l.b16 %v266
        %v369 = vunpack.c.h.b16 %v266
        %v370 = vpack.c.b16 %v308, %v306
        %v371 = vpack.c.b16 %v309, %v307
        %v372 = vpack.c.b16 %v312, %v310
        %v373 = vpack.c.b16 %v313, %v311
        %v374 = vpack.c.b16 %v316, %v314
        %v375 = vpack.c.b16 %v317, %v315
        %v376 = vpack.c.b16 %v320, %v318
        %v377 = vpack.c.b16 %v321, %v319
        %v378 = vpack.c.b16 %v324, %v322
        %v379 = vpack.c.b16 %v325, %v323
        %v380 = vpack.c.b16 %v328, %v326
        %v381 = vpack.c.b16 %v329, %v327
        %v382 = vpack.c.b16 %v332, %v330
        %v383 = vpack.c.b16 %v333, %v331
        %v384 = vpack.c.b16 %v336, %v334
        %v385 = vpack.c.b16 %v337, %v335
        %v386 = vpack.c.b16 %v340, %v338
        %v387 = vpack.c.b16 %v341, %v339
        %v388 = vpack.c.b16 %v344, %v342
        %v389 = vpack.c.b16 %v345, %v343
        %v390 = vpack.c.b16 %v348, %v346
        %v391 = vpack.c.b16 %v349, %v347
        %v392 = vpack.c.b16 %v352, %v350
        %v393 = vpack.c.b16 %v353, %v351
        %v394 = vpack.c.b16 %v356, %v354
        %v395 = vpack.c.b16 %v357, %v355
        %v396 = vpack.c.b16 %v360, %v358
        %v397 = vpack.c.b16 %v361, %v359
        %v398 = vpack.c.b16 %v364, %v362
        %v399 = vpack.c.b16 %v365, %v363
        %v400 = vpack.c.b16 %v368, %v366
        %v401 = vpack.c.b16 %v369, %v367
        %434 = vmatprep.subr.bf16.mxu0 %v385
        %435 = vmatpush1.bf16.msra.mxu0 %v384
        %436 = vmatprep.subr.bf16.mxu0 %v383
        %437 = vmatpush1.bf16.msra.mxu0 %v382
        %438 = vmatprep.subr.bf16.mxu0 %v381
        %439 = vmatpush1.bf16.msra.mxu0 %v380
        %440 = vmatprep.subr.bf16.mxu0 %v379
        %441 = vmatpush1.bf16.msra.mxu0 %v378
        %442 = vmatprep.subr.bf16.mxu0 %v377
        %443 = vmatpush1.bf16.msra.mxu0 %v376
        %444 = vmatprep.subr.bf16.mxu0 %v375
        %445 = vmatpush1.bf16.msra.mxu0 %v374
        %446 = vmatprep.subr.bf16.mxu0 %v373
        %447 = vmatpush1.bf16.msra.mxu0 %v372
        %448 = vmatprep.subr.bf16.mxu0 %v371
        %449 = vmatpush1.bf16.msra.mxu0 %v370
        %450 = vmatprep.subr.bf16.mxu0 %v401
        %451 = vmatpush2.bf16.msra.mxu0 %v400
        %452 = vmatprep.subr.bf16.mxu0 %v399
        %453 = vmatpush2.bf16.msra.mxu0 %v398
        %454 = vmatprep.subr.bf16.mxu0 %v397
        %455 = vmatpush2.bf16.msra.mxu0 %v396
        %456 = vmatprep.subr.bf16.mxu0 %v395
        %457 = vmatpush2.bf16.msra.mxu0 %v394
        %458 = vmatprep.subr.bf16.mxu0 %v393
        %459 = vmatpush2.bf16.msra.mxu0 %v392
        %460 = vmatprep.subr.bf16.mxu0 %v391
        %461 = vmatpush2.bf16.msra.mxu0 %v390
        %462 = vmatprep.subr.bf16.mxu0 %v389
        %463 = vmatpush2.bf16.msra.mxu0 %v388
        %464 = vmatprep.subr.bf16.mxu0 %v387
        %465 = vmatpush2.bf16.msra.mxu0 %v386
        %466 = vmatprep.mubr.bf16.mxu0 %v271
        %467 = vmatmul.mubr.bf16.gmra.mxu0 %v270
        %v468 = vpop.f32.mrf.mxu0
        %v469 = vadd.f32 0.0, %v468
        %v470 = vpop.f32.mrf.mxu0
        %v471 = vadd.f32 0.0, %v470
        %v472 = vpop.f32.mrf.mxu0
        %v473 = vpop.f32.mrf.mxu0
        %474 = vdwg.mxu0
        %vm475 = vcmp.lt.s32.totalorder %v201, 1
        %v476 = vrot.slane %v469, 7
        %v477 = vrot.slane %v471, 7
        %v478 = vsel %vm475, 0.0, %v476
        %v479 = vsel %vm475, 0.0, %v477
        %v512 = vunpack.c.l.b16 %v202
        %v513 = vunpack.c.h.b16 %v202
        %v514 = vunpack.c.l.b16 %v203
        %v515 = vunpack.c.h.b16 %v203
        %v516 = vunpack.c.l.b16 %v204
        %v517 = vunpack.c.h.b16 %v204
        %v518 = vunpack.c.l.b16 %v205
        %v519 = vunpack.c.h.b16 %v205
        %v520 = vunpack.c.l.b16 %v206
        %v521 = vunpack.c.h.b16 %v206
        %v522 = vunpack.c.l.b16 %v207
        %v523 = vunpack.c.h.b16 %v207
        %v524 = vunpack.c.l.b16 %v208
        %v525 = vunpack.c.h.b16 %v208
        %v526 = vunpack.c.l.b16 %v209
        %v527 = vunpack.c.h.b16 %v209
        %v528 = vunpack.c.l.b16 %v210
        %v529 = vunpack.c.h.b16 %v210
        %v530 = vunpack.c.l.b16 %v211
        %v531 = vunpack.c.h.b16 %v211
        %v532 = vunpack.c.l.b16 %v212
        %v533 = vunpack.c.h.b16 %v212
        %v534 = vunpack.c.l.b16 %v213
        %v535 = vunpack.c.h.b16 %v213
        %v536 = vunpack.c.l.b16 %v214
        %v537 = vunpack.c.h.b16 %v214
        %v538 = vunpack.c.l.b16 %v215
        %v539 = vunpack.c.h.b16 %v215
        %v540 = vunpack.c.l.b16 %v216
        %v541 = vunpack.c.h.b16 %v216
        %v542 = vunpack.c.l.b16 %v217
        %v543 = vunpack.c.h.b16 %v217
        %v544 = vunpack.c.l.b16 %v218
        %v545 = vunpack.c.h.b16 %v218
        %v546 = vunpack.c.l.b16 %v219
        %v547 = vunpack.c.h.b16 %v219
        %v548 = vunpack.c.l.b16 %v220
        %v549 = vunpack.c.h.b16 %v220
        %v550 = vunpack.c.l.b16 %v221
        %v551 = vunpack.c.h.b16 %v221
        %v552 = vunpack.c.l.b16 %v222
        %v553 = vunpack.c.h.b16 %v222
        %v554 = vunpack.c.l.b16 %v223
        %v555 = vunpack.c.h.b16 %v223
        %v556 = vunpack.c.l.b16 %v224
        %v557 = vunpack.c.h.b16 %v224
        %v558 = vunpack.c.l.b16 %v225
        %v559 = vunpack.c.h.b16 %v225
        %v560 = vunpack.c.l.b16 %v226
        %v561 = vunpack.c.h.b16 %v226
        %v562 = vunpack.c.l.b16 %v227
        %v563 = vunpack.c.h.b16 %v227
        %v564 = vunpack.c.l.b16 %v228
        %v565 = vunpack.c.h.b16 %v228
        %v566 = vunpack.c.l.b16 %v229
        %v567 = vunpack.c.h.b16 %v229
        %v568 = vunpack.c.l.b16 %v230
        %v569 = vunpack.c.h.b16 %v230
        %v570 = vunpack.c.l.b16 %v231
        %v571 = vunpack.c.h.b16 %v231
        %v572 = vunpack.c.l.b16 %v232
        %v573 = vunpack.c.h.b16 %v232
        %v574 = vunpack.c.l.b16 %v233
        %v575 = vunpack.c.h.b16 %v233
        %v576 = vpack.c.b16 %v514, %v512
        %v577 = vpack.c.b16 %v515, %v513
        %v578 = vpack.c.b16 %v518, %v516
        %v579 = vpack.c.b16 %v519, %v517
        %v580 = vpack.c.b16 %v522, %v520
        %v581 = vpack.c.b16 %v523, %v521
        %v582 = vpack.c.b16 %v526, %v524
        %v583 = vpack.c.b16 %v527, %v525
        %v584 = vpack.c.b16 %v530, %v528
        %v585 = vpack.c.b16 %v531, %v529
        %v586 = vpack.c.b16 %v534, %v532
        %v587 = vpack.c.b16 %v535, %v533
        %v588 = vpack.c.b16 %v538, %v536
        %v589 = vpack.c.b16 %v539, %v537
        %v590 = vpack.c.b16 %v542, %v540
        %v591 = vpack.c.b16 %v543, %v541
        %v592 = vpack.c.b16 %v546, %v544
        %v593 = vpack.c.b16 %v547, %v545
        %v594 = vpack.c.b16 %v550, %v548
        %v595 = vpack.c.b16 %v551, %v549
        %v596 = vpack.c.b16 %v554, %v552
        %v597 = vpack.c.b16 %v555, %v553
        %v598 = vpack.c.b16 %v558, %v556
        %v599 = vpack.c.b16 %v559, %v557
        %v600 = vpack.c.b16 %v562, %v560
        %v601 = vpack.c.b16 %v563, %v561
        %v602 = vpack.c.b16 %v566, %v564
        %v603 = vpack.c.b16 %v567, %v565
        %v604 = vpack.c.b16 %v570, %v568
        %v605 = vpack.c.b16 %v571, %v569
        %v606 = vpack.c.b16 %v574, %v572
        %v607 = vpack.c.b16 %v575, %v573
        %640 = vmatprep.subr.bf16.mxu0 %v591
        %641 = vmatpush1.bf16.msra.mxu0 %v590
        %642 = vmatprep.subr.bf16.mxu0 %v589
        %643 = vmatpush1.bf16.msra.mxu0 %v588
        %644 = vmatprep.subr.bf16.mxu0 %v587
        %645 = vmatpush1.bf16.msra.mxu0 %v586
        %646 = vmatprep.subr.bf16.mxu0 %v585
        %647 = vmatpush1.bf16.msra.mxu0 %v584
        %648 = vmatprep.subr.bf16.mxu0 %v583
        %649 = vmatpush1.bf16.msra.mxu0 %v582
        %650 = vmatprep.subr.bf16.mxu0 %v581
        %651 = vmatpush1.bf16.msra.mxu0 %v580
        %652 = vmatprep.subr.bf16.mxu0 %v579
        %653 = vmatpush1.bf16.msra.mxu0 %v578
        %654 = vmatprep.subr.bf16.mxu0 %v577
        %655 = vmatpush1.bf16.msra.mxu0 %v576
        %656 = vmatprep.subr.bf16.mxu0 %v607
        %657 = vmatpush2.bf16.msra.mxu0 %v606
        %658 = vmatprep.subr.bf16.mxu0 %v605
        %659 = vmatpush2.bf16.msra.mxu0 %v604
        %660 = vmatprep.subr.bf16.mxu0 %v603
        %661 = vmatpush2.bf16.msra.mxu0 %v602
        %662 = vmatprep.subr.bf16.mxu0 %v601
        %663 = vmatpush2.bf16.msra.mxu0 %v600
        %664 = vmatprep.subr.bf16.mxu0 %v599
        %665 = vmatpush2.bf16.msra.mxu0 %v598
        %666 = vmatprep.subr.bf16.mxu0 %v597
        %667 = vmatpush2.bf16.msra.mxu0 %v596
        %668 = vmatprep.subr.bf16.mxu0 %v595
        %669 = vmatpush2.bf16.msra.mxu0 %v594
        %670 = vmatprep.subr.bf16.mxu0 %v593
        %671 = vmatpush2.bf16.msra.mxu0 %v592
        %672 = vmatprep.mubr.bf16.mxu0 %v271
        %673 = vmatmul.mubr.bf16.gmra.mxu0 %v270
        %v674 = vpop.f32.mrf.mxu0
        %v675 = vadd.f32 %v478, %v674
        %v676 = vpop.f32.mrf.mxu0
        %v677 = vadd.f32 %v479, %v676
        %v678 = vpop.f32.mrf.mxu0
        %v679 = vpop.f32.mrf.mxu0
        %680 = vdwg.mxu0
        %v681 = vld [vmem:[#allocation4] sm:$0x3]
        %v683 = vlaneseq
        %v684 = vshrl.u32 %v683, 7
        %v685 = vsub.s32 0, %v684
        %v686 = vrot.slane %v681, %v685
        %v687 = vlaneseq
        %v688 = vshrl.u32 %v687, 7
        %v689 = vsub.s32 1, %v688
        %v690 = vrot.slane %v681, %v689
        %v693 = vadd.f32 %v675, %v686
        %v694 = vadd.f32 %v677, %v690
        %v695 = vrot.slane %v693, 4
        %v696 = vadd.f32 %v693, %v695
        %v697 = vrot.slane %v696, 2
        %v698 = vadd.f32 %v696, %v697
        %v699 = vrot.slane %v698, 1
        %v700 = vadd.f32 %v698, %v699
        %v701 = vrot.slane %v694, 4
        %v702 = vadd.f32 %v694, %v701
        %v703 = vrot.slane %v702, 2
        %v704 = vadd.f32 %v702, %v703
        %v705 = vrot.slane %v704, 1
        %v706 = vadd.f32 %v704, %v705
        %v707 = vrcp.pop 8.0
        %v708 = vmul.f32 %v700, %v707
        %v709 = vmul.f32 %v706, %v707
        %v710 = vsub.f32 %v693, %v708
        %v711 = vsub.f32 %v694, %v709
        %v712 = vmul.f32 %v710, %v710
        %v713 = vmul.f32 %v711, %v711
        %v714 = vrot.slane %v712, 4
        %v715 = vadd.f32 %v712, %v714
        %v716 = vrot.slane %v715, 2
        %v717 = vadd.f32 %v715, %v716
        %v718 = vrot.slane %v717, 1
        %v719 = vadd.f32 %v717, %v718
        %v720 = vrot.slane %v713, 4
        %v721 = vadd.f32 %v713, %v720
        %v722 = vrot.slane %v721, 2
        %v723 = vadd.f32 %v721, %v722
        %v724 = vrot.slane %v723, 1
        %v725 = vadd.f32 %v723, %v724
        %v726 = vmul.f32 %v719, %v707
        %v727 = vmul.f32 %v725, %v707
        %v728 = vadd.f32 %v726, 1e-05
        %v729 = vadd.f32 %v727, 1e-05
        %v730 = vrsqrt.pop %v728
        %v731 = vrsqrt.pop %v729
        %v732 = vmul.f32 %v710, %v730
        %v733 = vmul.f32 %v711, %v731
        %v734 = vmax.f32 %v732, 0.0
        %v735 = vmax.f32 %v733, 0.0
        %v736 = vpack.c.bf16 %v734, %v734
        %v737 = vpack.c.bf16 %v735, %v735
        %v740 = vunpack.c.l.b16 %v736
        %v741 = vunpack.c.l.b16 %v737
        %v742 = vpack.c.b16 %v741, %v740
        %744 = vst [vmem:[%s198] sm:$0xff] %v742
        %p745 = scmp.lt.s32.totalorder %s16, 1
        %s746 = scalar_select %p745, %s16, 1
        %s747 = smul.addr %s746, 2
        %s748 = smul.addr %s747, 4
        %s749 = scalar_lea.vmem %s3, %s748
        // Predicated region
        $region41: #{generator_forward.9} parent=31 // pred_check
          %p750 = pneg %p102
        $region42: #{generator_forward.9} parent=31 // pred_check_branch
          %752 = sbr.rel (%p750) target = $region44
        $region43: #{generator_forward.9} parent=31 // pred_region
          _
        $region44: #{generator_forward.9} parent=31 // pred_fallthru
          _
      $region32: #{generator_forward.9} parent=5 // pred_fallthru
        _
      %p753 = scmp.le.s32.totalorder 2, %s11
      // Predicated region
      $region45: #{generator_forward.9} parent=5 // pred_check
        %p754 = pneg %p753
      $region46: #{generator_forward.9} parent=5 // pred_check_branch
        %756 = sbr.rel (%p754) target = $region48
      $region47: #{generator_forward.9} parent=5 // pred_region
        %s757 = ssub.s32 %s11, 2
        // Predicated region
        $region49: #{generator_forward.9} parent=47 // pred_check
          %p758 = pneg %p108
        $region50: #{generator_forward.9} parent=47 // pred_check_branch
          %760 = sbr.rel (%p758) target = $region52
        $region51: #{generator_forward.9} parent=47 // pred_region
          %p761 = scmp.lt.s32.totalorder %s17, 1
          %s762 = scalar_select %p761, %s17, 1
          %s763 = smul.addr %s762, 2
          %s764 = smul.addr %s763, 4
          %s765 = scalar_lea.vmem %s3, %s764
        $region52: #{generator_forward.9} parent=47 // pred_fallthru
          _
      $region48: #{generator_forward.9} parent=5 // pred_fallthru
        _
    $region6: #{generator_forward.9} parent=1 // loop_footer
      %s15 = sadd.s32 1, %s11
    $region7: #{generator_forward.9} parent=1 // loop_footer_branch
      %10 = sbr.rel target = $region3
    $region8: #{generator_forward.9} parent=1 // loop_exit
      _
    %766 = vsyncpa [#allocation3], 1
    %s767 = scalar_lea.sflag [#allocation3], 1
    %768 = vsyncpa %s767, 1
    %769 = vsyncpa [#allocation5], 1

// kernel: generator_forward.10
$region0: #{generator_forward.10}
  #allocation0 [shape = 'u32[]', space=smem, size = 0x4, offset = 0x4, fixed_abs, tag = 'smem constant byte address 0x4 - core index']
  #allocation1 [shape = 'u32[144,128]{1,0:T(1,128)}', space=vmem, size = 0x12000, scoped, tag = 'internal scratch']
  #allocation2 [shape = 'bf16[9,256]{1,0:T(8,128)(2,1)}', space=vmem, size = 0x2000, scoped, tag = 'scratch operand']
  #allocation3 [shape = 'bf16[9,256]{1,0:T(8,128)(2,1)}', space=vmem, size = 0x2000, scoped, tag = 'scratch operand']
  %s0 = inlined_call_operand.vmem [shape: bf16[2,8,256], index: 0, kind: input, shape index: {}]
  %s1 = inlined_call_operand.hbm [shape: bf16[18,256,256], index: 1, kind: input, shape index: {}]
  %s2 = inlined_call_operand.hbm [shape: f32[6,1,256], index: 2, kind: input, shape index: {}]
  %s3 = inlined_call_operand.vmem [shape: bf16[2,8,256], index: 3, kind: output, shape index: {}]
  %s4 = sld [smem:[#allocation0]]
  $region61: #{generator_forward.10} parent=0
    _
  %s6 = ssub.s32 1, %s4
  %s7 = scalar_select 0, %s6, %s4
  $region1: #{generator_forward.10} parent=0
    #allocation4 [shape = 'u8[1572864]{0}', space=vmem, size = 0x180000, scoped, tag = 'input window, operand 1']
    #allocation5 [shape = 's32[2]{0}', space=sflag, size = 0x8, scoped, tag = 'scoped memory for generator_forward.10']
    #allocation6 [shape = 'u8[4096]{0}', space=vmem, size = 0x1000, scoped, tag = 'input window, operand 2']
    #allocation7 [shape = 's32[2]{0}', space=sflag, size = 0x8, scoped, tag = 'scoped memory for generator_forward.10']
    %8 = vsyncpa [#allocation5], 0
    %s9 = scalar_lea.sflag [#allocation5], 1
    %10 = vsyncpa %s9, 0
    %11 = vsyncpa [#allocation7], 0
    %s12 = scalar_lea.sflag [#allocation7], 1
    %13 = vsyncpa %s12, 0
    loop: start=0, step=1, limit=8
    $region2: #{generator_forward.10} parent=1 // loop_pre_header
      _
    $region3: #{generator_forward.10} parent=1 // loop_header
      %s15 = sphi 0, %s19
      %p16 = scmp.ge.s32.totalorder %s15, 8
      %s22 = sphi 0, %s34
      %s23 = sphi 0, %s30
      %s24 = sphi 0, %s22
      %s25 = sphi 0, %s23
      %s26 = sphi 0, %s24
      %s27 = sphi 0, %s25
      %s37 = sphi 0, %s39
      %s40 = sphi 0, %s37
      %s41 = sphi 0, %s40
      %s57 = sphi 0, %s41
      %s63 = sphi 0, %s65
      %s66 = sphi 0, %s63
      %s67 = sphi 0, %s66
      %s83 = sphi 0, %s67
      %s89 = sphi 0, %s91
      %s92 = sphi 0, %s89
      %s93 = sphi 0, %s92
      %s109 = sphi 0, %s93
      %s115 = sphi 0, %s117
      %s118 = sphi 0, %s115
      %s119 = sphi 0, %s118
      %s135 = sphi 0, %s119
    $region4: #{generator_forward.10} parent=1 // loop_header_branch
      %18 = sbr.rel (%p16) target = $region8
    $region5: #{generator_forward.10} parent=1 // loop_body
      %s20 = ssub.s32 %s15, 1
      %s21 = ssub.s32 %s15, 2
      %s28 = sadd.s32 1, %s23
      %p29 = scmp.ge.s32.totalorder %s28, 3
      %s30 = scalar_select %p29, 0, %s28
      %s31 = sadd.s32 1, %s22
      %s32 = scalar_select %p29, %s31, %s22
      %p33 = scmp.ge.s32.totalorder %s32, 2
      %s34 = scalar_select %p33, 0, %s32
      %s35 = ssub.s32 %s22, %s34
      %p36 = scmp.eq.s32.totalorder %s35, 0
      %s38 = sadd.s32 %s37, 1
      %s39 = scalar_select %p36, %s37, %s38
      %p42 = pneg %p36
      %p43 = scmp.eq.s32.totalorder %s15, 5
      %p44 = por %p42, %p43
      %p45 = scmp.ne.s32.totalorder %s37, %s40
      %p46 = scmp.eq.s32.totalorder %s15, 0
      %p47 = por %p45, %p46
      %p48 = scmp.ne.s32.totalorder %s37, %s40
      %p49 = scmp.eq.s32.totalorder %s20, 5
      %p50 = por %p48, %p49
      %p51 = scmp.ne.s32.totalorder %s40, %s41
      %p52 = scmp.eq.s32.totalorder %s20, 0
      %p53 = por %p51, %p52
      %p54 = scmp.ne.s32.totalorder %s40, %s41
      %p55 = scmp.eq.s32.totalorder %s21, 5
      %p56 = por %p54, %p55
      %p58 = scmp.ne.s32.totalorder %s41, %s57
      %p59 = scmp.eq.s32.totalorder %s21, 0
      %p60 = por %p58, %p59
      %s61 = ssub.s32 %s23, %s30
      %p62 = scmp.eq.s32.totalorder %s61, 0
      %s64 = sadd.s32 %s63, 1
      %s65 = scalar_select %p62, %s63, %s64
      %p68 = pneg %p62
      %p69 = scmp.eq.s32.totalorder %s15, 5
      %p70 = por %p68, %p69
      %p71 = scmp.ne.s32.totalorder %s63, %s66
      %p72 = scmp.eq.s32.totalorder %s15, 0
      %p73 = por %p71, %p72
      %p74 = scmp.ne.s32.totalorder %s63, %s66
      %p75 = scmp.eq.s32.totalorder %s20, 5
      %p76 = por %p74, %p75
      %p77 = scmp.ne.s32.totalorder %s66, %s67
      %p78 = scmp.eq.s32.totalorder %s20, 0
      %p79 = por %p77, %p78
      %p80 = scmp.ne.s32.totalorder %s66, %s67
      %p81 = scmp.eq.s32.totalorder %s21, 5
      %p82 = por %p80, %p81
      %p84 = scmp.ne.s32.totalorder %s67, %s83
      %p85 = scmp.eq.s32.totalorder %s21, 0
      %p86 = por %p84, %p85
      %s87 = ssub.s32 %s23, %s30
      %p88 = scmp.eq.s32.totalorder %s87, 0
      %s90 = sadd.s32 %s89, 1
      %s91 = scalar_select %p88, %s89, %s90
      %p94 = pneg %p88
      %p95 = scmp.eq.s32.totalorder %s15, 5
      %p96 = por %p94, %p95
      %p97 = scmp.ne.s32.totalorder %s89, %s92
      %p98 = scmp.eq.s32.totalorder %s15, 0
      %p99 = por %p97, %p98
      %p100 = scmp.ne.s32.totalorder %s89, %s92
      %p101 = scmp.eq.s32.totalorder %s20, 5
      %p102 = por %p100, %p101
      %p103 = scmp.ne.s32.totalorder %s92, %s93
      %p104 = scmp.eq.s32.totalorder %s20, 0
      %p105 = por %p103, %p104
      %p106 = scmp.ne.s32.totalorder %s92, %s93
      %p107 = scmp.eq.s32.totalorder %s21, 5
      %p108 = por %p106, %p107
      %p110 = scmp.ne.s32.totalorder %s93, %s109
      %p111 = scmp.eq.s32.totalorder %s21, 0
      %p112 = por %p110, %p111
      %s113 = ssub.s32 %s22, %s34
      %p114 = scmp.eq.s32.totalorder %s113, 0
      %s116 = sadd.s32 %s115, 1
      %s117 = scalar_select %p114, %s115, %s116
      %p120 = pneg %p114
      %p121 = scmp.eq.s32.totalorder %s15, 5
      %p122 = por %p120, %p121
      %p123 = scmp.ne.s32.totalorder %s115, %s118
      %p124 = scmp.eq.s32.totalorder %s15, 0
      %p125 = por %p123, %p124
      %p126 = scmp.ne.s32.totalorder %s115, %s118
      %p127 = scmp.eq.s32.totalorder %s20, 5
      %p128 = por %p126, %p127
      %p129 = scmp.ne.s32.totalorder %s118, %s119
      %p130 = scmp.eq.s32.totalorder %s20, 0
      %p131 = por %p129, %p130
      %p132 = scmp.ne.s32.totalorder %s118, %s119
      %p133 = scmp.eq.s32.totalorder %s21, 5
      %p134 = por %p132, %p133
      %p136 = scmp.ne.s32.totalorder %s119, %s135
      %p137 = scmp.eq.s32.totalorder %s21, 0
      %p138 = por %p136, %p137
      %p139 = scmp.le.s32.totalorder 1, %s15
      %p140 = scmp.lt.s32.totalorder %s15, 7
      %p141 = pnand %p139, %p140
      %p142 = pneg %p141
      // Predicated region
      $region9: #{generator_forward.10} parent=5 // pred_check
        _
      $region10: #{generator_forward.10} parent=5 // pred_check_branch
        %144 = sbr.rel (%p141) target = $region12
      $region11: #{generator_forward.10} parent=5 // pred_region
        %s145 = ssub.s32 %s15, 1
      $region12: #{generator_forward.10} parent=5 // pred_fallthru
        _
      %p146 = scmp.lt.s32.totalorder %s15, 6
      // Predicated region
      $region13: #{generator_forward.10} parent=5 // pred_check
        %p147 = pneg %p146
      $region14: #{generator_forward.10} parent=5 // pred_check_branch
        %149 = sbr.rel (%p147) target = $region16
      $region15: #{generator_forward.10} parent=5 // pred_region
        // Predicated region
        $region17: #{generator_forward.10} parent=15 // pred_check
          %p150 = pneg %p47
        $region18: #{generator_forward.10} parent=15 // pred_check_branch
          %152 = sbr.rel (%p150) target = $region20
        $region19: #{generator_forward.10} parent=15 // pred_region
          %p153 = scmp.lt.s32.totalorder %s22, 1
          %s154 = scalar_select %p153, %s22, 1
          %s155 = smul.addr %s154, 2
          %s156 = smul.addr %s155, 4
          %s157 = scalar_lea.vmem %s0, %s156
        $region20: #{generator_forward.10} parent=15 // pred_fallthru
          _
        // Predicated region
        $region21: #{generator_forward.10} parent=15 // pred_check
          %p158 = pneg %p73
        $region22: #{generator_forward.10} parent=15 // pred_check_branch
          %160 = sbr.rel (%p158) target = $region24
        $region23: #{generator_forward.10} parent=15 // pred_region
          %s161 = sand.u32 %s63, 1
          %s162 = scalar_lea.sflag [#allocation5], %s161
          %s163 = sand.u32 %s63, 1
          %s164 = smul.addr %s163, 1536
          %s165 = scalar_lea.vmem [#allocation4], %s164
          %s166 = smul.u32 6, %s23
          %s168 = ssub.s32 24576, 24576
          %169 = vsyncadd %s162, %s168
          %s170 = smul.addr %s166, 64
          %s171 = smul.addr %s170, 64
          %s172 = scalar_lea.hbm %s1, %s171
          %s173 = sshll.u32 %s165, 4
          %s174 = int_to_ptr.vmem [resolvable:$true] %s173
          %179 = dma.hbm_to_vmem [thread:$0]  %s172, 24576, %s174, %s162, 128, 128, 8
        $region24: #{generator_forward.10} parent=15 // pred_fallthru
          _
        // Predicated region
        $region25: #{generator_forward.10} parent=15 // pred_check
          %p180 = pneg %p99
        $region26: #{generator_forward.10} parent=15 // pred_check_branch
          %182 = sbr.rel (%p180) target = $region28
        $region27: #{generator_forward.10} parent=15 // pred_region
          %s183 = sand.u32 %s89, 1
          %s184 = scalar_lea.sflag [#allocation7], %s183
          %s185 = sand.u32 %s89, 1
          %s186 = smul.addr %s185, 4
          %s187 = scalar_lea.vmem [#allocation6], %s186
          %s188 = smul.u32 2, %s23
          %s190 = ssub.s32 64, 64
          %191 = vsyncadd %s184, %s190
          %s192 = smul.addr %s188, 2
          %s193 = smul.addr %s192, 16
          %s194 = scalar_lea.hbm %s2, %s193
          %s195 = sshll.u32 %s187, 4
          %s196 = int_to_ptr.vmem [resolvable:$true] %s195
          %201 = dma.hbm_to_vmem [thread:$0]  %s194, 64, %s196, %s184, 32, 32, 2
        $region28: #{generator_forward.10} parent=15 // pred_fallthru
          _
      $region16: #{generator_forward.10} parent=5 // pred_fallthru
        _
      %p202 = scmp.le.s32.totalorder 1, %s15
      %p203 = scmp.lt.s32.totalorder %s15, 7
      %p204 = pnand %p202, %p203
      %p205 = pneg %p204
      // Predicated region
      $region29: #{generator_forward.10} parent=5 // pred_check
        _
      $region30: #{generator_forward.10} parent=5 // pred_check_branch
        %207 = sbr.rel (%p204) target = $region32
      $region31: #{generator_forward.10} parent=5 // pred_region
        %s208 = ssub.s32 %s15, 1
        %s209 = sand.u32 %s66, 1
        %s210 = scalar_lea.sflag [#allocation5], %s209
        %s211 = sand.u32 %s66, 1
        %s212 = smul.addr %s211, 1536
        %s213 = scalar_lea.vmem [#allocation4], %s212
        // Predicated region
        $region33: #{generator_forward.10} parent=31 // pred_check
          %p214 = pneg %p79
        $region34: #{generator_forward.10} parent=31 // pred_check_branch
          %216 = sbr.rel (%p214) target = $region36
        $region35: #{generator_forward.10} parent=31 // pred_region
          %217 = dma.done %s210, 24576
        $region36: #{generator_forward.10} parent=31 // pred_fallthru
          _
        %s218 = sand.u32 %s92, 1
        %s219 = scalar_lea.sflag [#allocation7], %s218
        %s220 = sand.u32 %s92, 1
        %s221 = smul.addr %s220, 4
        %s222 = scalar_lea.vmem [#allocation6], %s221
        // Predicated region
        $region37: #{generator_forward.10} parent=31 // pred_check
          %p223 = pneg %p105
        $region38: #{generator_forward.10} parent=31 // pred_check_branch
          %225 = sbr.rel (%p223) target = $region40
        $region39: #{generator_forward.10} parent=31 // pred_region
          %226 = dma.done %s219, 64
        $region40: #{generator_forward.10} parent=31 // pred_fallthru
          _
        %p227 = scmp.lt.s32.totalorder %s24, 1
        %s228 = scalar_select %p227, %s24, 1
        %s229 = smul.addr %s228, 2
        %s230 = smul.addr %s229, 4
        %s231 = scalar_lea.vmem %s0, %s230
        %p232 = pneg %p53
        %p233 = pneg %p50
        %s234 = sand.u32 %s66, 1
        %s235 = scalar_lea.sflag [#allocation5], %s234
        %s236 = sand.u32 %s66, 1
        %s237 = smul.addr %s236, 1536
        %s238 = scalar_lea.vmem [#allocation4], %s237
        %p239 = pneg %p79
        %p240 = pneg %p76
        %s241 = sand.u32 %s92, 1
        %s242 = scalar_lea.sflag [#allocation7], %s241
        %s243 = sand.u32 %s92, 1
        %s244 = smul.addr %s243, 4
        %s245 = scalar_lea.vmem [#allocation6], %s244
        %p246 = pneg %p105
        %p247 = pneg %p102
        %p248 = pneg %p131
        %p249 = pneg %p128
        %p250 = scmp.lt.s32.totalorder %s24, 1
        %s251 = scalar_select %p250, %s24, 1
        %s252 = smul.addr %s251, 2
        %s253 = smul.addr %s252, 4
        %s254 = scalar_lea.vmem %s3, %s253
        %p255 = scmp.lt.s32.totalorder %s24, 1
        %s256 = scalar_select %p255, %s24, 1
        %s257 = smul.addr %s256, 2
        %s258 = smul.addr %s257, 4
        %s259 = scalar_lea.vmem %s0, %s258
        %s260 = smul.u32 6, %s25
        %s261 = smul.u32 2, %s25
        %p262 = scmp.lt.s32.totalorder %s24, 1
        %s263 = scalar_select %p262, %s24, 1
        %s264 = smul.addr %s263, 2
        %s265 = smul.addr %s264, 4
        %s266 = scalar_lea.vmem %s3, %s265
        %p268 = scmp.eq.s32.totalorder %s25, 0
        // Predicated region
        $region41: #{generator_forward.10} parent=31 // pred_check
          %p269 = pneg %p268
        $region42: #{generator_forward.10} parent=31 // pred_check_branch
          %271 = sbr.rel (%p269) target = $region44
        $region43: #{generator_forward.10} parent=31 // pred_region
          %vm272 = vcmask 1040384
          %vm273 = vsmask.f32 256
          %vm274 = vmand %vm272, %vm273
          %vm275 = vcmask 1044484
          %vm276 = vsmask.f32 4352
          %vm277 = vmand %vm275, %vm276
          %vm278 = vmor %vm277, %vm274
          %v279 = vld [vmem:[#allocation2 + $0x8] sm:$0x11]
          %v280 = vsel %vm278, 0, %v279
          %281 = vst [vmem:[#allocation2 + $0x8] sm:$0x11] %v280
          %v282 = vld [vmem:[#allocation3 + $0x8] sm:$0x11]
          %v283 = vsel %vm278, 0, %v282
          %284 = vst [vmem:[#allocation3 + $0x8] sm:$0x11] %v283
          %v285 = vld [vmem:[%s259] sm:$0xff]
          %286 = vst [vmem:[#allocation2] sm:$0xff] %v285
        $region44: #{generator_forward.10} parent=31 // pred_fallthru
          _
        %v287 = vlaneseq
        %v288 = vshrl.u32 %v287, 7
        %v289 = vld [vmem:[%s213] sm:$0xff]
        %v290 = vld [vmem:[%s213 + $0x8] sm:$0xff]
        %v291 = vld [vmem:[%s213 + $0x10] sm:$0xff]
        %v292 = vld [vmem:[%s213 + $0x18] sm:$0xff]
        %v293 = vld [vmem:[%s213 + $0x20] sm:$0xff]
        %v294 = vld [vmem:[%s213 + $0x28] sm:$0xff]
        %v295 = vld [vmem:[%s213 + $0x30] sm:$0xff]
        %v296 = vld [vmem:[%s213 + $0x38] sm:$0xff]
        %v297 = vld [vmem:[%s213 + $0x40] sm:$0xff]
        %v298 = vld [vmem:[%s213 + $0x48] sm:$0xff]
        %v299 = vld [vmem:[%s213 + $0x50] sm:$0xff]
        %v300 = vld [vmem:[%s213 + $0x58] sm:$0xff]
        %v301 = vld [vmem:[%s213 + $0x60] sm:$0xff]
        %v302 = vld [vmem:[%s213 + $0x68] sm:$0xff]
        %v303 = vld [vmem:[%s213 + $0x70] sm:$0xff]
        %v304 = vld [vmem:[%s213 + $0x78] sm:$0xff]
        %v305 = vld [vmem:[%s213 + $0x80] sm:$0xff]
        %v306 = vld [vmem:[%s213 + $0x88] sm:$0xff]
        %v307 = vld [vmem:[%s213 + $0x90] sm:$0xff]
        %v308 = vld [vmem:[%s213 + $0x98] sm:$0xff]
        %v309 = vld [vmem:[%s213 + $0xa0] sm:$0xff]
        %v310 = vld [vmem:[%s213 + $0xa8] sm:$0xff]
        %v311 = vld [vmem:[%s213 + $0xb0] sm:$0xff]
        %v312 = vld [vmem:[%s213 + $0xb8] sm:$0xff]
        %v313 = vld [vmem:[%s213 + $0xc0] sm:$0xff]
        %v314 = vld [vmem:[%s213 + $0xc8] sm:$0xff]
        %v315 = vld [vmem:[%s213 + $0xd0] sm:$0xff]
        %v316 = vld [vmem:[%s213 + $0xd8] sm:$0xff]
        %v317 = vld [vmem:[%s213 + $0xe0] sm:$0xff]
        %v318 = vld [vmem:[%s213 + $0xe8] sm:$0xff]
        %v319 = vld [vmem:[%s213 + $0xf0] sm:$0xff]
        %v320 = vld [vmem:[%s213 + $0xf8] sm:$0xff]
        %s321 = scalar_lea.vmem %s213, 256 [#allocation4]
        %v322 = vld [vmem:[%s321] sm:$0xff]
        %v323 = vld [vmem:[%s321 + $0x8] sm:$0xff]
        %v324 = vld [vmem:[%s321 + $0x10] sm:$0xff]
        %v325 = vld [vmem:[%s321 + $0x18] sm:$0xff]
        %v326 = vld [vmem:[%s321 + $0x20] sm:$0xff]
        %v327 = vld [vmem:[%s321 + $0x28] sm:$0xff]
        %v328 = vld [vmem:[%s321 + $0x30] sm:$0xff]
        %v329 = vld [vmem:[%s321 + $0x38] sm:$0xff]
        %v330 = vld [vmem:[%s321 + $0x40] sm:$0xff]
        %v331 = vld [vmem:[%s321 + $0x48] sm:$0xff]
        %v332 = vld [vmem:[%s321 + $0x50] sm:$0xff]
        %v333 = vld [vmem:[%s321 + $0x58] sm:$0xff]
        %v334 = vld [vmem:[%s321 + $0x60] sm:$0xff]
        %v335 = vld [vmem:[%s321 + $0x68] sm:$0xff]
        %v336 = vld [vmem:[%s321 + $0x70] sm:$0xff]
        %v337 = vld [vmem:[%s321 + $0x78] sm:$0xff]
        %v338 = vld [vmem:[%s321 + $0x80] sm:$0xff]
        %v339 = vld [vmem:[%s321 + $0x88] sm:$0xff]
        %v340 = vld [vmem:[%s321 + $0x90] sm:$0xff]
        %v341 = vld [vmem:[%s321 + $0x98] sm:$0xff]
        %v342 = vld [vmem:[%s321 + $0xa0] sm:$0xff]
        %v343 = vld [vmem:[%s321 + $0xa8] sm:$0xff]
        %v344 = vld [vmem:[%s321 + $0xb0] sm:$0xff]
        %v345 = vld [vmem:[%s321 + $0xb8] sm:$0xff]
        %v346 = vld [vmem:[%s321 + $0xc0] sm:$0xff]
        %v347 = vld [vmem:[%s321 + $0xc8] sm:$0xff]
        %v348 = vld [vmem:[%s321 + $0xd0] sm:$0xff]
        %v349 = vld [vmem:[%s321 + $0xd8] sm:$0xff]
        %v350 = vld [vmem:[%s321 + $0xe0] sm:$0xff]
        %v351 = vld [vmem:[%s321 + $0xe8] sm:$0xff]
        %v352 = vld [vmem:[%s321 + $0xf0] sm:$0xff]
        %v353 = vld [vmem:[%s321 + $0xf8] sm:$0xff]
        %s354 = scalar_lea.vmem %s213, 512 [#allocation4]
        %v355 = vld [vmem:[%s354] sm:$0xff]
        %v356 = vld [vmem:[%s354 + $0x8] sm:$0xff]
        %v357 = vld [vmem:[%s354 + $0x10] sm:$0xff]
        %v358 = vld [vmem:[%s354 + $0x18] sm:$0xff]
        %v359 = vld [vmem:[%s354 + $0x20] sm:$0xff]
        %v360 = vld [vmem:[%s354 + $0x28] sm:$0xff]
        %v361 = vld [vmem:[%s354 + $0x30] sm:$0xff]
        %v362 = vld [vmem:[%s354 + $0x38] sm:$0xff]
        %v363 = vld [vmem:[%s354 + $0x40] sm:$0xff]
        %v364 = vld [vmem:[%s354 + $0x48] sm:$0xff]
        %v365 = vld [vmem:[%s354 + $0x50] sm:$0xff]
        %v366 = vld [vmem:[%s354 + $0x58] sm:$0xff]
        %v367 = vld [vmem:[%s354 + $0x60] sm:$0xff]
        %v368 = vld [vmem:[%s354 + $0x68] sm:$0xff]
        %v369 = vld [vmem:[%s354 + $0x70] sm:$0xff]
        %v370 = vld [vmem:[%s354 + $0x78] sm:$0xff]
        %v371 = vld [vmem:[%s354 + $0x80] sm:$0xff]
        %v372 = vld [vmem:[%s354 + $0x88] sm:$0xff]
        %v373 = vld [vmem:[%s354 + $0x90] sm:$0xff]
        %v374 = vld [vmem:[%s354 + $0x98] sm:$0xff]
        %v375 = vld [vmem:[%s354 + $0xa0] sm:$0xff]
        %v376 = vld [vmem:[%s354 + $0xa8] sm:$0xff]
        %v377 = vld [vmem:[%s354 + $0xb0] sm:$0xff]
        %v378 = vld [vmem:[%s354 + $0xb8] sm:$0xff]
        %v379 = vld [vmem:[%s354 + $0xc0] sm:$0xff]
        %v380 = vld [vmem:[%s354 + $0xc8] sm:$0xff]
        %v381 = vld [vmem:[%s354 + $0xd0] sm:$0xff]
        %v382 = vld [vmem:[%s354 + $0xd8] sm:$0xff]
        %v383 = vld [vmem:[%s354 + $0xe0] sm:$0xff]
        %v384 = vld [vmem:[%s354 + $0xe8] sm:$0xff]
        %v385 = vld [vmem:[%s354 + $0xf0] sm:$0xff]
        %v386 = vld [vmem:[%s354 + $0xf8] sm:$0xff]
        %v387 = vld [vmem:[%s222] sm:$0x3]
        %v388 = vld [vmem:[#allocation2] sm:$0xff]
        %v389 = vld [vmem:[#allocation2 + $0x8] sm:$0x11]
        %v392 = vunpack.c.l.b16 %v388
        %v393 = vunpack.c.h.b16 %v388
        %v394 = vunpack.c.l.b16 %v389
        %v395 = vunpack.c.h.b16 %v389
        %v396 = vpack.c.b16 %v394, %v392
        %v397 = vpack.c.b16 %v395, %v393
        %v399 = vshrl.u32 %v396, 16
        %v401 = vshll.u32 %v396, 16
        %v403 = vrot.slane %v401, 1
        %v404 = vor.u32 %v399, %v403
        %v406 = vshrl.u32 %v397, 16
        %v408 = vshll.u32 %v397, 16
        %v410 = vrot.slane %v408, 1
        %v411 = vor.u32 %v406, %v410
        %v446 = vunpack.c.l.b16 %v355
        %v447 = vunpack.c.h.b16 %v355
        %v448 = vunpack.c.l.b16 %v356
        %v449 = vunpack.c.h.b16 %v356
        %v450 = vunpack.c.l.b16 %v357
        %v451 = vunpack.c.h.b16 %v357
        %v452 = vunpack.c.l.b16 %v358
        %v453 = vunpack.c.h.b16 %v358
        %v454 = vunpack.c.l.b16 %v359
        %v455 = vunpack.c.h.b16 %v359
        %v456 = vunpack.c.l.b16 %v360
        %v457 = vunpack.c.h.b16 %v360
        %v458 = vunpack.c.l.b16 %v361
        %v459 = vunpack.c.h.b16 %v361
        %v460 = vunpack.c.l.b16 %v362
        %v461 = vunpack.c.h.b16 %v362
        %v462 = vunpack.c.l.b16 %v363
        %v463 = vunpack.c.h.b16 %v363
        %v464 = vunpack.c.l.b16 %v364
        %v465 = vunpack.c.h.b16 %v364
        %v466 = vunpack.c.l.b16 %v365
        %v467 = vunpack.c.h.b16 %v365
        %v468 = vunpack.c.l.b16 %v366
        %v469 = vunpack.c.h.b16 %v366
        %v470 = vunpack.c.l.b16 %v367
        %v471 = vunpack.c.h.b16 %v367
        %v472 = vunpack.c.l.b16 %v368
        %v473 = vunpack.c.h.b16 %v368
        %v474 = vunpack.c.l.b16 %v369
        %v475 = vunpack.c.h.b16 %v369
        %v476 = vunpack.c.l.b16 %v370
        %v477 = vunpack.c.h.b16 %v370
        %v478 = vunpack.c.l.b16 %v371
        %v479 = vunpack.c.h.b16 %v371
        %v480 = vunpack.c.l.b16 %v372
        %v481 = vunpack.c.h.b16 %v372
        %v482 = vunpack.c.l.b16 %v373
        %v483 = vunpack.c.h.b16 %v373
        %v484 = vunpack.c.l.b16 %v374
        %v485 = vunpack.c.h.b16 %v374
        %v486 = vunpack.c.l.b16 %v375
        %v487 = vunpack.c.h.b16 %v375
        %v488 = vunpack.c.l.b16 %v376
        %v489 = vunpack.c.h.b16 %v376
        %v490 = vunpack.c.l.b16 %v377
        %v491 = vunpack.c.h.b16 %v377
        %v492 = vunpack.c.l.b16 %v378
        %v493 = vunpack.c.h.b16 %v378
        %v494 = vunpack.c.l.b16 %v379
        %v495 = vunpack.c.h.b16 %v379
        %v496 = vunpack.c.l.b16 %v380
        %v497 = vunpack.c.h.b16 %v380
        %v498 = vunpack.c.l.b16 %v381
        %v499 = vunpack.c.h.b16 %v381
        %v500 = vunpack.c.l.b16 %v382
        %v501 = vunpack.c.h.b16 %v382
        %v502 = vunpack.c.l.b16 %v383
        %v503 = vunpack.c.h.b16 %v383
        %v504 = vunpack.c.l.b16 %v384
        %v505 = vunpack.c.h.b16 %v384
        %v506 = vunpack.c.l.b16 %v385
        %v507 = vunpack.c.h.b16 %v385
        %v508 = vunpack.c.l.b16 %v386
        %v509 = vunpack.c.h.b16 %v386
        %v510 = vpack.c.b16 %v448, %v446
        %v511 = vpack.c.b16 %v449, %v447
        %v512 = vpack.c.b16 %v452, %v450
        %v513 = vpack.c.b16 %v453, %v451
        %v514 = vpack.c.b16 %v456, %v454
        %v515 = vpack.c.b16 %v457, %v455
        %v516 = vpack.c.b16 %v460, %v458
        %v517 = vpack.c.b16 %v461, %v459
        %v518 = vpack.c.b16 %v464, %v462
        %v519 = vpack.c.b16 %v465, %v463
        %v520 = vpack.c.b16 %v468, %v466
        %v521 = vpack.c.b16 %v469, %v467
        %v522 = vpack.c.b16 %v472, %v470
        %v523 = vpack.c.b16 %v473, %v471
        %v524 = vpack.c.b16 %v476, %v474
        %v525 = vpack.c.b16 %v477, %v475
        %v526 = vpack.c.b16 %v480, %v478
        %v527 = vpack.c.b16 %v481, %v479
        %v528 = vpack.c.b16 %v484, %v482
        %v529 = vpack.c.b16 %v485, %v483
        %v530 = vpack.c.b16 %v488, %v486
        %v531 = vpack.c.b16 %v489, %v487
        %v532 = vpack.c.b16 %v492, %v490
        %v533 = vpack.c.b16 %v493, %v491
        %v534 = vpack.c.b16 %v496, %v494
        %v535 = vpack.c.b16 %v497, %v495
        %v536 = vpack.c.b16 %v500, %v498
        %v537 = vpack.c.b16 %v501, %v499
        %v538 = vpack.c.b16 %v504, %v502
        %v539 = vpack.c.b16 %v505, %v503
        %v540 = vpack.c.b16 %v508, %v506
        %v541 = vpack.c.b16 %v509, %v507
        %574 = vmatprep.subr.bf16.mxu0 %v525
        %575 = vmatpush1.bf16.msra.mxu0 %v524
        %576 = vmatprep.subr.bf16.mxu0 %v523
        %577 = vmatpush1.bf16.msra.mxu0 %v522
        %578 = vmatprep.subr.bf16.mxu0 %v521
        %579 = vmatpush1.bf16.msra.mxu0 %v520
        %580 = vmatprep.subr.bf16.mxu0 %v519
        %581 = vmatpush1.bf16.msra.mxu0 %v518
        %582 = vmatprep.subr.bf16.mxu0 %v517
        %583 = vmatpush1.bf16.msra.mxu0 %v516
        %584 = vmatprep.subr.bf16.mxu0 %v515
        %585 = vmatpush1.bf16.msra.mxu0 %v514
        %586 = vmatprep.subr.bf16.mxu0 %v513
        %587 = vmatpush1.bf16.msra.mxu0 %v512
        %588 = vmatprep.subr.bf16.mxu0 %v511
        %589 = vmatpush1.bf16.msra.mxu0 %v510
        %590 = vmatprep.subr.bf16.mxu0 %v541
        %591 = vmatpush2.bf16.msra.mxu0 %v540
        %592 = vmatprep.subr.bf16.mxu0 %v539
        %593 = vmatpush2.bf16.msra.mxu0 %v538
        %594 = vmatprep.subr.bf16.mxu0 %v537
        %595 = vmatpush2.bf16.msra.mxu0 %v536
        %596 = vmatprep.subr.bf16.mxu0 %v535
        %597 = vmatpush2.bf16.msra.mxu0 %v534
        %598 = vmatprep.subr.bf16.mxu0 %v533
        %599 = vmatpush2.bf16.msra.mxu0 %v532
        %600 = vmatprep.subr.bf16.mxu0 %v531
        %601 = vmatpush2.bf16.msra.mxu0 %v530
        %602 = vmatprep.subr.bf16.mxu0 %v529
        %603 = vmatpush2.bf16.msra.mxu0 %v528
        %604 = vmatprep.subr.bf16.mxu0 %v527
        %605 = vmatpush2.bf16.msra.mxu0 %v526
        %606 = vmatprep.mubr.bf16.mxu0 %v411
        %607 = vmatmul.mubr.bf16.gmra.mxu0 %v404
        %v608 = vpop.f32.mrf.mxu0
        %v609 = vadd.f32 0.0, %v608
        %v610 = vpop.f32.mrf.mxu0
        %v611 = vadd.f32 0.0, %v610
        %v612 = vpop.f32.mrf.mxu0
        %v613 = vpop.f32.mrf.mxu0
        %614 = vdwg.mxu0
        %v615 = vpack.c.b16 %v392, %v392
        %v616 = vpack.c.b16 %v393, %v393
        %v651 = vunpack.c.l.b16 %v289
        %v652 = vunpack.c.h.b16 %v289
        %v653 = vunpack.c.l.b16 %v290
        %v654 = vunpack.c.h.b16 %v290
        %v655 = vunpack.c.l.b16 %v291
        %v656 = vunpack.c.h.b16 %v291
        %v657 = vunpack.c.l.b16 %v292
        %v658 = vunpack.c.h.b16 %v292
        %v659 = vunpack.c.l.b16 %v293
        %v660 = vunpack.c.h.b16 %v293
        %v661 = vunpack.c.l.b16 %v294
        %v662 = vunpack.c.h.b16 %v294
        %v663 = vunpack.c.l.b16 %v295
        %v664 = vunpack.c.h.b16 %v295
        %v665 = vunpack.c.l.b16 %v296
        %v666 = vunpack.c.h.b16 %v296
        %v667 = vunpack.c.l.b16 %v297
        %v668 = vunpack.c.h.b16 %v297
        %v669 = vunpack.c.l.b16 %v298
        %v670 = vunpack.c.h.b16 %v298
        %v671 = vunpack.c.l.b16 %v299
        %v672 = vunpack.c.h.b16 %v299
        %v673 = vunpack.c.l.b16 %v300
        %v674 = vunpack.c.h.b16 %v300
        %v675 = vunpack.c.l.b16 %v301
        %v676 = vunpack.c.h.b16 %v301
        %v677 = vunpack.c.l.b16 %v302
        %v678 = vunpack.c.h.b16 %v302
        %v679 = vunpack.c.l.b16 %v303
        %v680 = vunpack.c.h.b16 %v303
        %v681 = vunpack.c.l.b16 %v304
        %v682 = vunpack.c.h.b16 %v304
        %v683 = vunpack.c.l.b16 %v305
        %v684 = vunpack.c.h.b16 %v305
        %v685 = vunpack.c.l.b16 %v306
        %v686 = vunpack.c.h.b16 %v306
        %v687 = vunpack.c.l.b16 %v307
        %v688 = vunpack.c.h.b16 %v307
        %v689 = vunpack.c.l.b16 %v308
        %v690 = vunpack.c.h.b16 %v308
        %v691 = vunpack.c.l.b16 %v309
        %v692 = vunpack.c.h.b16 %v309
        %v693 = vunpack.c.l.b16 %v310
        %v694 = vunpack.c.h.b16 %v310
        %v695 = vunpack.c.l.b16 %v311
        %v696 = vunpack.c.h.b16 %v311
        %v697 = vunpack.c.l.b16 %v312
        %v698 = vunpack.c.h.b16 %v312
        %v699 = vunpack.c.l.b16 %v313
        %v700 = vunpack.c.h.b16 %v313
        %v701 = vunpack.c.l.b16 %v314
        %v702 = vunpack.c.h.b16 %v314
        %v703 = vunpack.c.l.b16 %v315
        %v704 = vunpack.c.h.b16 %v315
        %v705 = vunpack.c.l.b16 %v316
        %v706 = vunpack.c.h.b16 %v316
        %v707 = vunpack.c.l.b16 %v317
        %v708 = vunpack.c.h.b16 %v317
        %v709 = vunpack.c.l.b16 %v318
        %v710 = vunpack.c.h.b16 %v318
        %v711 = vunpack.c.l.b16 %v319
        %v712 = vunpack.c.h.b16 %v319
        %v713 = vunpack.c.l.b16 %v320
        %v714 = vunpack.c.h.b16 %v320
        %v715 = vpack.c.b16 %v653, %v651
        %v716 = vpack.c.b16 %v654, %v652
        %v717 = vpack.c.b16 %v657, %v655
        %v718 = vpack.c.b16 %v658, %v656
        %v719 = vpack.c.b16 %v661, %v659
        %v720 = vpack.c.b16 %v662, %v660
        %v721 = vpack.c.b16 %v665, %v663
        %v722 = vpack.c.b16 %v666, %v664
        %v723 = vpack.c.b16 %v669, %v667
        %v724 = vpack.c.b16 %v670, %v668
        %v725 = vpack.c.b16 %v673, %v671
        %v726 = vpack.c.b16 %v674, %v672
        %v727 = vpack.c.b16 %v677, %v675
        %v728 = vpack.c.b16 %v678, %v676
        %v729 = vpack.c.b16 %v681, %v679
        %v730 = vpack.c.b16 %v682, %v680
        %v731 = vpack.c.b16 %v685, %v683
        %v732 = vpack.c.b16 %v686, %v684
        %v733 = vpack.c.b16 %v689, %v687
        %v734 = vpack.c.b16 %v690, %v688
        %v735 = vpack.c.b16 %v693, %v691
        %v736 = vpack.c.b16 %v694, %v692
        %v737 = vpack.c.b16 %v697, %v695
        %v738 = vpack.c.b16 %v698, %v696
        %v739 = vpack.c.b16 %v701, %v699
        %v740 = vpack.c.b16 %v702, %v700
        %v741 = vpack.c.b16 %v705, %v703
        %v742 = vpack.c.b16 %v706, %v704
        %v743 = vpack.c.b16 %v709, %v707
        %v744 = vpack.c.b16 %v710, %v708
        %v745 = vpack.c.b16 %v713, %v711
        %v746 = vpack.c.b16 %v714, %v712
        %779 = vmatprep.subr.bf16.mxu0 %v730
        %780 = vmatpush1.bf16.msra.mxu0 %v729
        %781 = vmatprep.subr.bf16.mxu0 %v728
        %782 = vmatpush1.bf16.msra.mxu0 %v727
        %783 = vmatprep.subr.bf16.mxu0 %v726
        %784 = vmatpush1.bf16.msra.mxu0 %v725
        %785 = vmatprep.subr.bf16.mxu0 %v724
        %786 = vmatpush1.bf16.msra.mxu0 %v723
        %787 = vmatprep.subr.bf16.mxu0 %v722
        %788 = vmatpush1.bf16.msra.mxu0 %v721
        %789 = vmatprep.subr.bf16.mxu0 %v720
        %790 = vmatpush1.bf16.msra.mxu0 %v719
        %791 = vmatprep.subr.bf16.mxu0 %v718
        %792 = vmatpush1.bf16.msra.mxu0 %v717
        %793 = vmatprep.subr.bf16.mxu0 %v716
        %794 = vmatpush1.bf16.msra.mxu0 %v715
        %795 = vmatprep.subr.bf16.mxu0 %v746
        %796 = vmatpush2.bf16.msra.mxu0 %v745
        %797 = vmatprep.subr.bf16.mxu0 %v744
        %798 = vmatpush2.bf16.msra.mxu0 %v743
        %799 = vmatprep.subr.bf16.mxu0 %v742
        %800 = vmatpush2.bf16.msra.mxu0 %v741
        %801 = vmatprep.subr.bf16.mxu0 %v740
        %802 = vmatpush2.bf16.msra.mxu0 %v739
        %803 = vmatprep.subr.bf16.mxu0 %v738
        %804 = vmatpush2.bf16.msra.mxu0 %v737
        %805 = vmatprep.subr.bf16.mxu0 %v736
        %806 = vmatpush2.bf16.msra.mxu0 %v735
        %807 = vmatprep.subr.bf16.mxu0 %v734
        %808 = vmatpush2.bf16.msra.mxu0 %v733
        %809 = vmatprep.subr.bf16.mxu0 %v732
        %810 = vmatpush2.bf16.msra.mxu0 %v731
        %811 = vmatprep.mubr.bf16.mxu0 %v616
        %812 = vmatmul.mubr.bf16.gmra.mxu0 %v615
        %v813 = vpop.f32.mrf.mxu0
        %v814 = vadd.f32 0.0, %v813
        %v815 = vpop.f32.mrf.mxu0
        %v816 = vadd.f32 0.0, %v815
        %v817 = vpop.f32.mrf.mxu0
        %v818 = vpop.f32.mrf.mxu0
        %819 = vdwg.mxu0
        %v852 = vunpack.c.l.b16 %v322
        %v853 = vunpack.c.h.b16 %v322
        %v854 = vunpack.c.l.b16 %v323
        %v855 = vunpack.c.h.b16 %v323
        %v856 = vunpack.c.l.b16 %v324
        %v857 = vunpack.c.h.b16 %v324
        %v858 = vunpack.c.l.b16 %v325
        %v859 = vunpack.c.h.b16 %v325
        %v860 = vunpack.c.l.b16 %v326
        %v861 = vunpack.c.h.b16 %v326
        %v862 = vunpack.c.l.b16 %v327
        %v863 = vunpack.c.h.b16 %v327
        %v864 = vunpack.c.l.b16 %v328
        %v865 = vunpack.c.h.b16 %v328
        %v866 = vunpack.c.l.b16 %v329
        %v867 = vunpack.c.h.b16 %v329
        %v868 = vunpack.c.l.b16 %v330
        %v869 = vunpack.c.h.b16 %v330
        %v870 = vunpack.c.l.b16 %v331
        %v871 = vunpack.c.h.b16 %v331
        %v872 = vunpack.c.l.b16 %v332
        %v873 = vunpack.c.h.b16 %v332
        %v874 = vunpack.c.l.b16 %v333
        %v875 = vunpack.c.h.b16 %v333
        %v876 = vunpack.c.l.b16 %v334
        %v877 = vunpack.c.h.b16 %v334
        %v878 = vunpack.c.l.b16 %v335
        %v879 = vunpack.c.h.b16 %v335
        %v880 = vunpack.c.l.b16 %v336
        %v881 = vunpack.c.h.b16 %v336
        %v882 = vunpack.c.l.b16 %v337
        %v883 = vunpack.c.h.b16 %v337
        %v884 = vunpack.c.l.b16 %v338
        %v885 = vunpack.c.h.b16 %v338
        %v886 = vunpack.c.l.b16 %v339
        %v887 = vunpack.c.h.b16 %v339
        %v888 = vunpack.c.l.b16 %v340
        %v889 = vunpack.c.h.b16 %v340
        %v890 = vunpack.c.l.b16 %v341
        %v891 = vunpack.c.h.b16 %v341
        %v892 = vunpack.c.l.b16 %v342
        %v893 = vunpack.c.h.b16 %v342
        %v894 = vunpack.c.l.b16 %v343
        %v895 = vunpack.c.h.b16 %v343
        %v896 = vunpack.c.l.b16 %v344
        %v897 = vunpack.c.h.b16 %v344
        %v898 = vunpack.c.l.b16 %v345
        %v899 = vunpack.c.h.b16 %v345
        %v900 = vunpack.c.l.b16 %v346
        %v901 = vunpack.c.h.b16 %v346
        %v902 = vunpack.c.l.b16 %v347
        %v903 = vunpack.c.h.b16 %v347
        %v904 = vunpack.c.l.b16 %v348
        %v905 = vunpack.c.h.b16 %v348
        %v906 = vunpack.c.l.b16 %v349
        %v907 = vunpack.c.h.b16 %v349
        %v908 = vunpack.c.l.b16 %v350
        %v909 = vunpack.c.h.b16 %v350
        %v910 = vunpack.c.l.b16 %v351
        %v911 = vunpack.c.h.b16 %v351
        %v912 = vunpack.c.l.b16 %v352
        %v913 = vunpack.c.h.b16 %v352
        %v914 = vunpack.c.l.b16 %v353
        %v915 = vunpack.c.h.b16 %v353
        %v916 = vpack.c.b16 %v854, %v852
        %v917 = vpack.c.b16 %v855, %v853
        %v918 = vpack.c.b16 %v858, %v856
        %v919 = vpack.c.b16 %v859, %v857
        %v920 = vpack.c.b16 %v862, %v860
        %v921 = vpack.c.b16 %v863, %v861
        %v922 = vpack.c.b16 %v866, %v864
        %v923 = vpack.c.b16 %v867, %v865
        %v924 = vpack.c.b16 %v870, %v868
        %v925 = vpack.c.b16 %v871, %v869
        %v926 = vpack.c.b16 %v874, %v872
        %v927 = vpack.c.b16 %v875, %v873
        %v928 = vpack.c.b16 %v878, %v876
        %v929 = vpack.c.b16 %v879, %v877
        %v930 = vpack.c.b16 %v882, %v880
        %v931 = vpack.c.b16 %v883, %v881
        %v932 = vpack.c.b16 %v886, %v884
        %v933 = vpack.c.b16 %v887, %v885
        %v934 = vpack.c.b16 %v890, %v888
        %v935 = vpack.c.b16 %v891, %v889
        %v936 = vpack.c.b16 %v894, %v892
        %v937 = vpack.c.b16 %v895, %v893
        %v938 = vpack.c.b16 %v898, %v896
        %v939 = vpack.c.b16 %v899, %v897
        %v940 = vpack.c.b16 %v902, %v900
        %v941 = vpack.c.b16 %v903, %v901
        %v942 = vpack.c.b16 %v906, %v904
        %v943 = vpack.c.b16 %v907, %v905
        %v944 = vpack.c.b16 %v910, %v908
        %v945 = vpack.c.b16 %v911, %v909
        %v946 = vpack.c.b16 %v914, %v912
        %v947 = vpack.c.b16 %v915, %v913
        %980 = vmatprep.subr.bf16.mxu0 %v931
        %981 = vmatpush1.bf16.msra.mxu0 %v930
        %982 = vmatprep.subr.bf16.mxu0 %v929
        %983 = vmatpush1.bf16.msra.mxu0 %v928
        %984 = vmatprep.subr.bf16.mxu0 %v927
        %985 = vmatpush1.bf16.msra.mxu0 %v926
        %986 = vmatprep.subr.bf16.mxu0 %v925
        %987 = vmatpush1.bf16.msra.mxu0 %v924
        %988 = vmatprep.subr.bf16.mxu0 %v923
        %989 = vmatpush1.bf16.msra.mxu0 %v922
        %990 = vmatprep.subr.bf16.mxu0 %v921
        %991 = vmatpush1.bf16.msra.mxu0 %v920
        %992 = vmatprep.subr.bf16.mxu0 %v919
        %993 = vmatpush1.bf16.msra.mxu0 %v918
        %994 = vmatprep.subr.bf16.mxu0 %v917
        %995 = vmatpush1.bf16.msra.mxu0 %v916
        %996 = vmatprep.subr.bf16.mxu0 %v947
        %997 = vmatpush2.bf16.msra.mxu0 %v946
        %998 = vmatprep.subr.bf16.mxu0 %v945
        %999 = vmatpush2.bf16.msra.mxu0 %v944
        %1000 = vmatprep.subr.bf16.mxu0 %v943
        %1001 = vmatpush2.bf16.msra.mxu0 %v942
        %1002 = vmatprep.subr.bf16.mxu0 %v941
        %1003 = vmatpush2.bf16.msra.mxu0 %v940
        %1004 = vmatprep.subr.bf16.mxu0 %v939
        %1005 = vmatpush2.bf16.msra.mxu0 %v938
        %1006 = vmatprep.subr.bf16.mxu0 %v937
        %1007 = vmatpush2.bf16.msra.mxu0 %v936
        %1008 = vmatprep.subr.bf16.mxu0 %v935
        %1009 = vmatpush2.bf16.msra.mxu0 %v934
        %1010 = vmatprep.subr.bf16.mxu0 %v933
        %1011 = vmatpush2.bf16.msra.mxu0 %v932
        %1012 = vmatprep.mubr.bf16.mxu0 %v616
        %1013 = vmatmul.mubr.bf16.gmra.mxu0 %v615
        %v1014 = vpop.f32.mrf.mxu0
        %v1015 = vadd.f32 %v609, %v1014
        %v1016 = vpop.f32.mrf.mxu0
        %v1017 = vadd.f32 %v611, %v1016
        %v1018 = vpop.f32.mrf.mxu0
        %v1019 = vpop.f32.mrf.mxu0
        %1020 = vdwg.mxu0
        %v1022 = vlaneseq
        %v1023 = vshrl.u32 %v1022, 7
        %v1024 = vsub.s32 0, %v1023
        %v1025 = vrot.slane %v387, %v1024
        %v1026 = vlaneseq
        %v1027 = vshrl.u32 %v1026, 7
        %v1028 = vsub.s32 1, %v1027
        %v1029 = vrot.slane %v387, %v1028
        %v1032 = vadd.f32 %v1015, %v1025
        %v1033 = vadd.f32 %v1017, %v1029
        %vm1034 = vcmp.eq.s32.totalorder %v288, 0
        %v1035 = vrot.slane %v814, 7
        %v1036 = vrot.slane %v816, 7
        %v1037 = vsel %vm1034, 0.0, %v1035
        %v1038 = vsel %vm1034, 0.0, %v1036
        %v1039 = vadd.f32 %v1032, %v1037
        %v1040 = vadd.f32 %v1033, %v1038
        %v1041 = vrot.slane %v1039, 4
        %v1042 = vadd.f32 %v1039, %v1041
        %v1043 = vrot.slane %v1042, 2
        %v1044 = vadd.f32 %v1042, %v1043
        %v1045 = vrot.slane %v1044, 1
        %v1046 = vadd.f32 %v1044, %v1045
        %v1047 = vrot.slane %v1040, 4
        %v1048 = vadd.f32 %v1040, %v1047
        %v1049 = vrot.slane %v1048, 2
        %v1050 = vadd.f32 %v1048, %v1049
        %v1051 = vrot.slane %v1050, 1
        %v1052 = vadd.f32 %v1050, %v1051
        %v1053 = vrcp.pop 8.0
        %v1054 = vmul.f32 %v1046, %v1053
        %v1055 = vmul.f32 %v1052, %v1053
        %v1056 = vsub.f32 %v1039, %v1054
        %v1057 = vsub.f32 %v1040, %v1055
        %v1058 = vmul.f32 %v1056, %v1056
        %v1059 = vmul.f32 %v1057, %v1057
        %v1060 = vrot.slane %v1058, 4
        %v1061 = vadd.f32 %v1058, %v1060
        %v1062 = vrot.slane %v1061, 2
        %v1063 = vadd.f32 %v1061, %v1062
        %v1064 = vrot.slane %v1063, 1
        %v1065 = vadd.f32 %v1063, %v1064
        %v1066 = vrot.slane %v1059, 4
        %v1067 = vadd.f32 %v1059, %v1066
        %v1068 = vrot.slane %v1067, 2
        %v1069 = vadd.f32 %v1067, %v1068
        %v1070 = vrot.slane %v1069, 1
        %v1071 = vadd.f32 %v1069, %v1070
        %v1072 = vmul.f32 %v1065, %v1053
        %v1073 = vmul.f32 %v1071, %v1053
        %v1074 = vadd.f32 %v1072, 1e-05
        %v1075 = vadd.f32 %v1073, 1e-05
        %v1076 = vrsqrt.pop %v1074
        %v1077 = vrsqrt.pop %v1075
        %v1078 = vmul.f32 %v1056, %v1076
        %v1079 = vmul.f32 %v1057, %v1077
        %v1080 = vmax.f32 %v1078, 0.0
        %v1081 = vmax.f32 %v1079, 0.0
        %v1082 = vpack.c.bf16 %v1080, %v1080
        %v1083 = vpack.c.bf16 %v1081, %v1081
        %v1086 = vunpack.c.l.b16 %v1082
        %v1087 = vunpack.c.l.b16 %v1083
        %v1088 = vpack.c.b16 %v1087, %v1086
        %1090 = vst [vmem:[#allocation3] sm:$0xff] %v1088
        %s1091 = scalar_lea.vmem %s213, 768 [#allocation4]
        %v1092 = vld [vmem:[%s1091] sm:$0xff]
        %v1093 = vld [vmem:[%s1091 + $0x8] sm:$0xff]
        %v1094 = vld [vmem:[%s1091 + $0x10] sm:$0xff]
        %v1095 = vld [vmem:[%s1091 + $0x18] sm:$0xff]
        %v1096 = vld [vmem:[%s1091 + $0x20] sm:$0xff]
        %v1097 = vld [vmem:[%s1091 + $0x28] sm:$0xff]
        %v1098 = vld [vmem:[%s1091 + $0x30] sm:$0xff]
        %v1099 = vld [vmem:[%s1091 + $0x38] sm:$0xff]
        %v1100 = vld [vmem:[%s1091 + $0x40] sm:$0xff]
        %v1101 = vld [vmem:[%s1091 + $0x48] sm:$0xff]
        %v1102 = vld [vmem:[%s1091 + $0x50] sm:$0xff]
        %v1103 = vld [vmem:[%s1091 + $0x58] sm:$0xff]
        %v1104 = vld [vmem:[%s1091 + $0x60] sm:$0xff]
        %v1105 = vld [vmem:[%s1091 + $0x68] sm:$0xff]
        %v1106 = vld [vmem:[%s1091 + $0x70] sm:$0xff]
        %v1107 = vld [vmem:[%s1091 + $0x78] sm:$0xff]
        %v1108 = vld [vmem:[%s1091 + $0x80] sm:$0xff]
        %v1109 = vld [vmem:[%s1091 + $0x88] sm:$0xff]
        %v1110 = vld [vmem:[%s1091 + $0x90] sm:$0xff]
        %v1111 = vld [vmem:[%s1091 + $0x98] sm:$0xff]
        %v1112 = vld [vmem:[%s1091 + $0xa0] sm:$0xff]
        %v1113 = vld [vmem:[%s1091 + $0xa8] sm:$0xff]
        %v1114 = vld [vmem:[%s1091 + $0xb0] sm:$0xff]
        %v1115 = vld [vmem:[%s1091 + $0xb8] sm:$0xff]
        %v1116 = vld [vmem:[%s1091 + $0xc0] sm:$0xff]
        %v1117 = vld [vmem:[%s1091 + $0xc8] sm:$0xff]
        %v1118 = vld [vmem:[%s1091 + $0xd0] sm:$0xff]
        %v1119 = vld [vmem:[%s1091 + $0xd8] sm:$0xff]
        %v1120 = vld [vmem:[%s1091 + $0xe0] sm:$0xff]
        %v1121 = vld [vmem:[%s1091 + $0xe8] sm:$0xff]
        %v1122 = vld [vmem:[%s1091 + $0xf0] sm:$0xff]
        %v1123 = vld [vmem:[%s1091 + $0xf8] sm:$0xff]
        %s1124 = scalar_lea.vmem %s213, 1024 [#allocation4]
        %v1125 = vld [vmem:[%s1124] sm:$0xff]
        %v1126 = vld [vmem:[%s1124 + $0x8] sm:$0xff]
        %v1127 = vld [vmem:[%s1124 + $0x10] sm:$0xff]
        %v1128 = vld [vmem:[%s1124 + $0x18] sm:$0xff]
        %v1129 = vld [vmem:[%s1124 + $0x20] sm:$0xff]
        %v1130 = vld [vmem:[%s1124 + $0x28] sm:$0xff]
        %v1131 = vld [vmem:[%s1124 + $0x30] sm:$0xff]
        %v1132 = vld [vmem:[%s1124 + $0x38] sm:$0xff]
        %v1133 = vld [vmem:[%s1124 + $0x40] sm:$0xff]
        %v1134 = vld [vmem:[%s1124 + $0x48] sm:$0xff]
        %v1135 = vld [vmem:[%s1124 + $0x50] sm:$0xff]
        %v1136 = vld [vmem:[%s1124 + $0x58] sm:$0xff]
        %v1137 = vld [vmem:[%s1124 + $0x60] sm:$0xff]
        %v1138 = vld [vmem:[%s1124 + $0x68] sm:$0xff]
        %v1139 = vld [vmem:[%s1124 + $0x70] sm:$0xff]
        %v1140 = vld [vmem:[%s1124 + $0x78] sm:$0xff]
        %v1141 = vld [vmem:[%s1124 + $0x80] sm:$0xff]
        %v1142 = vld [vmem:[%s1124 + $0x88] sm:$0xff]
        %v1143 = vld [vmem:[%s1124 + $0x90] sm:$0xff]
        %v1144 = vld [vmem:[%s1124 + $0x98] sm:$0xff]
        %v1145 = vld [vmem:[%s1124 + $0xa0] sm:$0xff]
        %v1146 = vld [vmem:[%s1124 + $0xa8] sm:$0xff]
        %v1147 = vld [vmem:[%s1124 + $0xb0] sm:$0xff]
        %v1148 = vld [vmem:[%s1124 + $0xb8] sm:$0xff]
        %v1149 = vld [vmem:[%s1124 + $0xc0] sm:$0xff]
        %v1150 = vld [vmem:[%s1124 + $0xc8] sm:$0xff]
        %v1151 = vld [vmem:[%s1124 + $0xd0] sm:$0xff]
        %v1152 = vld [vmem:[%s1124 + $0xd8] sm:$0xff]
        %v1153 = vld [vmem:[%s1124 + $0xe0] sm:$0xff]
        %v1154 = vld [vmem:[%s1124 + $0xe8] sm:$0xff]
        %v1155 = vld [vmem:[%s1124 + $0xf0] sm:$0xff]
        %v1156 = vld [vmem:[%s1124 + $0xf8] sm:$0xff]
        %s1157 = scalar_lea.vmem %s213, 1280 [#allocation4]
        %v1158 = vld [vmem:[%s1157] sm:$0xff]
        %v1159 = vld [vmem:[%s1157 + $0x8] sm:$0xff]
        %v1160 = vld [vmem:[%s1157 + $0x10] sm:$0xff]
        %v1161 = vld [vmem:[%s1157 + $0x18] sm:$0xff]
        %v1162 = vld [vmem:[%s1157 + $0x20] sm:$0xff]
        %v1163 = vld [vmem:[%s1157 + $0x28] sm:$0xff]
        %v1164 = vld [vmem:[%s1157 + $0x30] sm:$0xff]
        %v1165 = vld [vmem:[%s1157 + $0x38] sm:$0xff]
        %v1166 = vld [vmem:[%s1157 + $0x40] sm:$0xff]
        %v1167 = vld [vmem:[%s1157 + $0x48] sm:$0xff]
        %v1168 = vld [vmem:[%s1157 + $0x50] sm:$0xff]
        %v1169 = vld [vmem:[%s1157 + $0x58] sm:$0xff]
        %v1170 = vld [vmem:[%s1157 + $0x60] sm:$0xff]
        %v1171 = vld [vmem:[%s1157 + $0x68] sm:$0xff]
        %v1172 = vld [vmem:[%s1157 + $0x70] sm:$0xff]
        %v1173 = vld [vmem:[%s1157 + $0x78] sm:$0xff]
        %v1174 = vld [vmem:[%s1157 + $0x80] sm:$0xff]
        %v1175 = vld [vmem:[%s1157 + $0x88] sm:$0xff]
        %v1176 = vld [vmem:[%s1157 + $0x90] sm:$0xff]
        %v1177 = vld [vmem:[%s1157 + $0x98] sm:$0xff]
        %v1178 = vld [vmem:[%s1157 + $0xa0] sm:$0xff]
        %v1179 = vld [vmem:[%s1157 + $0xa8] sm:$0xff]
        %v1180 = vld [vmem:[%s1157 + $0xb0] sm:$0xff]
        %v1181 = vld [vmem:[%s1157 + $0xb8] sm:$0xff]
        %v1182 = vld [vmem:[%s1157 + $0xc0] sm:$0xff]
        %v1183 = vld [vmem:[%s1157 + $0xc8] sm:$0xff]
        %v1184 = vld [vmem:[%s1157 + $0xd0] sm:$0xff]
        %v1185 = vld [vmem:[%s1157 + $0xd8] sm:$0xff]
        %v1186 = vld [vmem:[%s1157 + $0xe0] sm:$0xff]
        %v1187 = vld [vmem:[%s1157 + $0xe8] sm:$0xff]
        %v1188 = vld [vmem:[%s1157 + $0xf0] sm:$0xff]
        %v1189 = vld [vmem:[%s1157 + $0xf8] sm:$0xff]
        %s1190 = scalar_lea.vmem %s222, 2 [#allocation6]
        %v1191 = vld [vmem:[%s1190] sm:$0x3]
        %v1192 = vld [vmem:[#allocation3] sm:$0xff]
        %v1193 = vld [vmem:[#allocation3 + $0x8] sm:$0x11]
        %v1196 = vunpack.c.l.b16 %v1192
        %v1197 = vunpack.c.h.b16 %v1192
        %v1198 = vunpack.c.l.b16 %v1193
        %v1199 = vunpack.c.h.b16 %v1193
        %v1200 = vpack.c.b16 %v1198, %v1196
        %v1201 = vpack.c.b16 %v1199, %v1197
        %v1203 = vshrl.u32 %v1200, 16
        %v1205 = vshll.u32 %v1200, 16
        %v1207 = vrot.slane %v1205, 1
        %v1208 = vor.u32 %v1203, %v1207
        %v1210 = vshrl.u32 %v1201, 16
        %v1212 = vshll.u32 %v1201, 16
        %v1214 = vrot.slane %v1212, 1
        %v1215 = vor.u32 %v1210, %v1214
        %v1250 = vunpack.c.l.b16 %v1158
        %v1251 = vunpack.c.h.b16 %v1158
        %v1252 = vunpack.c.l.b16 %v1159
        %v1253 = vunpack.c.h.b16 %v1159
        %v1254 = vunpack.c.l.b16 %v1160
        %v1255 = vunpack.c.h.b16 %v1160
        %v1256 = vunpack.c.l.b16 %v1161
        %v1257 = vunpack.c.h.b16 %v1161
        %v1258 = vunpack.c.l.b16 %v1162
        %v1259 = vunpack.c.h.b16 %v1162
        %v1260 = vunpack.c.l.b16 %v1163
        %v1261 = vunpack.c.h.b16 %v1163
        %v1262 = vunpack.c.l.b16 %v1164
        %v1263 = vunpack.c.h.b16 %v1164
        %v1264 = vunpack.c.l.b16 %v1165
        %v1265 = vunpack.c.h.b16 %v1165
        %v1266 = vunpack.c.l.b16 %v1166
        %v1267 = vunpack.c.h.b16 %v1166
        %v1268 = vunpack.c.l.b16 %v1167
        %v1269 = vunpack.c.h.b16 %v1167
        %v1270 = vunpack.c.l.b16 %v1168
        %v1271 = vunpack.c.h.b16 %v1168
        %v1272 = vunpack.c.l.b16 %v1169
        %v1273 = vunpack.c.h.b16 %v1169
        %v1274 = vunpack.c.l.b16 %v1170
        %v1275 = vunpack.c.h.b16 %v1170
        %v1276 = vunpack.c.l.b16 %v1171
        %v1277 = vunpack.c.h.b16 %v1171
        %v1278 = vunpack.c.l.b16 %v1172
        %v1279 = vunpack.c.h.b16 %v1172
        %v1280 = vunpack.c.l.b16 %v1173
        %v1281 = vunpack.c.h.b16 %v1173
        %v1282 = vunpack.c.l.b16 %v1174
        %v1283 = vunpack.c.h.b16 %v1174
        %v1284 = vunpack.c.l.b16 %v1175
        %v1285 = vunpack.c.h.b16 %v1175
        %v1286 = vunpack.c.l.b16 %v1176
        %v1287 = vunpack.c.h.b16 %v1176
        %v1288 = vunpack.c.l.b16 %v1177
        %v1289 = vunpack.c.h.b16 %v1177
        %v1290 = vunpack.c.l.b16 %v1178
        %v1291 = vunpack.c.h.b16 %v1178
        %v1292 = vunpack.c.l.b16 %v1179
        %v1293 = vunpack.c.h.b16 %v1179
        %v1294 = vunpack.c.l.b16 %v1180
        %v1295 = vunpack.c.h.b16 %v1180
        %v1296 = vunpack.c.l.b16 %v1181
        %v1297 = vunpack.c.h.b16 %v1181
        %v1298 = vunpack.c.l.b16 %v1182
        %v1299 = vunpack.c.h.b16 %v1182
        %v1300 = vunpack.c.l.b16 %v1183
        %v1301 = vunpack.c.h.b16 %v1183
        %v1302 = vunpack.c.l.b16 %v1184
        %v1303 = vunpack.c.h.b16 %v1184
        %v1304 = vunpack.c.l.b16 %v1185
        %v1305 = vunpack.c.h.b16 %v1185
        %v1306 = vunpack.c.l.b16 %v1186
        %v1307 = vunpack.c.h.b16 %v1186
        %v1308 = vunpack.c.l.b16 %v1187
        %v1309 = vunpack.c.h.b16 %v1187
        %v1310 = vunpack.c.l.b16 %v1188
        %v1311 = vunpack.c.h.b16 %v1188
        %v1312 = vunpack.c.l.b16 %v1189
        %v1313 = vunpack.c.h.b16 %v1189
        %v1314 = vpack.c.b16 %v1252, %v1250
        %v1315 = vpack.c.b16 %v1253, %v1251
        %v1316 = vpack.c.b16 %v1256, %v1254
        %v1317 = vpack.c.b16 %v1257, %v1255
        %v1318 = vpack.c.b16 %v1260, %v1258
        %v1319 = vpack.c.b16 %v1261, %v1259
        %v1320 = vpack.c.b16 %v1264, %v1262
        %v1321 = vpack.c.b16 %v1265, %v1263
        %v1322 = vpack.c.b16 %v1268, %v1266
        %v1323 = vpack.c.b16 %v1269, %v1267
        %v1324 = vpack.c.b16 %v1272, %v1270
        %v1325 = vpack.c.b16 %v1273, %v1271
        %v1326 = vpack.c.b16 %v1276, %v1274
        %v1327 = vpack.c.b16 %v1277, %v1275
        %v1328 = vpack.c.b16 %v1280, %v1278
        %v1329 = vpack.c.b16 %v1281, %v1279
        %v1330 = vpack.c.b16 %v1284, %v1282
        %v1331 = vpack.c.b16 %v1285, %v1283
        %v1332 = vpack.c.b16 %v1288, %v1286
        %v1333 = vpack.c.b16 %v1289, %v1287
        %v1334 = vpack.c.b16 %v1292, %v1290
        %v1335 = vpack.c.b16 %v1293, %v1291
        %v1336 = vpack.c.b16 %v1296, %v1294
        %v1337 = vpack.c.b16 %v1297, %v1295
        %v1338 = vpack.c.b16 %v1300, %v1298
        %v1339 = vpack.c.b16 %v1301, %v1299
        %v1340 = vpack.c.b16 %v1304, %v1302
        %v1341 = vpack.c.b16 %v1305, %v1303
        %v1342 = vpack.c.b16 %v1308, %v1306
        %v1343 = vpack.c.b16 %v1309, %v1307
        %v1344 = vpack.c.b16 %v1312, %v1310
        %v1345 = vpack.c.b16 %v1313, %v1311
        %1378 = vmatprep.subr.bf16.mxu0 %v1329
        %1379 = vmatpush1.bf16.msra.mxu0 %v1328
        %1380 = vmatprep.subr.bf16.mxu0 %v1327
        %1381 = vmatpush1.bf16.msra.mxu0 %v1326
        %1382 = vmatprep.subr.bf16.mxu0 %v1325
        %1383 = vmatpush1.bf16.msra.mxu0 %v1324
        %1384 = vmatprep.subr.bf16.mxu0 %v1323
        %1385 = vmatpush1.bf16.msra.mxu0 %v1322
        %1386 = vmatprep.subr.bf16.mxu0 %v1321
        %1387 = vmatpush1.bf16.msra.mxu0 %v1320
        %1388 = vmatprep.subr.bf16.mxu0 %v1319
        %1389 = vmatpush1.bf16.msra.mxu0 %v1318
        %1390 = vmatprep.subr.bf16.mxu0 %v1317
        %1391 = vmatpush1.bf16.msra.mxu0 %v1316
        %1392 = vmatprep.subr.bf16.mxu0 %v1315
        %1393 = vmatpush1.bf16.msra.mxu0 %v1314
        %1394 = vmatprep.subr.bf16.mxu0 %v1345
        %1395 = vmatpush2.bf16.msra.mxu0 %v1344
        %1396 = vmatprep.subr.bf16.mxu0 %v1343
        %1397 = vmatpush2.bf16.msra.mxu0 %v1342
        %1398 = vmatprep.subr.bf16.mxu0 %v1341
        %1399 = vmatpush2.bf16.msra.mxu0 %v1340
        %1400 = vmatprep.subr.bf16.mxu0 %v1339
        %1401 = vmatpush2.bf16.msra.mxu0 %v1338
        %1402 = vmatprep.subr.bf16.mxu0 %v1337
        %1403 = vmatpush2.bf16.msra.mxu0 %v1336
        %1404 = vmatprep.subr.bf16.mxu0 %v1335
        %1405 = vmatpush2.bf16.msra.mxu0 %v1334
        %1406 = vmatprep.subr.bf16.mxu0 %v1333
        %1407 = vmatpush2.bf16.msra.mxu0 %v1332
        %1408 = vmatprep.subr.bf16.mxu0 %v1331
        %1409 = vmatpush2.bf16.msra.mxu0 %v1330
        %1410 = vmatprep.mubr.bf16.mxu0 %v1215
        %1411 = vmatmul.mubr.bf16.gmra.mxu0 %v1208
        %v1412 = vpop.f32.mrf.mxu0
        %v1413 = vadd.f32 0.0, %v1412
        %v1414 = vpop.f32.mrf.mxu0
        %v1415 = vadd.f32 0.0, %v1414
        %v1416 = vpop.f32.mrf.mxu0
        %v1417 = vpop.f32.mrf.mxu0
        %1418 = vdwg.mxu0
        %v1419 = vpack.c.b16 %v1196, %v1196
        %v1420 = vpack.c.b16 %v1197, %v1197
        %v1455 = vunpack.c.l.b16 %v1092
        %v1456 = vunpack.c.h.b16 %v1092
        %v1457 = vunpack.c.l.b16 %v1093
        %v1458 = vunpack.c.h.b16 %v1093
        %v1459 = vunpack.c.l.b16 %v1094
        %v1460 = vunpack.c.h.b16 %v1094
        %v1461 = vunpack.c.l.b16 %v1095
        %v1462 = vunpack.c.h.b16 %v1095
        %v1463 = vunpack.c.l.b16 %v1096
        %v1464 = vunpack.c.h.b16 %v1096
        %v1465 = vunpack.c.l.b16 %v1097
        %v1466 = vunpack.c.h.b16 %v1097
        %v1467 = vunpack.c.l.b16 %v1098
        %v1468 = vunpack.c.h.b16 %v1098
        %v1469 = vunpack.c.l.b16 %v1099
        %v1470 = vunpack.c.h.b16 %v1099
        %v1471 = vunpack.c.l.b16 %v1100
        %v1472 = vunpack.c.h.b16 %v1100
        %v1473 = vunpack.c.l.b16 %v1101
        %v1474 = vunpack.c.h.b16 %v1101
        %v1475 = vunpack.c.l.b16 %v1102
        %v1476 = vunpack.c.h.b16 %v1102
        %v1477 = vunpack.c.l.b16 %v1103
        %v1478 = vunpack.c.h.b16 %v1103
        %v1479 = vunpack.c.l.b16 %v1104
        %v1480 = vunpack.c.h.b16 %v1104
        %v1481 = vunpack.c.l.b16 %v1105
        %v1482 = vunpack.c.h.b16 %v1105
        %v1483 = vunpack.c.l.b16 %v1106
        %v1484 = vunpack.c.h.b16 %v1106
        %v1485 = vunpack.c.l.b16 %v1107
        %v1486 = vunpack.c.h.b16 %v1107
        %v1487 = vunpack.c.l.b16 %v1108
        %v1488 = vunpack.c.h.b16 %v1108
        %v1489 = vunpack.c.l.b16 %v1109
        %v1490 = vunpack.c.h.b16 %v1109
        %v1491 = vunpack.c.l.b16 %v1110
        %v1492 = vunpack.c.h.b16 %v1110
        %v1493 = vunpack.c.l.b16 %v1111
        %v1494 = vunpack.c.h.b16 %v1111
        %v1495 = vunpack.c.l.b16 %v1112
        %v1496 = vunpack.c.h.b16 %v1112
        %v1497 = vunpack.c.l.b16 %v1113
        %v1498 = vunpack.c.h.b16 %v1113
        %v1499 = vunpack.c.l.b16 %v1114
        %v1500 = vunpack.c.h.b16 %v1114
        %v1501 = vunpack.c.l.b16 %v1115
        %v1502 = vunpack.c.h.b16 %v1115
        %v1503 = vunpack.c.l.b16 %v1116
        %v1504 = vunpack.c.h.b16 %v1116
        %v1505 = vunpack.c.l.b16 %v1117
        %v1506 = vunpack.c.h.b16 %v1117
        %v1507 = vunpack.c.l.b16 %v1118
        %v1508 = vunpack.c.h.b16 %v1118
        %v1509 = vunpack.c.l.b16 %v1119
        %v1510 = vunpack.c.h.b16 %v1119
        %v1511 = vunpack.c.l.b16 %v1120
        %v1512 = vunpack.c.h.b16 %v1120
        %v1513 = vunpack.c.l.b16 %v1121
        %v1514 = vunpack.c.h.b16 %v1121
        %v1515 = vunpack.c.l.b16 %v1122
        %v1516 = vunpack.c.h.b16 %v1122
        %v1517 = vunpack.c.l.b16 %v1123
        %v1518 = vunpack.c.h.b16 %v1123
        %v1519 = vpack.c.b16 %v1457, %v1455
        %v1520 = vpack.c.b16 %v1458, %v1456
        %v1521 = vpack.c.b16 %v1461, %v1459
        %v1522 = vpack.c.b16 %v1462, %v1460
        %v1523 = vpack.c.b16 %v1465, %v1463
        %v1524 = vpack.c.b16 %v1466, %v1464
        %v1525 = vpack.c.b16 %v1469, %v1467
        %v1526 = vpack.c.b16 %v1470, %v1468
        %v1527 = vpack.c.b16 %v1473, %v1471
        %v1528 = vpack.c.b16 %v1474, %v1472
        %v1529 = vpack.c.b16 %v1477, %v1475
        %v1530 = vpack.c.b16 %v1478, %v1476
        %v1531 = vpack.c.b16 %v1481, %v1479
        %v1532 = vpack.c.b16 %v1482, %v1480
        %v1533 = vpack.c.b16 %v1485, %v1483
        %v1534 = vpack.c.b16 %v1486, %v1484
        %v1535 = vpack.c.b16 %v1489, %v1487
        %v1536 = vpack.c.b16 %v1490, %v1488
        %v1537 = vpack.c.b16 %v1493, %v1491
        %v1538 = vpack.c.b16 %v1494, %v1492
        %v1539 = vpack.c.b16 %v1497, %v1495
        %v1540 = vpack.c.b16 %v1498, %v1496
        %v1541 = vpack.c.b16 %v1501, %v1499
        %v1542 = vpack.c.b16 %v1502, %v1500
        %v1543 = vpack.c.b16 %v1505, %v1503
        %v1544 = vpack.c.b16 %v1506, %v1504
        %v1545 = vpack.c.b16 %v1509, %v1507
        %v1546 = vpack.c.b16 %v1510, %v1508
        %v1547 = vpack.c.b16 %v1513, %v1511
        %v1548 = vpack.c.b16 %v1514, %v1512
        %v1549 = vpack.c.b16 %v1517, %v1515
        %v1550 = vpack.c.b16 %v1518, %v1516
        %1583 = vmatprep.subr.bf16.mxu0 %v1534
        %1584 = vmatpush1.bf16.msra.mxu0 %v1533
        %1585 = vmatprep.subr.bf16.mxu0 %v1532
        %1586 = vmatpush1.bf16.msra.mxu0 %v1531
        %1587 = vmatprep.subr.bf16.mxu0 %v1530
        %1588 = vmatpush1.bf16.msra.mxu0 %v1529
        %1589 = vmatprep.subr.bf16.mxu0 %v1528
        %1590 = vmatpush1.bf16.msra.mxu0 %v1527
        %1591 = vmatprep.subr.bf16.mxu0 %v1526
        %1592 = vmatpush1.bf16.msra.mxu0 %v1525
        %1593 = vmatprep.subr.bf16.mxu0 %v1524
        %1594 = vmatpush1.bf16.msra.mxu0 %v1523
        %1595 = vmatprep.subr.bf16.mxu0 %v1522
        %1596 = vmatpush1.bf16.msra.mxu0 %v1521
        %1597 = vmatprep.subr.bf16.mxu0 %v1520
        %1598 = vmatpush1.bf16.msra.mxu0 %v1519
        %1599 = vmatprep.subr.bf16.mxu0 %v1550
        %1600 = vmatpush2.bf16.msra.mxu0 %v1549
        %1601 = vmatprep.subr.bf16.mxu0 %v1548
        %1602 = vmatpush2.bf16.msra.mxu0 %v1547
        %1603 = vmatprep.subr.bf16.mxu0 %v1546
        %1604 = vmatpush2.bf16.msra.mxu0 %v1545
        %1605 = vmatprep.subr.bf16.mxu0 %v1544
        %1606 = vmatpush2.bf16.msra.mxu0 %v1543
        %1607 = vmatprep.subr.bf16.mxu0 %v1542
        %1608 = vmatpush2.bf16.msra.mxu0 %v1541
        %1609 = vmatprep.subr.bf16.mxu0 %v1540
        %1610 = vmatpush2.bf16.msra.mxu0 %v1539
        %1611 = vmatprep.subr.bf16.mxu0 %v1538
        %1612 = vmatpush2.bf16.msra.mxu0 %v1537
        %1613 = vmatprep.subr.bf16.mxu0 %v1536
        %1614 = vmatpush2.bf16.msra.mxu0 %v1535
        %1615 = vmatprep.mubr.bf16.mxu0 %v1420
        %1616 = vmatmul.mubr.bf16.gmra.mxu0 %v1419
        %v1617 = vpop.f32.mrf.mxu0
        %v1618 = vadd.f32 0.0, %v1617
        %v1619 = vpop.f32.mrf.mxu0
        %v1620 = vadd.f32 0.0, %v1619
        %v1621 = vpop.f32.mrf.mxu0
        %v1622 = vpop.f32.mrf.mxu0
        %1623 = vdwg.mxu0
        %v1656 = vunpack.c.l.b16 %v1125
        %v1657 = vunpack.c.h.b16 %v1125
        %v1658 = vunpack.c.l.b16 %v1126
        %v1659 = vunpack.c.h.b16 %v1126
        %v1660 = vunpack.c.l.b16 %v1127
        %v1661 = vunpack.c.h.b16 %v1127
        %v1662 = vunpack.c.l.b16 %v1128
        %v1663 = vunpack.c.h.b16 %v1128
        %v1664 = vunpack.c.l.b16 %v1129
        %v1665 = vunpack.c.h.b16 %v1129
        %v1666 = vunpack.c.l.b16 %v1130
        %v1667 = vunpack.c.h.b16 %v1130
        %v1668 = vunpack.c.l.b16 %v1131
        %v1669 = vunpack.c.h.b16 %v1131
        %v1670 = vunpack.c.l.b16 %v1132
        %v1671 = vunpack.c.h.b16 %v1132
        %v1672 = vunpack.c.l.b16 %v1133
        %v1673 = vunpack.c.h.b16 %v1133
        %v1674 = vunpack.c.l.b16 %v1134
        %v1675 = vunpack.c.h.b16 %v1134
        %v1676 = vunpack.c.l.b16 %v1135
        %v1677 = vunpack.c.h.b16 %v1135
        %v1678 = vunpack.c.l.b16 %v1136
        %v1679 = vunpack.c.h.b16 %v1136
        %v1680 = vunpack.c.l.b16 %v1137
        %v1681 = vunpack.c.h.b16 %v1137
        %v1682 = vunpack.c.l.b16 %v1138
        %v1683 = vunpack.c.h.b16 %v1138
        %v1684 = vunpack.c.l.b16 %v1139
        %v1685 = vunpack.c.h.b16 %v1139
        %v1686 = vunpack.c.l.b16 %v1140
        %v1687 = vunpack.c.h.b16 %v1140
        %v1688 = vunpack.c.l.b16 %v1141
        %v1689 = vunpack.c.h.b16 %v1141
        %v1690 = vunpack.c.l.b16 %v1142
        %v1691 = vunpack.c.h.b16 %v1142
        %v1692 = vunpack.c.l.b16 %v1143
        %v1693 = vunpack.c.h.b16 %v1143
        %v1694 = vunpack.c.l.b16 %v1144
        %v1695 = vunpack.c.h.b16 %v1144
        %v1696 = vunpack.c.l.b16 %v1145
        %v1697 = vunpack.c.h.b16 %v1145
        %v1698 = vunpack.c.l.b16 %v1146
        %v1699 = vunpack.c.h.b16 %v1146
        %v1700 = vunpack.c.l.b16 %v1147
        %v1701 = vunpack.c.h.b16 %v1147
        %v1702 = vunpack.c.l.b16 %v1148
        %v1703 = vunpack.c.h.b16 %v1148
        %v1704 = vunpack.c.l.b16 %v1149
        %v1705 = vunpack.c.h.b16 %v1149
        %v1706 = vunpack.c.l.b16 %v1150
        %v1707 = vunpack.c.h.b16 %v1150
        %v1708 = vunpack.c.l.b16 %v1151
        %v1709 = vunpack.c.h.b16 %v1151
        %v1710 = vunpack.c.l.b16 %v1152
        %v1711 = vunpack.c.h.b16 %v1152
        %v1712 = vunpack.c.l.b16 %v1153
        %v1713 = vunpack.c.h.b16 %v1153
        %v1714 = vunpack.c.l.b16 %v1154
        %v1715 = vunpack.c.h.b16 %v1154
        %v1716 = vunpack.c.l.b16 %v1155
        %v1717 = vunpack.c.h.b16 %v1155
        %v1718 = vunpack.c.l.b16 %v1156
        %v1719 = vunpack.c.h.b16 %v1156
        %v1720 = vpack.c.b16 %v1658, %v1656
        %v1721 = vpack.c.b16 %v1659, %v1657
        %v1722 = vpack.c.b16 %v1662, %v1660
        %v1723 = vpack.c.b16 %v1663, %v1661
        %v1724 = vpack.c.b16 %v1666, %v1664
        %v1725 = vpack.c.b16 %v1667, %v1665
        %v1726 = vpack.c.b16 %v1670, %v1668
        %v1727 = vpack.c.b16 %v1671, %v1669
        %v1728 = vpack.c.b16 %v1674, %v1672
        %v1729 = vpack.c.b16 %v1675, %v1673
        %v1730 = vpack.c.b16 %v1678, %v1676
        %v1731 = vpack.c.b16 %v1679, %v1677
        %v1732 = vpack.c.b16 %v1682, %v1680
        %v1733 = vpack.c.b16 %v1683, %v1681
        %v1734 = vpack.c.b16 %v1686, %v1684
        %v1735 = vpack.c.b16 %v1687, %v1685
        %v1736 = vpack.c.b16 %v1690, %v1688
        %v1737 = vpack.c.b16 %v1691, %v1689
        %v1738 = vpack.c.b16 %v1694, %v1692
        %v1739 = vpack.c.b16 %v1695, %v1693
        %v1740 = vpack.c.b16 %v1698, %v1696
        %v1741 = vpack.c.b16 %v1699, %v1697
        %v1742 = vpack.c.b16 %v1702, %v1700
        %v1743 = vpack.c.b16 %v1703, %v1701
        %v1744 = vpack.c.b16 %v1706, %v1704
        %v1745 = vpack.c.b16 %v1707, %v1705
        %v1746 = vpack.c.b16 %v1710, %v1708
        %v1747 = vpack.c.b16 %v1711, %v1709
        %v1748 = vpack.c.b16 %v1714, %v1712
        %v1749 = vpack.c.b16 %v1715, %v1713
        %v1750 = vpack.c.b16 %v1718, %v1716
        %v1751 = vpack.c.b16 %v1719, %v1717
        %1784 = vmatprep.subr.bf16.mxu0 %v1735
        %1785 = vmatpush1.bf16.msra.mxu0 %v1734
        %1786 = vmatprep.subr.bf16.mxu0 %v1733
        %1787 = vmatpush1.bf16.msra.mxu0 %v1732
        %1788 = vmatprep.subr.bf16.mxu0 %v1731
        %1789 = vmatpush1.bf16.msra.mxu0 %v1730
        %1790 = vmatprep.subr.bf16.mxu0 %v1729
        %1791 = vmatpush1.bf16.msra.mxu0 %v1728
        %1792 = vmatprep.subr.bf16.mxu0 %v1727
        %1793 = vmatpush1.bf16.msra.mxu0 %v1726
        %1794 = vmatprep.subr.bf16.mxu0 %v1725
        %1795 = vmatpush1.bf16.msra.mxu0 %v1724
        %1796 = vmatprep.subr.bf16.mxu0 %v1723
        %1797 = vmatpush1.bf16.msra.mxu0 %v1722
        %1798 = vmatprep.subr.bf16.mxu0 %v1721
        %1799 = vmatpush1.bf16.msra.mxu0 %v1720
        %1800 = vmatprep.subr.bf16.mxu0 %v1751
        %1801 = vmatpush2.bf16.msra.mxu0 %v1750
        %1802 = vmatprep.subr.bf16.mxu0 %v1749
        %1803 = vmatpush2.bf16.msra.mxu0 %v1748
        %1804 = vmatprep.subr.bf16.mxu0 %v1747
        %1805 = vmatpush2.bf16.msra.mxu0 %v1746
        %1806 = vmatprep.subr.bf16.mxu0 %v1745
        %1807 = vmatpush2.bf16.msra.mxu0 %v1744
        %1808 = vmatprep.subr.bf16.mxu0 %v1743
        %1809 = vmatpush2.bf16.msra.mxu0 %v1742
        %1810 = vmatprep.subr.bf16.mxu0 %v1741
        %1811 = vmatpush2.bf16.msra.mxu0 %v1740
        %1812 = vmatprep.subr.bf16.mxu0 %v1739
        %1813 = vmatpush2.bf16.msra.mxu0 %v1738
        %1814 = vmatprep.subr.bf16.mxu0 %v1737
        %1815 = vmatpush2.bf16.msra.mxu0 %v1736
        %1816 = vmatprep.mubr.bf16.mxu0 %v1420
        %1817 = vmatmul.mubr.bf16.gmra.mxu0 %v1419
        %v1818 = vpop.f32.mrf.mxu0
        %v1819 = vadd.f32 %v1413, %v1818
        %v1820 = vpop.f32.mrf.mxu0
        %v1821 = vadd.f32 %v1415, %v1820
        %v1822 = vpop.f32.mrf.mxu0
        %v1823 = vpop.f32.mrf.mxu0
        %1824 = vdwg.mxu0
        %v1826 = vlaneseq
        %v1827 = vshrl.u32 %v1826, 7
        %v1828 = vsub.s32 0, %v1827
        %v1829 = vrot.slane %v1191, %v1828
        %v1830 = vlaneseq
        %v1831 = vshrl.u32 %v1830, 7
        %v1832 = vsub.s32 1, %v1831
        %v1833 = vrot.slane %v1191, %v1832
        %v1836 = vadd.f32 %v1819, %v1829
        %v1837 = vadd.f32 %v1821, %v1833
        %v1838 = vrot.slane %v1618, 7
        %v1839 = vrot.slane %v1620, 7
        %v1840 = vsel %vm1034, 0.0, %v1838
        %v1841 = vsel %vm1034, 0.0, %v1839
        %v1842 = vadd.f32 %v1836, %v1840
        %v1843 = vadd.f32 %v1837, %v1841
        %v1844 = vrot.slane %v1842, 4
        %v1845 = vadd.f32 %v1842, %v1844
        %v1846 = vrot.slane %v1845, 2
        %v1847 = vadd.f32 %v1845, %v1846
        %v1848 = vrot.slane %v1847, 1
        %v1849 = vadd.f32 %v1847, %v1848
        %v1850 = vrot.slane %v1843, 4
        %v1851 = vadd.f32 %v1843, %v1850
        %v1852 = vrot.slane %v1851, 2
        %v1853 = vadd.f32 %v1851, %v1852
        %v1854 = vrot.slane %v1853, 1
        %v1855 = vadd.f32 %v1853, %v1854
        %v1856 = vmul.f32 %v1849, %v1053
        %v1857 = vmul.f32 %v1855, %v1053
        %v1858 = vsub.f32 %v1842, %v1856
        %v1859 = vsub.f32 %v1843, %v1857
        %v1860 = vmul.f32 %v1858, %v1858
        %v1861 = vmul.f32 %v1859, %v1859
        %v1862 = vrot.slane %v1860, 4
        %v1863 = vadd.f32 %v1860, %v1862
        %v1864 = vrot.slane %v1863, 2
        %v1865 = vadd.f32 %v1863, %v1864
        %v1866 = vrot.slane %v1865, 1
        %v1867 = vadd.f32 %v1865, %v1866
        %v1868 = vrot.slane %v1861, 4
        %v1869 = vadd.f32 %v1861, %v1868
        %v1870 = vrot.slane %v1869, 2
        %v1871 = vadd.f32 %v1869, %v1870
        %v1872 = vrot.slane %v1871, 1
        %v1873 = vadd.f32 %v1871, %v1872
        %v1874 = vmul.f32 %v1867, %v1053
        %v1875 = vmul.f32 %v1873, %v1053
        %v1876 = vadd.f32 %v1874, 1e-05
        %v1877 = vadd.f32 %v1875, 1e-05
        %v1878 = vrsqrt.pop %v1876
        %v1879 = vrsqrt.pop %v1877
        %v1880 = vmul.f32 %v1858, %v1878
        %v1881 = vmul.f32 %v1859, %v1879
        %v1882 = vld [vmem:[#allocation2] sm:$0xff]
        %v1883 = vunpack.c.l.bf16 %v1882
        %v1884 = vunpack.c.h.bf16 %v1882
        %v1885 = vadd.f32 %v1883, %v1880
        %v1886 = vadd.f32 %v1884, %v1881
        %v1887 = vpack.c.bf16 %v1885, %v1885
        %v1888 = vpack.c.bf16 %v1886, %v1886
        %v1891 = vunpack.c.l.b16 %v1887
        %v1892 = vunpack.c.l.b16 %v1888
        %v1893 = vpack.c.b16 %v1892, %v1891
        %1895 = vst [vmem:[#allocation2] sm:$0xff] %v1893
        %p1896 = scmp.eq.s32.totalorder %s25, 2
        // Predicated region
        $region45: #{generator_forward.10} parent=31 // pred_check
          %p1897 = pneg %p1896
        $region46: #{generator_forward.10} parent=31 // pred_check_branch
          %1899 = sbr.rel (%p1897) target = $region48
        $region47: #{generator_forward.10} parent=31 // pred_region
          %v1900 = vld [vmem:[#allocation2] sm:$0xff]
          %1901 = vst [vmem:[%s266] sm:$0xff] %v1900
        $region48: #{generator_forward.10} parent=31 // pred_fallthru
          _
        %p1902 = scmp.lt.s32.totalorder %s24, 1
        %s1903 = scalar_select %p1902, %s24, 1
        %s1904 = smul.addr %s1903, 2
        %s1905 = smul.addr %s1904, 4
        %s1906 = scalar_lea.vmem %s3, %s1905
        // Predicated region
        $region49: #{generator_forward.10} parent=31 // pred_check
          %p1907 = pneg %p128
        $region50: #{generator_forward.10} parent=31 // pred_check_branch
          %1909 = sbr.rel (%p1907) target = $region52
        $region51: #{generator_forward.10} parent=31 // pred_region
          _
        $region52: #{generator_forward.10} parent=31 // pred_fallthru
          _
      $region32: #{generator_forward.10} parent=5 // pred_fallthru
        _
      %p1910 = scmp.le.s32.totalorder 2, %s15
      // Predicated region
      $region53: #{generator_forward.10} parent=5 // pred_check
        %p1911 = pneg %p1910
      $region54: #{generator_forward.10} parent=5 // pred_check_branch
        %1913 = sbr.rel (%p1911) target = $region56
      $region55: #{generator_forward.10} parent=5 // pred_region
        %s1914 = ssub.s32 %s15, 2
        // Predicated region
        $region57: #{generator_forward.10} parent=55 // pred_check
          %p1915 = pneg %p134
        $region58: #{generator_forward.10} parent=55 // pred_check_branch
          %1917 = sbr.rel (%p1915) target = $region60
        $region59: #{generator_forward.10} parent=55 // pred_region
          %p1918 = scmp.lt.s32.totalorder %s26, 1
          %s1919 = scalar_select %p1918, %s26, 1
          %s1920 = smul.addr %s1919, 2
          %s1921 = smul.addr %s1920, 4
          %s1922 = scalar_lea.vmem %s3, %s1921
        $region60: #{generator_forward.10} parent=55 // pred_fallthru
          _
      $region56: #{generator_forward.10} parent=5 // pred_fallthru
        _
    $region6: #{generator_forward.10} parent=1 // loop_footer
      %s19 = sadd.s32 1, %s15
    $region7: #{generator_forward.10} parent=1 // loop_footer_branch
      %14 = sbr.rel target = $region3
    $region8: #{generator_forward.10} parent=1 // loop_exit
      _
    %1923 = vsyncpa [#allocation5], 1
    %s1924 = scalar_lea.sflag [#allocation5], 1
    %1925 = vsyncpa %s1924, 1
    %1926 = vsyncpa [#allocation7], 1
    %s1927 = scalar_lea.sflag [#allocation7], 1
    %1928 = vsyncpa %s1927, 1

// kernel: generator_forward.11
$region0: #{generator_forward.11}
  #allocation0 [shape = 'u32[]', space=smem, size = 0x4, offset = 0x4, fixed_abs, tag = 'smem constant byte address 0x4 - core index']
  #allocation1 [shape = 'u32[144,128]{1,0:T(1,128)}', space=vmem, size = 0x12000, scoped, tag = 'internal scratch']
  %s0 = inlined_call_operand.vmem [shape: bf16[2,8,256], index: 0, kind: input, shape index: {}]
  %s1 = inlined_call_operand.vmem [shape: bf16[2,256,256], index: 1, kind: input, shape index: {}]
  %s2 = inlined_call_operand.vmem [shape: f32[1,256], index: 2, kind: input, shape index: {}]
  %s3 = inlined_call_operand.vmem [shape: bf16[2,8,256], index: 3, kind: output, shape index: {}]
  %s4 = sld [smem:[#allocation0]]
  $region45: #{generator_forward.11} parent=0
    _
  %s6 = ssub.s32 1, %s4
  %s7 = scalar_select 0, %s6, %s4
  loop: start=0, step=1, limit=4
  $region2: #{generator_forward.11} parent=0 // loop_pre_header
    _
  $region3: #{generator_forward.11} parent=0 // loop_header
    %s9 = sphi 0, %s13
    %p10 = scmp.ge.s32.totalorder %s9, 4
    %s19 = sphi 0, %s21
    %s22 = sphi 0, %s19
    %s23 = sphi 0, %s22
    %s39 = sphi 0, %s23
    %s43 = sphi 0, %s43
    %s45 = sphi 0, %s43
    %s46 = sphi 0, %s45
    %s60 = sphi 0, %s46
    %s64 = sphi 0, %s64
    %s66 = sphi 0, %s64
    %s67 = sphi 0, %s66
    %s81 = sphi 0, %s67
    %s87 = sphi 0, %s89
    %s90 = sphi 0, %s87
    %s91 = sphi 0, %s90
    %s107 = sphi 0, %s91
  $region4: #{generator_forward.11} parent=0 // loop_header_branch
    %12 = sbr.rel (%p10) target = $region8
  $region5: #{generator_forward.11} parent=0 // loop_body
    %s14 = ssub.s32 %s9, 1
    %s15 = ssub.s32 %s9, 2
    %s16 = sadd.s32 %s9, 1
    %s17 = ssub.s32 %s9, %s16
    %p18 = scmp.eq.s32.totalorder %s17, 0
    %s20 = sadd.s32 %s19, 1
    %s21 = scalar_select %p18, %s19, %s20
    %p24 = pneg %p18
    %p25 = scmp.eq.s32.totalorder %s9, 1
    %p26 = por %p24, %p25
    %p27 = scmp.ne.s32.totalorder %s19, %s22
    %p28 = scmp.eq.s32.totalorder %s9, 0
    %p29 = por %p27, %p28
    %p30 = scmp.ne.s32.totalorder %s19, %s22
    %p31 = scmp.eq.s32.totalorder %s14, 1
    %p32 = por %p30, %p31
    %p33 = scmp.ne.s32.totalorder %s22, %s23
    %p34 = scmp.eq.s32.totalorder %s14, 0
    %p35 = por %p33, %p34
    %p36 = scmp.ne.s32.totalorder %s22, %s23
    %p37 = scmp.eq.s32.totalorder %s15, 1
    %p38 = por %p36, %p37
    %p40 = scmp.ne.s32.totalorder %s23, %s39
    %p41 = scmp.eq.s32.totalorder %s15, 0
    %p42 = por %p40, %p41
    %s44 = sadd.s32 %s43, 1
    %p47 = scmp.eq.s32.totalorder %s9, 1
    %p48 = scmp.ne.s32.totalorder %s43, %s45
    %p49 = scmp.eq.s32.totalorder %s9, 0
    %p50 = por %p48, %p49
    %p51 = scmp.ne.s32.totalorder %s43, %s45
    %p52 = scmp.eq.s32.totalorder %s14, 1
    %p53 = por %p51, %p52
    %p54 = scmp.ne.s32.totalorder %s45, %s46
    %p55 = scmp.eq.s32.totalorder %s14, 0
    %p56 = por %p54, %p55
    %p57 = scmp.ne.s32.totalorder %s45, %s46
    %p58 = scmp.eq.s32.totalorder %s15, 1
    %p59 = por %p57, %p58
    %p61 = scmp.ne.s32.totalorder %s46, %s60
    %p62 = scmp.eq.s32.totalorder %s15, 0
    %p63 = por %p61, %p62
    %s65 = sadd.s32 %s64, 1
    %p68 = scmp.eq.s32.totalorder %s9, 1
    %p69 = scmp.ne.s32.totalorder %s64, %s66
    %p70 = scmp.eq.s32.totalorder %s9, 0
    %p71 = por %p69, %p70
    %p72 = scmp.ne.s32.totalorder %s64, %s66
    %p73 = scmp.eq.s32.totalorder %s14, 1
    %p74 = por %p72, %p73
    %p75 = scmp.ne.s32.totalorder %s66, %s67
    %p76 = scmp.eq.s32.totalorder %s14, 0
    %p77 = por %p75, %p76
    %p78 = scmp.ne.s32.totalorder %s66, %s67
    %p79 = scmp.eq.s32.totalorder %s15, 1
    %p80 = por %p78, %p79
    %p82 = scmp.ne.s32.totalorder %s67, %s81
    %p83 = scmp.eq.s32.totalorder %s15, 0
    %p84 = por %p82, %p83
    %s85 = ssub.s32 %s9, %s16
    %p86 = scmp.eq.s32.totalorder %s85, 0
    %s88 = sadd.s32 %s87, 1
    %s89 = scalar_select %p86, %s87, %s88
    %p92 = pneg %p86
    %p93 = scmp.eq.s32.totalorder %s9, 1
    %p94 = por %p92, %p93
    %p95 = scmp.ne.s32.totalorder %s87, %s90
    %p96 = scmp.eq.s32.totalorder %s9, 0
    %p97 = por %p95, %p96
    %p98 = scmp.ne.s32.totalorder %s87, %s90
    %p99 = scmp.eq.s32.totalorder %s14, 1
    %p100 = por %p98, %p99
    %p101 = scmp.ne.s32.totalorder %s90, %s91
    %p102 = scmp.eq.s32.totalorder %s14, 0
    %p103 = por %p101, %p102
    %p104 = scmp.ne.s32.totalorder %s90, %s91
    %p105 = scmp.eq.s32.totalorder %s15, 1
    %p106 = por %p104, %p105
    %p108 = scmp.ne.s32.totalorder %s91, %s107
    %p109 = scmp.eq.s32.totalorder %s15, 0
    %p110 = por %p108, %p109
    %p111 = scmp.le.s32.totalorder 1, %s9
    %p112 = scmp.lt.s32.totalorder %s9, 3
    %p113 = pnand %p111, %p112
    %p114 = pneg %p113
    // Predicated region
    $region9: #{generator_forward.11} parent=5 // pred_check
      _
    $region10: #{generator_forward.11} parent=5 // pred_check_branch
      %116 = sbr.rel (%p113) target = $region12
    $region11: #{generator_forward.11} parent=5 // pred_region
      %s117 = ssub.s32 %s9, 1
      // Predicated region
      $region13: #{generator_forward.11} parent=11 // pred_check
        %p118 = pneg %p56
      $region14: #{generator_forward.11} parent=11 // pred_check_branch
        %120 = sbr.rel (%p118) target = $region16
      $region15: #{generator_forward.11} parent=11 // pred_region
        _
      $region16: #{generator_forward.11} parent=11 // pred_fallthru
        _
      // Predicated region
      $region17: #{generator_forward.11} parent=11 // pred_check
        %p121 = pneg %p77
      $region18: #{generator_forward.11} parent=11 // pred_check_branch
        %123 = sbr.rel (%p121) target = $region20
      $region19: #{generator_forward.11} parent=11 // pred_region
        _
      $region20: #{generator_forward.11} parent=11 // pred_fallthru
        _
    $region12: #{generator_forward.11} parent=5 // pred_fallthru
      _
    %p124 = scmp.lt.s32.totalorder %s9, 2
    // Predicated region
    $region21: #{generator_forward.11} parent=5 // pred_check
      %p125 = pneg %p124
    $region22: #{generator_forward.11} parent=5 // pred_check_branch
      %127 = sbr.rel (%p125) target = $region24
    $region23: #{generator_forward.11} parent=5 // pred_region
      // Predicated region
      $region25: #{generator_forward.11} parent=23 // pred_check
        %p128 = pneg %p29
      $region26: #{generator_forward.11} parent=23 // pred_check_branch
        %130 = sbr.rel (%p128) target = $region28
      $region27: #{generator_forward.11} parent=23 // pred_region
        %p131 = scmp.lt.s32.totalorder %s9, 1
        %s132 = scalar_select %p131, %s9, 1
        %s133 = smul.addr %s132, 2
        %s134 = smul.addr %s133, 4
        %s135 = scalar_lea.vmem %s0, %s134
      $region28: #{generator_forward.11} parent=23 // pred_fallthru
        _
    $region24: #{generator_forward.11} parent=5 // pred_fallthru
      _
    %p136 = scmp.le.s32.totalorder 1, %s9
    %p137 = scmp.lt.s32.totalorder %s9, 3
    %p138 = pnand %p136, %p137
    %p139 = pneg %p138
    // Predicated region
    $region29: #{generator_forward.11} parent=5 // pred_check
      _
    $region30: #{generator_forward.11} parent=5 // pred_check_branch
      %141 = sbr.rel (%p138) target = $region32
    $region31: #{generator_forward.11} parent=5 // pred_region
      %s142 = ssub.s32 %s9, 1
      %p143 = scmp.lt.s32.totalorder %s14, 1
      %s144 = scalar_select %p143, %s14, 1
      %s145 = smul.addr %s144, 2
      %s146 = smul.addr %s145, 4
      %s147 = scalar_lea.vmem %s0, %s146
      %p148 = pneg %p35
      %p149 = pneg %p32
      %p150 = pneg %p56
      %p151 = pneg %p53
      %p152 = pneg %p77
      %p153 = pneg %p74
      %p154 = pneg %p103
      %p155 = pneg %p100
      %p156 = scmp.lt.s32.totalorder %s14, 1
      %s157 = scalar_select %p156, %s14, 1
      %s158 = smul.addr %s157, 2
      %s159 = smul.addr %s158, 4
      %s160 = scalar_lea.vmem %s3, %s159
      %p161 = scmp.lt.s32.totalorder %s14, 1
      %s162 = scalar_select %p161, %s14, 1
      %s163 = smul.addr %s162, 2
      %s164 = smul.addr %s163, 4
      %s165 = scalar_lea.vmem %s0, %s164
      %p166 = scmp.lt.s32.totalorder %s14, 1
      %s167 = scalar_select %p166, %s14, 1
      %s168 = smul.addr %s167, 2
      %s169 = smul.addr %s168, 4
      %s170 = scalar_lea.vmem %s3, %s169
      %v171 = vld [vmem:[%s165] sm:$0xff]
      %v172 = vlaneseq
      %v173 = vshrl.u32 %v172, 7
      %v174 = vld [vmem:[%s1] sm:$0xff]
      %v175 = vld [vmem:[%s1 + $0x8] sm:$0xff]
      %v176 = vld [vmem:[%s1 + $0x10] sm:$0xff]
      %v177 = vld [vmem:[%s1 + $0x18] sm:$0xff]
      %v178 = vld [vmem:[%s1 + $0x20] sm:$0xff]
      %v179 = vld [vmem:[%s1 + $0x28] sm:$0xff]
      %v180 = vld [vmem:[%s1 + $0x30] sm:$0xff]
      %v181 = vld [vmem:[%s1 + $0x38] sm:$0xff]
      %v182 = vld [vmem:[%s1 + $0x40] sm:$0xff]
      %v183 = vld [vmem:[%s1 + $0x48] sm:$0xff]
      %v184 = vld [vmem:[%s1 + $0x50] sm:$0xff]
      %v185 = vld [vmem:[%s1 + $0x58] sm:$0xff]
      %v186 = vld [vmem:[%s1 + $0x60] sm:$0xff]
      %v187 = vld [vmem:[%s1 + $0x68] sm:$0xff]
      %v188 = vld [vmem:[%s1 + $0x70] sm:$0xff]
      %v189 = vld [vmem:[%s1 + $0x78] sm:$0xff]
      %v190 = vld [vmem:[%s1 + $0x80] sm:$0xff]
      %v191 = vld [vmem:[%s1 + $0x88] sm:$0xff]
      %v192 = vld [vmem:[%s1 + $0x90] sm:$0xff]
      %v193 = vld [vmem:[%s1 + $0x98] sm:$0xff]
      %v194 = vld [vmem:[%s1 + $0xa0] sm:$0xff]
      %v195 = vld [vmem:[%s1 + $0xa8] sm:$0xff]
      %v196 = vld [vmem:[%s1 + $0xb0] sm:$0xff]
      %v197 = vld [vmem:[%s1 + $0xb8] sm:$0xff]
      %v198 = vld [vmem:[%s1 + $0xc0] sm:$0xff]
      %v199 = vld [vmem:[%s1 + $0xc8] sm:$0xff]
      %v200 = vld [vmem:[%s1 + $0xd0] sm:$0xff]
      %v201 = vld [vmem:[%s1 + $0xd8] sm:$0xff]
      %v202 = vld [vmem:[%s1 + $0xe0] sm:$0xff]
      %v203 = vld [vmem:[%s1 + $0xe8] sm:$0xff]
      %v204 = vld [vmem:[%s1 + $0xf0] sm:$0xff]
      %v205 = vld [vmem:[%s1 + $0xf8] sm:$0xff]
      %s206 = scalar_lea.vmem %s1, 256
      %v207 = vld [vmem:[%s206] sm:$0xff]
      %v208 = vld [vmem:[%s206 + $0x8] sm:$0xff]
      %v209 = vld [vmem:[%s206 + $0x10] sm:$0xff]
      %v210 = vld [vmem:[%s206 + $0x18] sm:$0xff]
      %v211 = vld [vmem:[%s206 + $0x20] sm:$0xff]
      %v212 = vld [vmem:[%s206 + $0x28] sm:$0xff]
      %v213 = vld [vmem:[%s206 + $0x30] sm:$0xff]
      %v214 = vld [vmem:[%s206 + $0x38] sm:$0xff]
      %v215 = vld [vmem:[%s206 + $0x40] sm:$0xff]
      %v216 = vld [vmem:[%s206 + $0x48] sm:$0xff]
      %v217 = vld [vmem:[%s206 + $0x50] sm:$0xff]
      %v218 = vld [vmem:[%s206 + $0x58] sm:$0xff]
      %v219 = vld [vmem:[%s206 + $0x60] sm:$0xff]
      %v220 = vld [vmem:[%s206 + $0x68] sm:$0xff]
      %v221 = vld [vmem:[%s206 + $0x70] sm:$0xff]
      %v222 = vld [vmem:[%s206 + $0x78] sm:$0xff]
      %v223 = vld [vmem:[%s206 + $0x80] sm:$0xff]
      %v224 = vld [vmem:[%s206 + $0x88] sm:$0xff]
      %v225 = vld [vmem:[%s206 + $0x90] sm:$0xff]
      %v226 = vld [vmem:[%s206 + $0x98] sm:$0xff]
      %v227 = vld [vmem:[%s206 + $0xa0] sm:$0xff]
      %v228 = vld [vmem:[%s206 + $0xa8] sm:$0xff]
      %v229 = vld [vmem:[%s206 + $0xb0] sm:$0xff]
      %v230 = vld [vmem:[%s206 + $0xb8] sm:$0xff]
      %v231 = vld [vmem:[%s206 + $0xc0] sm:$0xff]
      %v232 = vld [vmem:[%s206 + $0xc8] sm:$0xff]
      %v233 = vld [vmem:[%s206 + $0xd0] sm:$0xff]
      %v234 = vld [vmem:[%s206 + $0xd8] sm:$0xff]
      %v235 = vld [vmem:[%s206 + $0xe0] sm:$0xff]
      %v236 = vld [vmem:[%s206 + $0xe8] sm:$0xff]
      %v237 = vld [vmem:[%s206 + $0xf0] sm:$0xff]
      %v238 = vld [vmem:[%s206 + $0xf8] sm:$0xff]
      %v240 = vunpack.c.l.b16 %v171
      %v241 = vunpack.c.h.b16 %v171
      %v242 = vpack.c.b16 %v240, %v240
      %v243 = vpack.c.b16 %v241, %v241
      %v278 = vunpack.c.l.b16 %v207
      %v279 = vunpack.c.h.b16 %v207
      %v280 = vunpack.c.l.b16 %v208
      %v281 = vunpack.c.h.b16 %v208
      %v282 = vunpack.c.l.b16 %v209
      %v283 = vunpack.c.h.b16 %v209
      %v284 = vunpack.c.l.b16 %v210
      %v285 = vunpack.c.h.b16 %v210
      %v286 = vunpack.c.l.b16 %v211
      %v287 = vunpack.c.h.b16 %v211
      %v288 = vunpack.c.l.b16 %v212
      %v289 = vunpack.c.h.b16 %v212
      %v290 = vunpack.c.l.b16 %v213
      %v291 = vunpack.c.h.b16 %v213
      %v292 = vunpack.c.l.b16 %v214
      %v293 = vunpack.c.h.b16 %v214
      %v294 = vunpack.c.l.b16 %v215
      %v295 = vunpack.c.h.b16 %v215
      %v296 = vunpack.c.l.b16 %v216
      %v297 = vunpack.c.h.b16 %v216
      %v298 = vunpack.c.l.b16 %v217
      %v299 = vunpack.c.h.b16 %v217
      %v300 = vunpack.c.l.b16 %v218
      %v301 = vunpack.c.h.b16 %v218
      %v302 = vunpack.c.l.b16 %v219
      %v303 = vunpack.c.h.b16 %v219
      %v304 = vunpack.c.l.b16 %v220
      %v305 = vunpack.c.h.b16 %v220
      %v306 = vunpack.c.l.b16 %v221
      %v307 = vunpack.c.h.b16 %v221
      %v308 = vunpack.c.l.b16 %v222
      %v309 = vunpack.c.h.b16 %v222
      %v310 = vunpack.c.l.b16 %v223
      %v311 = vunpack.c.h.b16 %v223
      %v312 = vunpack.c.l.b16 %v224
      %v313 = vunpack.c.h.b16 %v224
      %v314 = vunpack.c.l.b16 %v225
      %v315 = vunpack.c.h.b16 %v225
      %v316 = vunpack.c.l.b16 %v226
      %v317 = vunpack.c.h.b16 %v226
      %v318 = vunpack.c.l.b16 %v227
      %v319 = vunpack.c.h.b16 %v227
      %v320 = vunpack.c.l.b16 %v228
      %v321 = vunpack.c.h.b16 %v228
      %v322 = vunpack.c.l.b16 %v229
      %v323 = vunpack.c.h.b16 %v229
      %v324 = vunpack.c.l.b16 %v230
      %v325 = vunpack.c.h.b16 %v230
      %v326 = vunpack.c.l.b16 %v231
      %v327 = vunpack.c.h.b16 %v231
      %v328 = vunpack.c.l.b16 %v232
      %v329 = vunpack.c.h.b16 %v232
      %v330 = vunpack.c.l.b16 %v233
      %v331 = vunpack.c.h.b16 %v233
      %v332 = vunpack.c.l.b16 %v234
      %v333 = vunpack.c.h.b16 %v234
      %v334 = vunpack.c.l.b16 %v235
      %v335 = vunpack.c.h.b16 %v235
      %v336 = vunpack.c.l.b16 %v236
      %v337 = vunpack.c.h.b16 %v236
      %v338 = vunpack.c.l.b16 %v237
      %v339 = vunpack.c.h.b16 %v237
      %v340 = vunpack.c.l.b16 %v238
      %v341 = vunpack.c.h.b16 %v238
      %v342 = vpack.c.b16 %v280, %v278
      %v343 = vpack.c.b16 %v281, %v279
      %v344 = vpack.c.b16 %v284, %v282
      %v345 = vpack.c.b16 %v285, %v283
      %v346 = vpack.c.b16 %v288, %v286
      %v347 = vpack.c.b16 %v289, %v287
      %v348 = vpack.c.b16 %v292, %v290
      %v349 = vpack.c.b16 %v293, %v291
      %v350 = vpack.c.b16 %v296, %v294
      %v351 = vpack.c.b16 %v297, %v295
      %v352 = vpack.c.b16 %v300, %v298
      %v353 = vpack.c.b16 %v301, %v299
      %v354 = vpack.c.b16 %v304, %v302
      %v355 = vpack.c.b16 %v305, %v303
      %v356 = vpack.c.b16 %v308, %v306
      %v357 = vpack.c.b16 %v309, %v307
      %v358 = vpack.c.b16 %v312, %v310
      %v359 = vpack.c.b16 %v313, %v311
      %v360 = vpack.c.b16 %v316, %v314
      %v361 = vpack.c.b16 %v317, %v315
      %v362 = vpack.c.b16 %v320, %v318
      %v363 = vpack.c.b16 %v321, %v319
      %v364 = vpack.c.b16 %v324, %v322
      %v365 = vpack.c.b16 %v325, %v323
      %v366 = vpack.c.b16 %v328, %v326
      %v367 = vpack.c.b16 %v329, %v327
      %v368 = vpack.c.b16 %v332, %v330
      %v369 = vpack.c.b16 %v333, %v331
      %v370 = vpack.c.b16 %v336, %v334
      %v371 = vpack.c.b16 %v337, %v335
      %v372 = vpack.c.b16 %v340, %v338
      %v373 = vpack.c.b16 %v341, %v339
      %406 = vmatprep.subr.bf16.mxu0 %v357
      %407 = vmatpush1.bf16.msra.mxu0 %v356
      %408 = vmatprep.subr.bf16.mxu0 %v355
      %409 = vmatpush1.bf16.msra.mxu0 %v354
      %410 = vmatprep.subr.bf16.mxu0 %v353
      %411 = vmatpush1.bf16.msra.mxu0 %v352
      %412 = vmatprep.subr.bf16.mxu0 %v351
      %413 = vmatpush1.bf16.msra.mxu0 %v350
      %414 = vmatprep.subr.bf16.mxu0 %v349
      %415 = vmatpush1.bf16.msra.mxu0 %v348
      %416 = vmatprep.subr.bf16.mxu0 %v347
      %417 = vmatpush1.bf16.msra.mxu0 %v346
      %418 = vmatprep.subr.bf16.mxu0 %v345
      %419 = vmatpush1.bf16.msra.mxu0 %v344
      %420 = vmatprep.subr.bf16.mxu0 %v343
      %421 = vmatpush1.bf16.msra.mxu0 %v342
      %422 = vmatprep.subr.bf16.mxu0 %v373
      %423 = vmatpush2.bf16.msra.mxu0 %v372
      %424 = vmatprep.subr.bf16.mxu0 %v371
      %425 = vmatpush2.bf16.msra.mxu0 %v370
      %426 = vmatprep.subr.bf16.mxu0 %v369
      %427 = vmatpush2.bf16.msra.mxu0 %v368
      %428 = vmatprep.subr.bf16.mxu0 %v367
      %429 = vmatpush2.bf16.msra.mxu0 %v366
      %430 = vmatprep.subr.bf16.mxu0 %v365
      %431 = vmatpush2.bf16.msra.mxu0 %v364
      %432 = vmatprep.subr.bf16.mxu0 %v363
      %433 = vmatpush2.bf16.msra.mxu0 %v362
      %434 = vmatprep.subr.bf16.mxu0 %v361
      %435 = vmatpush2.bf16.msra.mxu0 %v360
      %436 = vmatprep.subr.bf16.mxu0 %v359
      %437 = vmatpush2.bf16.msra.mxu0 %v358
      %438 = vmatprep.mubr.bf16.mxu0 %v243
      %439 = vmatmul.mubr.bf16.gmra.mxu0 %v242
      %v440 = vpop.f32.mrf.mxu0
      %v441 = vadd.f32 0.0, %v440
      %v442 = vpop.f32.mrf.mxu0
      %v443 = vadd.f32 0.0, %v442
      %v444 = vpop.f32.mrf.mxu0
      %v445 = vpop.f32.mrf.mxu0
      %446 = vdwg.mxu0
      %vm447 = vcmp.ge.s32.totalorder %v173, 7
      %v448 = vrot.slane %v441, 1
      %v449 = vrot.slane %v443, 1
      %v450 = vsel %vm447, 0.0, %v448
      %v451 = vsel %vm447, 0.0, %v449
      %v484 = vunpack.c.l.b16 %v174
      %v485 = vunpack.c.h.b16 %v174
      %v486 = vunpack.c.l.b16 %v175
      %v487 = vunpack.c.h.b16 %v175
      %v488 = vunpack.c.l.b16 %v176
      %v489 = vunpack.c.h.b16 %v176
      %v490 = vunpack.c.l.b16 %v177
      %v491 = vunpack.c.h.b16 %v177
      %v492 = vunpack.c.l.b16 %v178
      %v493 = vunpack.c.h.b16 %v178
      %v494 = vunpack.c.l.b16 %v179
      %v495 = vunpack.c.h.b16 %v179
      %v496 = vunpack.c.l.b16 %v180
      %v497 = vunpack.c.h.b16 %v180
      %v498 = vunpack.c.l.b16 %v181
      %v499 = vunpack.c.h.b16 %v181
      %v500 = vunpack.c.l.b16 %v182
      %v501 = vunpack.c.h.b16 %v182
      %v502 = vunpack.c.l.b16 %v183
      %v503 = vunpack.c.h.b16 %v183
      %v504 = vunpack.c.l.b16 %v184
      %v505 = vunpack.c.h.b16 %v184
      %v506 = vunpack.c.l.b16 %v185
      %v507 = vunpack.c.h.b16 %v185
      %v508 = vunpack.c.l.b16 %v186
      %v509 = vunpack.c.h.b16 %v186
      %v510 = vunpack.c.l.b16 %v187
      %v511 = vunpack.c.h.b16 %v187
      %v512 = vunpack.c.l.b16 %v188
      %v513 = vunpack.c.h.b16 %v188
      %v514 = vunpack.c.l.b16 %v189
      %v515 = vunpack.c.h.b16 %v189
      %v516 = vunpack.c.l.b16 %v190
      %v517 = vunpack.c.h.b16 %v190
      %v518 = vunpack.c.l.b16 %v191
      %v519 = vunpack.c.h.b16 %v191
      %v520 = vunpack.c.l.b16 %v192
      %v521 = vunpack.c.h.b16 %v192
      %v522 = vunpack.c.l.b16 %v193
      %v523 = vunpack.c.h.b16 %v193
      %v524 = vunpack.c.l.b16 %v194
      %v525 = vunpack.c.h.b16 %v194
      %v526 = vunpack.c.l.b16 %v195
      %v527 = vunpack.c.h.b16 %v195
      %v528 = vunpack.c.l.b16 %v196
      %v529 = vunpack.c.h.b16 %v196
      %v530 = vunpack.c.l.b16 %v197
      %v531 = vunpack.c.h.b16 %v197
      %v532 = vunpack.c.l.b16 %v198
      %v533 = vunpack.c.h.b16 %v198
      %v534 = vunpack.c.l.b16 %v199
      %v535 = vunpack.c.h.b16 %v199
      %v536 = vunpack.c.l.b16 %v200
      %v537 = vunpack.c.h.b16 %v200
      %v538 = vunpack.c.l.b16 %v201
      %v539 = vunpack.c.h.b16 %v201
      %v540 = vunpack.c.l.b16 %v202
      %v541 = vunpack.c.h.b16 %v202
      %v542 = vunpack.c.l.b16 %v203
      %v543 = vunpack.c.h.b16 %v203
      %v544 = vunpack.c.l.b16 %v204
      %v545 = vunpack.c.h.b16 %v204
      %v546 = vunpack.c.l.b16 %v205
      %v547 = vunpack.c.h.b16 %v205
      %v548 = vpack.c.b16 %v486, %v484
      %v549 = vpack.c.b16 %v487, %v485
      %v550 = vpack.c.b16 %v490, %v488
      %v551 = vpack.c.b16 %v491, %v489
      %v552 = vpack.c.b16 %v494, %v492
      %v553 = vpack.c.b16 %v495, %v493
      %v554 = vpack.c.b16 %v498, %v496
      %v555 = vpack.c.b16 %v499, %v497
      %v556 = vpack.c.b16 %v502, %v500
      %v557 = vpack.c.b16 %v503, %v501
      %v558 = vpack.c.b16 %v506, %v504
      %v559 = vpack.c.b16 %v507, %v505
      %v560 = vpack.c.b16 %v510, %v508
      %v561 = vpack.c.b16 %v511, %v509
      %v562 = vpack.c.b16 %v514, %v512
      %v563 = vpack.c.b16 %v515, %v513
      %v564 = vpack.c.b16 %v518, %v516
      %v565 = vpack.c.b16 %v519, %v517
      %v566 = vpack.c.b16 %v522, %v520
      %v567 = vpack.c.b16 %v523, %v521
      %v568 = vpack.c.b16 %v526, %v524
      %v569 = vpack.c.b16 %v527, %v525
      %v570 = vpack.c.b16 %v530, %v528
      %v571 = vpack.c.b16 %v531, %v529
      %v572 = vpack.c.b16 %v534, %v532
      %v573 = vpack.c.b16 %v535, %v533
      %v574 = vpack.c.b16 %v538, %v536
      %v575 = vpack.c.b16 %v539, %v537
      %v576 = vpack.c.b16 %v542, %v540
      %v577 = vpack.c.b16 %v543, %v541
      %v578 = vpack.c.b16 %v546, %v544
      %v579 = vpack.c.b16 %v547, %v545
      %612 = vmatprep.subr.bf16.mxu0 %v563
      %613 = vmatpush1.bf16.msra.mxu0 %v562
      %614 = vmatprep.subr.bf16.mxu0 %v561
      %615 = vmatpush1.bf16.msra.mxu0 %v560
      %616 = vmatprep.subr.bf16.mxu0 %v559
      %617 = vmatpush1.bf16.msra.mxu0 %v558
      %618 = vmatprep.subr.bf16.mxu0 %v557
      %619 = vmatpush1.bf16.msra.mxu0 %v556
      %620 = vmatprep.subr.bf16.mxu0 %v555
      %621 = vmatpush1.bf16.msra.mxu0 %v554
      %622 = vmatprep.subr.bf16.mxu0 %v553
      %623 = vmatpush1.bf16.msra.mxu0 %v552
      %624 = vmatprep.subr.bf16.mxu0 %v551
      %625 = vmatpush1.bf16.msra.mxu0 %v550
      %626 = vmatprep.subr.bf16.mxu0 %v549
      %627 = vmatpush1.bf16.msra.mxu0 %v548
      %628 = vmatprep.subr.bf16.mxu0 %v579
      %629 = vmatpush2.bf16.msra.mxu0 %v578
      %630 = vmatprep.subr.bf16.mxu0 %v577
      %631 = vmatpush2.bf16.msra.mxu0 %v576
      %632 = vmatprep.subr.bf16.mxu0 %v575
      %633 = vmatpush2.bf16.msra.mxu0 %v574
      %634 = vmatprep.subr.bf16.mxu0 %v573
      %635 = vmatpush2.bf16.msra.mxu0 %v572
      %636 = vmatprep.subr.bf16.mxu0 %v571
      %637 = vmatpush2.bf16.msra.mxu0 %v570
      %638 = vmatprep.subr.bf16.mxu0 %v569
      %639 = vmatpush2.bf16.msra.mxu0 %v568
      %640 = vmatprep.subr.bf16.mxu0 %v567
      %641 = vmatpush2.bf16.msra.mxu0 %v566
      %642 = vmatprep.subr.bf16.mxu0 %v565
      %643 = vmatpush2.bf16.msra.mxu0 %v564
      %644 = vmatprep.mubr.bf16.mxu0 %v243
      %645 = vmatmul.mubr.bf16.gmra.mxu0 %v242
      %v646 = vpop.f32.mrf.mxu0
      %v647 = vadd.f32 %v450, %v646
      %v648 = vpop.f32.mrf.mxu0
      %v649 = vadd.f32 %v451, %v648
      %v650 = vpop.f32.mrf.mxu0
      %v651 = vpop.f32.mrf.mxu0
      %652 = vdwg.mxu0
      %v653 = vld [vmem:[%s2] sm:$0x3]
      %v655 = vlaneseq
      %v656 = vshrl.u32 %v655, 7
      %v657 = vsub.s32 0, %v656
      %v658 = vrot.slane %v653, %v657
      %v659 = vlaneseq
      %v660 = vshrl.u32 %v659, 7
      %v661 = vsub.s32 1, %v660
      %v662 = vrot.slane %v653, %v661
      %v665 = vadd.f32 %v647, %v658
      %v666 = vadd.f32 %v649, %v662
      %v667 = vrot.slane %v665, 4
      %v668 = vadd.f32 %v665, %v667
      %v669 = vrot.slane %v668, 2
      %v670 = vadd.f32 %v668, %v669
      %v671 = vrot.slane %v670, 1
      %v672 = vadd.f32 %v670, %v671
      %v673 = vrot.slane %v666, 4
      %v674 = vadd.f32 %v666, %v673
      %v675 = vrot.slane %v674, 2
      %v676 = vadd.f32 %v674, %v675
      %v677 = vrot.slane %v676, 1
      %v678 = vadd.f32 %v676, %v677
      %v679 = vrcp.pop 8.0
      %v680 = vmul.f32 %v672, %v679
      %v681 = vmul.f32 %v678, %v679
      %v682 = vadd.f32 %v680, %v681
      %v683 = vmul.f32 %v682, 0.5
      %v684 = vlaneseq
      %v685 = vshrl.u32 %v684, 7
      %v686 = vsub.s32 0, %v685
      %v687 = vrot.slane %v683, %v686
      %v688 = vsub.f32 %v665, %v687
      %v689 = vsub.f32 %v666, %v687
      %v690 = vmul.f32 %v688, %v688
      %v691 = vmul.f32 %v689, %v689
      %v692 = vrot.slane %v690, 4
      %v693 = vadd.f32 %v690, %v692
      %v694 = vrot.slane %v693, 2
      %v695 = vadd.f32 %v693, %v694
      %v696 = vrot.slane %v695, 1
      %v697 = vadd.f32 %v695, %v696
      %v698 = vrot.slane %v691, 4
      %v699 = vadd.f32 %v691, %v698
      %v700 = vrot.slane %v699, 2
      %v701 = vadd.f32 %v699, %v700
      %v702 = vrot.slane %v701, 1
      %v703 = vadd.f32 %v701, %v702
      %v704 = vmul.f32 %v697, %v679
      %v705 = vmul.f32 %v703, %v679
      %v706 = vadd.f32 %v704, %v705
      %v707 = vmul.f32 %v706, 0.5
      %v708 = vadd.f32 %v707, 1e-05
      %v709 = vrsqrt.pop %v708
      %v710 = vlaneseq
      %v711 = vshrl.u32 %v710, 7
      %v712 = vsub.s32 0, %v711
      %v713 = vrot.slane %v709, %v712
      %v714 = vmul.f32 %v688, %v713
      %v715 = vmul.f32 %v689, %v713
      %v716 = vmax.f32 %v714, 0.0
      %v717 = vmax.f32 %v715, 0.0
      %v718 = vpack.c.bf16 %v716, %v716
      %v719 = vpack.c.bf16 %v717, %v717
      %v722 = vunpack.c.l.b16 %v718
      %v723 = vunpack.c.l.b16 %v719
      %v724 = vpack.c.b16 %v723, %v722
      %726 = vst [vmem:[%s170] sm:$0xff] %v724
      %p727 = scmp.lt.s32.totalorder %s14, 1
      %s728 = scalar_select %p727, %s14, 1
      %s729 = smul.addr %s728, 2
      %s730 = smul.addr %s729, 4
      %s731 = scalar_lea.vmem %s3, %s730
      // Predicated region
      $region33: #{generator_forward.11} parent=31 // pred_check
        %p732 = pneg %p100
      $region34: #{generator_forward.11} parent=31 // pred_check_branch
        %734 = sbr.rel (%p732) target = $region36
      $region35: #{generator_forward.11} parent=31 // pred_region
        _
      $region36: #{generator_forward.11} parent=31 // pred_fallthru
        _
    $region32: #{generator_forward.11} parent=5 // pred_fallthru
      _
    %p735 = scmp.le.s32.totalorder 2, %s9
    // Predicated region
    $region37: #{generator_forward.11} parent=5 // pred_check
      %p736 = pneg %p735
    $region38: #{generator_forward.11} parent=5 // pred_check_branch
      %738 = sbr.rel (%p736) target = $region40
    $region39: #{generator_forward.11} parent=5 // pred_region
      %s739 = ssub.s32 %s9, 2
      // Predicated region
      $region41: #{generator_forward.11} parent=39 // pred_check
        %p740 = pneg %p106
      $region42: #{generator_forward.11} parent=39 // pred_check_branch
        %742 = sbr.rel (%p740) target = $region44
      $region43: #{generator_forward.11} parent=39 // pred_region
        %p743 = scmp.lt.s32.totalorder %s15, 1
        %s744 = scalar_select %p743, %s15, 1
        %s745 = smul.addr %s744, 2
        %s746 = smul.addr %s745, 4
        %s747 = scalar_lea.vmem %s3, %s746
      $region44: #{generator_forward.11} parent=39 // pred_fallthru
        _
    $region40: #{generator_forward.11} parent=5 // pred_fallthru
      _
  $region6: #{generator_forward.11} parent=0 // loop_footer
    %s13 = sadd.s32 1, %s9
  $region7: #{generator_forward.11} parent=0 // loop_footer_branch
    %8 = sbr.rel target = $region3
  $region8: #{generator_forward.11} parent=0 // loop_exit
    _

// kernel: generator_forward.12
$region0: #{generator_forward.12}
  #allocation0 [shape = 'u32[]', space=smem, size = 0x4, offset = 0x4, fixed_abs, tag = 'smem constant byte address 0x4 - core index']
  #allocation1 [shape = 'u32[144,128]{1,0:T(1,128)}', space=vmem, size = 0x12000, scoped, tag = 'internal scratch']
  %s0 = inlined_call_operand.vmem [shape: bf16[2,16,128], index: 0, kind: input, shape index: {}]
  %s1 = inlined_call_operand.vmem [shape: bf16[2,128,128], index: 1, kind: input, shape index: {}]
  %s2 = inlined_call_operand.vmem [shape: f32[1,128], index: 2, kind: input, shape index: {}]
  %s3 = inlined_call_operand.vmem [shape: bf16[2,16,128], index: 3, kind: output, shape index: {}]
  %s4 = sld [smem:[#allocation0]]
  $region45: #{generator_forward.12} parent=0
    _
  %s6 = ssub.s32 1, %s4
  %s7 = scalar_select 0, %s6, %s4
  loop: start=0, step=1, limit=4
  $region2: #{generator_forward.12} parent=0 // loop_pre_header
    _
  $region3: #{generator_forward.12} parent=0 // loop_header
    %s9 = sphi 0, %s13
    %p10 = scmp.ge.s32.totalorder %s9, 4
    %s19 = sphi 0, %s21
    %s22 = sphi 0, %s19
    %s23 = sphi 0, %s22
    %s39 = sphi 0, %s23
    %s43 = sphi 0, %s43
    %s45 = sphi 0, %s43
    %s46 = sphi 0, %s45
    %s60 = sphi 0, %s46
    %s64 = sphi 0, %s64
    %s66 = sphi 0, %s64
    %s67 = sphi 0, %s66
    %s81 = sphi 0, %s67
    %s87 = sphi 0, %s89
    %s90 = sphi 0, %s87
    %s91 = sphi 0, %s90
    %s107 = sphi 0, %s91
  $region4: #{generator_forward.12} parent=0 // loop_header_branch
    %12 = sbr.rel (%p10) target = $region8
  $region5: #{generator_forward.12} parent=0 // loop_body
    %s14 = ssub.s32 %s9, 1
    %s15 = ssub.s32 %s9, 2
    %s16 = sadd.s32 %s9, 1
    %s17 = ssub.s32 %s9, %s16
    %p18 = scmp.eq.s32.totalorder %s17, 0
    %s20 = sadd.s32 %s19, 1
    %s21 = scalar_select %p18, %s19, %s20
    %p24 = pneg %p18
    %p25 = scmp.eq.s32.totalorder %s9, 1
    %p26 = por %p24, %p25
    %p27 = scmp.ne.s32.totalorder %s19, %s22
    %p28 = scmp.eq.s32.totalorder %s9, 0
    %p29 = por %p27, %p28
    %p30 = scmp.ne.s32.totalorder %s19, %s22
    %p31 = scmp.eq.s32.totalorder %s14, 1
    %p32 = por %p30, %p31
    %p33 = scmp.ne.s32.totalorder %s22, %s23
    %p34 = scmp.eq.s32.totalorder %s14, 0
    %p35 = por %p33, %p34
    %p36 = scmp.ne.s32.totalorder %s22, %s23
    %p37 = scmp.eq.s32.totalorder %s15, 1
    %p38 = por %p36, %p37
    %p40 = scmp.ne.s32.totalorder %s23, %s39
    %p41 = scmp.eq.s32.totalorder %s15, 0
    %p42 = por %p40, %p41
    %s44 = sadd.s32 %s43, 1
    %p47 = scmp.eq.s32.totalorder %s9, 1
    %p48 = scmp.ne.s32.totalorder %s43, %s45
    %p49 = scmp.eq.s32.totalorder %s9, 0
    %p50 = por %p48, %p49
    %p51 = scmp.ne.s32.totalorder %s43, %s45
    %p52 = scmp.eq.s32.totalorder %s14, 1
    %p53 = por %p51, %p52
    %p54 = scmp.ne.s32.totalorder %s45, %s46
    %p55 = scmp.eq.s32.totalorder %s14, 0
    %p56 = por %p54, %p55
    %p57 = scmp.ne.s32.totalorder %s45, %s46
    %p58 = scmp.eq.s32.totalorder %s15, 1
    %p59 = por %p57, %p58
    %p61 = scmp.ne.s32.totalorder %s46, %s60
    %p62 = scmp.eq.s32.totalorder %s15, 0
    %p63 = por %p61, %p62
    %s65 = sadd.s32 %s64, 1
    %p68 = scmp.eq.s32.totalorder %s9, 1
    %p69 = scmp.ne.s32.totalorder %s64, %s66
    %p70 = scmp.eq.s32.totalorder %s9, 0
    %p71 = por %p69, %p70
    %p72 = scmp.ne.s32.totalorder %s64, %s66
    %p73 = scmp.eq.s32.totalorder %s14, 1
    %p74 = por %p72, %p73
    %p75 = scmp.ne.s32.totalorder %s66, %s67
    %p76 = scmp.eq.s32.totalorder %s14, 0
    %p77 = por %p75, %p76
    %p78 = scmp.ne.s32.totalorder %s66, %s67
    %p79 = scmp.eq.s32.totalorder %s15, 1
    %p80 = por %p78, %p79
    %p82 = scmp.ne.s32.totalorder %s67, %s81
    %p83 = scmp.eq.s32.totalorder %s15, 0
    %p84 = por %p82, %p83
    %s85 = ssub.s32 %s9, %s16
    %p86 = scmp.eq.s32.totalorder %s85, 0
    %s88 = sadd.s32 %s87, 1
    %s89 = scalar_select %p86, %s87, %s88
    %p92 = pneg %p86
    %p93 = scmp.eq.s32.totalorder %s9, 1
    %p94 = por %p92, %p93
    %p95 = scmp.ne.s32.totalorder %s87, %s90
    %p96 = scmp.eq.s32.totalorder %s9, 0
    %p97 = por %p95, %p96
    %p98 = scmp.ne.s32.totalorder %s87, %s90
    %p99 = scmp.eq.s32.totalorder %s14, 1
    %p100 = por %p98, %p99
    %p101 = scmp.ne.s32.totalorder %s90, %s91
    %p102 = scmp.eq.s32.totalorder %s14, 0
    %p103 = por %p101, %p102
    %p104 = scmp.ne.s32.totalorder %s90, %s91
    %p105 = scmp.eq.s32.totalorder %s15, 1
    %p106 = por %p104, %p105
    %p108 = scmp.ne.s32.totalorder %s91, %s107
    %p109 = scmp.eq.s32.totalorder %s15, 0
    %p110 = por %p108, %p109
    %p111 = scmp.le.s32.totalorder 1, %s9
    %p112 = scmp.lt.s32.totalorder %s9, 3
    %p113 = pnand %p111, %p112
    %p114 = pneg %p113
    // Predicated region
    $region9: #{generator_forward.12} parent=5 // pred_check
      _
    $region10: #{generator_forward.12} parent=5 // pred_check_branch
      %116 = sbr.rel (%p113) target = $region12
    $region11: #{generator_forward.12} parent=5 // pred_region
      %s117 = ssub.s32 %s9, 1
      // Predicated region
      $region13: #{generator_forward.12} parent=11 // pred_check
        %p118 = pneg %p56
      $region14: #{generator_forward.12} parent=11 // pred_check_branch
        %120 = sbr.rel (%p118) target = $region16
      $region15: #{generator_forward.12} parent=11 // pred_region
        _
      $region16: #{generator_forward.12} parent=11 // pred_fallthru
        _
      // Predicated region
      $region17: #{generator_forward.12} parent=11 // pred_check
        %p121 = pneg %p77
      $region18: #{generator_forward.12} parent=11 // pred_check_branch
        %123 = sbr.rel (%p121) target = $region20
      $region19: #{generator_forward.12} parent=11 // pred_region
        _
      $region20: #{generator_forward.12} parent=11 // pred_fallthru
        _
    $region12: #{generator_forward.12} parent=5 // pred_fallthru
      _
    %p124 = scmp.lt.s32.totalorder %s9, 2
    // Predicated region
    $region21: #{generator_forward.12} parent=5 // pred_check
      %p125 = pneg %p124
    $region22: #{generator_forward.12} parent=5 // pred_check_branch
      %127 = sbr.rel (%p125) target = $region24
    $region23: #{generator_forward.12} parent=5 // pred_region
      // Predicated region
      $region25: #{generator_forward.12} parent=23 // pred_check
        %p128 = pneg %p29
      $region26: #{generator_forward.12} parent=23 // pred_check_branch
        %130 = sbr.rel (%p128) target = $region28
      $region27: #{generator_forward.12} parent=23 // pred_region
        %p131 = scmp.lt.s32.totalorder %s9, 1
        %s132 = scalar_select %p131, %s9, 1
        %s133 = smul.addr %s132, 2
        %s134 = smul.addr %s133, 4
        %s135 = scalar_lea.vmem %s0, %s134
      $region28: #{generator_forward.12} parent=23 // pred_fallthru
        _
    $region24: #{generator_forward.12} parent=5 // pred_fallthru
      _
    %p136 = scmp.le.s32.totalorder 1, %s9
    %p137 = scmp.lt.s32.totalorder %s9, 3
    %p138 = pnand %p136, %p137
    %p139 = pneg %p138
    // Predicated region
    $region29: #{generator_forward.12} parent=5 // pred_check
      _
    $region30: #{generator_forward.12} parent=5 // pred_check_branch
      %141 = sbr.rel (%p138) target = $region32
    $region31: #{generator_forward.12} parent=5 // pred_region
      %s142 = ssub.s32 %s9, 1
      %p143 = scmp.lt.s32.totalorder %s14, 1
      %s144 = scalar_select %p143, %s14, 1
      %s145 = smul.addr %s144, 2
      %s146 = smul.addr %s145, 4
      %s147 = scalar_lea.vmem %s0, %s146
      %p148 = pneg %p35
      %p149 = pneg %p32
      %p150 = pneg %p56
      %p151 = pneg %p53
      %p152 = pneg %p77
      %p153 = pneg %p74
      %p154 = pneg %p103
      %p155 = pneg %p100
      %p156 = scmp.lt.s32.totalorder %s14, 1
      %s157 = scalar_select %p156, %s14, 1
      %s158 = smul.addr %s157, 2
      %s159 = smul.addr %s158, 4
      %s160 = scalar_lea.vmem %s3, %s159
      %p161 = scmp.lt.s32.totalorder %s14, 1
      %s162 = scalar_select %p161, %s14, 1
      %s163 = smul.addr %s162, 2
      %s164 = smul.addr %s163, 4
      %s165 = scalar_lea.vmem %s0, %s164
      %p166 = scmp.lt.s32.totalorder %s14, 1
      %s167 = scalar_select %p166, %s14, 1
      %s168 = smul.addr %s167, 2
      %s169 = smul.addr %s168, 4
      %s170 = scalar_lea.vmem %s3, %s169
      %v172 = vld [vmem:[%s165] sm:$0xf]
      %v173 = vld [vmem:[%s165 + $0x4] sm:$0xf]
      %v174 = vlaneseq
      %v175 = vshrl.u32 %v174, 7
      %v176 = vadd.s32 %v175, 8
      %v177 = vld [vmem:[%s1] sm:$0xf]
      %v178 = vld [vmem:[%s1 + $0x4] sm:$0xf]
      %v179 = vld [vmem:[%s1 + $0x8] sm:$0xf]
      %v180 = vld [vmem:[%s1 + $0xc] sm:$0xf]
      %v181 = vld [vmem:[%s1 + $0x10] sm:$0xf]
      %v182 = vld [vmem:[%s1 + $0x14] sm:$0xf]
      %v183 = vld [vmem:[%s1 + $0x18] sm:$0xf]
      %v184 = vld [vmem:[%s1 + $0x1c] sm:$0xf]
      %v185 = vld [vmem:[%s1 + $0x20] sm:$0xf]
      %v186 = vld [vmem:[%s1 + $0x24] sm:$0xf]
      %v187 = vld [vmem:[%s1 + $0x28] sm:$0xf]
      %v188 = vld [vmem:[%s1 + $0x2c] sm:$0xf]
      %v189 = vld [vmem:[%s1 + $0x30] sm:$0xf]
      %v190 = vld [vmem:[%s1 + $0x34] sm:$0xf]
      %v191 = vld [vmem:[%s1 + $0x38] sm:$0xf]
      %v192 = vld [vmem:[%s1 + $0x3c] sm:$0xf]
      %s193 = scalar_lea.vmem %s1, 64
      %v194 = vld [vmem:[%s193] sm:$0xf]
      %v195 = vld [vmem:[%s193 + $0x4] sm:$0xf]
      %v196 = vld [vmem:[%s193 + $0x8] sm:$0xf]
      %v197 = vld [vmem:[%s193 + $0xc] sm:$0xf]
      %v198 = vld [vmem:[%s193 + $0x10] sm:$0xf]
      %v199 = vld [vmem:[%s193 + $0x14] sm:$0xf]
      %v200 = vld [vmem:[%s193 + $0x18] sm:$0xf]
      %v201 = vld [vmem:[%s193 + $0x1c] sm:$0xf]
      %v202 = vld [vmem:[%s193 + $0x20] sm:$0xf]
      %v203 = vld [vmem:[%s193 + $0x24] sm:$0xf]
      %v204 = vld [vmem:[%s193 + $0x28] sm:$0xf]
      %v205 = vld [vmem:[%s193 + $0x2c] sm:$0xf]
      %v206 = vld [vmem:[%s193 + $0x30] sm:$0xf]
      %v207 = vld [vmem:[%s193 + $0x34] sm:$0xf]
      %v208 = vld [vmem:[%s193 + $0x38] sm:$0xf]
      %v209 = vld [vmem:[%s193 + $0x3c] sm:$0xf]
      %v212 = vunpack.c.l.b16 %v172
      %v213 = vunpack.c.l.b16 %v173
      %v214 = vpack.c.b16 %v213, %v212
      %v232 = vunpack.c.l.b16 %v194
      %v233 = vunpack.c.l.b16 %v195
      %v234 = vunpack.c.l.b16 %v196
      %v235 = vunpack.c.l.b16 %v197
      %v236 = vunpack.c.l.b16 %v198
      %v237 = vunpack.c.l.b16 %v199
      %v238 = vunpack.c.l.b16 %v200
      %v239 = vunpack.c.l.b16 %v201
      %v240 = vunpack.c.l.b16 %v202
      %v241 = vunpack.c.l.b16 %v203
      %v242 = vunpack.c.l.b16 %v204
      %v243 = vunpack.c.l.b16 %v205
      %v244 = vunpack.c.l.b16 %v206
      %v245 = vunpack.c.l.b16 %v207
      %v246 = vunpack.c.l.b16 %v208
      %v247 = vunpack.c.l.b16 %v209
      %v248 = vpack.c.b16 %v233, %v232
      %v249 = vpack.c.b16 %v235, %v234
      %v250 = vpack.c.b16 %v237, %v236
      %v251 = vpack.c.b16 %v239, %v238
      %v252 = vpack.c.b16 %v241, %v240
      %v253 = vpack.c.b16 %v243, %v242
      %v254 = vpack.c.b16 %v245, %v244
      %v255 = vpack.c.b16 %v247, %v246
      %264 = vmatprep.subr.bf16.mxu0 0
      %265 = vmatpush1.bf16.msra.mxu0 %v255
      %266 = vmatprep.subr.bf16.mxu0 0
      %267 = vmatpush1.bf16.msra.mxu0 %v254
      %268 = vmatprep.subr.bf16.mxu0 0
      %269 = vmatpush1.bf16.msra.mxu0 %v253
      %270 = vmatprep.subr.bf16.mxu0 0
      %271 = vmatpush1.bf16.msra.mxu0 %v252
      %272 = vmatprep.subr.bf16.mxu0 0
      %273 = vmatpush1.bf16.msra.mxu0 %v251
      %274 = vmatprep.subr.bf16.mxu0 0
      %275 = vmatpush1.bf16.msra.mxu0 %v250
      %276 = vmatprep.subr.bf16.mxu0 0
      %277 = vmatpush1.bf16.msra.mxu0 %v249
      %278 = vmatprep.subr.bf16.mxu0 0
      %279 = vmatpush1.bf16.msra.mxu0 %v248
      %280 = vmatprep.subr.bf16.mxu0 0
      %281 = vmatpush2.bf16.msra.mxu0 0
      %282 = vmatprep.subr.bf16.mxu0 0
      %283 = vmatpush2.bf16.msra.mxu0 0
      %284 = vmatprep.subr.bf16.mxu0 0
      %285 = vmatpush2.bf16.msra.mxu0 0
      %286 = vmatprep.subr.bf16.mxu0 0
      %287 = vmatpush2.bf16.msra.mxu0 0
      %288 = vmatprep.subr.bf16.mxu0 0
      %289 = vmatpush2.bf16.msra.mxu0 0
      %290 = vmatprep.subr.bf16.mxu0 0
      %291 = vmatpush2.bf16.msra.mxu0 0
      %292 = vmatprep.subr.bf16.mxu0 0
      %293 = vmatpush2.bf16.msra.mxu0 0
      %294 = vmatprep.subr.bf16.mxu0 0
      %295 = vmatpush2.bf16.msra.mxu0 0
      %296 = vmatprep.mubr.bf16.mxu0 0
      %297 = vmatmul.mubr.bf16.gmra.mxu0 %v214
      %v298 = vpop.f32.mrf.mxu0
      %v299 = vadd.f32 0.0, %v298
      %v300 = vpop.f32.mrf.mxu0
      %v301 = vpop.f32.mrf.mxu0
      %v302 = vadd.f32 0.0, %v301
      %v303 = vpop.f32.mrf.mxu0
      %304 = vdwg.mxu0
      %vm305 = vcmp.ge.s32.totalorder %v175, 15
      %vm306 = vcmp.ge.s32.totalorder %v176, 15
      %v307 = vrot.slane %v299, 1
      %v308 = vrot.slane %v302, 1
      %vm309 = vcmp.lt.s32.totalorder %v175, 7
      %v310 = vsel %vm309, %v307, %v308
      %v311 = vsel %vm309, %v308, %v307
      %v312 = vsel %vm305, 0.0, %v310
      %v313 = vsel %vm306, 0.0, %v311
      %v330 = vunpack.c.l.b16 %v177
      %v331 = vunpack.c.l.b16 %v178
      %v332 = vunpack.c.l.b16 %v179
      %v333 = vunpack.c.l.b16 %v180
      %v334 = vunpack.c.l.b16 %v181
      %v335 = vunpack.c.l.b16 %v182
      %v336 = vunpack.c.l.b16 %v183
      %v337 = vunpack.c.l.b16 %v184
      %v338 = vunpack.c.l.b16 %v185
      %v339 = vunpack.c.l.b16 %v186
      %v340 = vunpack.c.l.b16 %v187
      %v341 = vunpack.c.l.b16 %v188
      %v342 = vunpack.c.l.b16 %v189
      %v343 = vunpack.c.l.b16 %v190
      %v344 = vunpack.c.l.b16 %v191
      %v345 = vunpack.c.l.b16 %v192
      %v346 = vpack.c.b16 %v331, %v330
      %v347 = vpack.c.b16 %v333, %v332
      %v348 = vpack.c.b16 %v335, %v334
      %v349 = vpack.c.b16 %v337, %v336
      %v350 = vpack.c.b16 %v339, %v338
      %v351 = vpack.c.b16 %v341, %v340
      %v352 = vpack.c.b16 %v343, %v342
      %v353 = vpack.c.b16 %v345, %v344
      %362 = vmatprep.subr.bf16.mxu0 0
      %363 = vmatpush1.bf16.msra.mxu0 %v353
      %364 = vmatprep.subr.bf16.mxu0 0
      %365 = vmatpush1.bf16.msra.mxu0 %v352
      %366 = vmatprep.subr.bf16.mxu0 0
      %367 = vmatpush1.bf16.msra.mxu0 %v351
      %368 = vmatprep.subr.bf16.mxu0 0
      %369 = vmatpush1.bf16.msra.mxu0 %v350
      %370 = vmatprep.subr.bf16.mxu0 0
      %371 = vmatpush1.bf16.msra.mxu0 %v349
      %372 = vmatprep.subr.bf16.mxu0 0
      %373 = vmatpush1.bf16.msra.mxu0 %v348
      %374 = vmatprep.subr.bf16.mxu0 0
      %375 = vmatpush1.bf16.msra.mxu0 %v347
      %376 = vmatprep.subr.bf16.mxu0 0
      %377 = vmatpush1.bf16.msra.mxu0 %v346
      %378 = vmatprep.subr.bf16.mxu0 0
      %379 = vmatpush2.bf16.msra.mxu0 0
      %380 = vmatprep.subr.bf16.mxu0 0
      %381 = vmatpush2.bf16.msra.mxu0 0
      %382 = vmatprep.subr.bf16.mxu0 0
      %383 = vmatpush2.bf16.msra.mxu0 0
      %384 = vmatprep.subr.bf16.mxu0 0
      %385 = vmatpush2.bf16.msra.mxu0 0
      %386 = vmatprep.subr.bf16.mxu0 0
      %387 = vmatpush2.bf16.msra.mxu0 0
      %388 = vmatprep.subr.bf16.mxu0 0
      %389 = vmatpush2.bf16.msra.mxu0 0
      %390 = vmatprep.subr.bf16.mxu0 0
      %391 = vmatpush2.bf16.msra.mxu0 0
      %392 = vmatprep.subr.bf16.mxu0 0
      %393 = vmatpush2.bf16.msra.mxu0 0
      %394 = vmatprep.mubr.bf16.mxu0 0
      %395 = vmatmul.mubr.bf16.gmra.mxu0 %v214
      %v396 = vpop.f32.mrf.mxu0
      %v397 = vadd.f32 %v312, %v396
      %v398 = vpop.f32.mrf.mxu0
      %v399 = vpop.f32.mrf.mxu0
      %v400 = vadd.f32 %v313, %v399
      %v401 = vpop.f32.mrf.mxu0
      %402 = vdwg.mxu0
      %v403 = vld [vmem:[%s2] sm:$0x1]
      %v405 = vlaneseq
      %v406 = vshrl.u32 %v405, 7
      %v407 = vsub.s32 0, %v406
      %v408 = vrot.slane %v403, %v407
      %v410 = vadd.f32 %v397, %v408
      %v411 = vadd.f32 %v400, %v408
      %v412 = vadd.f32 %v410, %v411
      %v413 = vrot.slane %v412, 4
      %v414 = vadd.f32 %v412, %v413
      %v415 = vrot.slane %v414, 2
      %v416 = vadd.f32 %v414, %v415
      %v417 = vrot.slane %v416, 1
      %v418 = vadd.f32 %v416, %v417
      %v419 = vrcp.pop 16.0
      %v420 = vmul.f32 %v418, %v419
      %421 = vrot.lane.b32.xlu0 %v420, 64
      %v422 = vpop.permute.xlu0 %421
      %v423 = vadd.f32 %v420, %v422
      %v424 = vmul.f32 %v423, 0.5
      %v425 = vlaneseq
      %v426 = vshrl.u32 %v425, 7
      %v427 = vsub.s32 0, %v426
      %v428 = vrot.slane %v424, %v427
      %v429 = vsub.f32 %v410, %v428
      %v430 = vsub.f32 %v411, %v428
      %v431 = vmul.f32 %v429, %v429
      %v432 = vmul.f32 %v430, %v430
      %v433 = vadd.f32 %v431, %v432
      %v434 = vrot.slane %v433, 4
      %v435 = vadd.f32 %v433, %v434
      %v436 = vrot.slane %v435, 2
      %v437 = vadd.f32 %v435, %v436
      %v438 = vrot.slane %v437, 1
      %v439 = vadd.f32 %v437, %v438
      %v440 = vmul.f32 %v439, %v419
      %441 = vrot.lane.b32.xlu0 %v440, 64
      %v442 = vpop.permute.xlu0 %441
      %v443 = vadd.f32 %v440, %v442
      %v444 = vmul.f32 %v443, 0.5
      %v445 = vadd.f32 %v444, 1e-05
      %v446 = vrsqrt.pop %v445
      %v447 = vlaneseq
      %v448 = vshrl.u32 %v447, 7
      %v449 = vsub.s32 0, %v448
      %v450 = vrot.slane %v446, %v449
      %v451 = vmul.f32 %v429, %v450
      %v452 = vmul.f32 %v430, %v450
      %v453 = vmax.f32 %v451, 0.0
      %v454 = vmax.f32 %v452, 0.0
      %v455 = vpack.c.bf16 %v454, %v453
      %v457 = vunpack.c.l.b16 %v455
      %v458 = vunpack.c.h.b16 %v455
      %v459 = vpack.c.b16 %v457, %v457
      %v460 = vpack.c.b16 %v458, %v458
      %463 = vst [vmem:[%s170] sm:$0xf] %v459
      %464 = vst [vmem:[%s170 + $0x4] sm:$0xf] %v460
      %p465 = scmp.lt.s32.totalorder %s14, 1
      %s466 = scalar_select %p465, %s14, 1
      %s467 = smul.addr %s466, 2
      %s468 = smul.addr %s467, 4
      %s469 = scalar_lea.vmem %s3, %s468
      // Predicated region
      $region33: #{generator_forward.12} parent=31 // pred_check
        %p470 = pneg %p100
      $region34: #{generator_forward.12} parent=31 // pred_check_branch
        %472 = sbr.rel (%p470) target = $region36
      $region35: #{generator_forward.12} parent=31 // pred_region
        _
      $region36: #{generator_forward.12} parent=31 // pred_fallthru
        _
    $region32: #{generator_forward.12} parent=5 // pred_fallthru
      _
    %p473 = scmp.le.s32.totalorder 2, %s9
    // Predicated region
    $region37: #{generator_forward.12} parent=5 // pred_check
      %p474 = pneg %p473
    $region38: #{generator_forward.12} parent=5 // pred_check_branch
      %476 = sbr.rel (%p474) target = $region40
    $region39: #{generator_forward.12} parent=5 // pred_region
      %s477 = ssub.s32 %s9, 2
      // Predicated region
      $region41: #{generator_forward.12} parent=39 // pred_check
        %p478 = pneg %p106
      $region42: #{generator_forward.12} parent=39 // pred_check_branch
        %480 = sbr.rel (%p478) target = $region44
      $region43: #{generator_forward.12} parent=39 // pred_region
        %p481 = scmp.lt.s32.totalorder %s15, 1
        %s482 = scalar_select %p481, %s15, 1
        %s483 = smul.addr %s482, 2
        %s484 = smul.addr %s483, 4
        %s485 = scalar_lea.vmem %s3, %s484
      $region44: #{generator_forward.12} parent=39 // pred_fallthru
        _
    $region40: #{generator_forward.12} parent=5 // pred_fallthru
      _
  $region6: #{generator_forward.12} parent=0 // loop_footer
    %s13 = sadd.s32 1, %s9
  $region7: #{generator_forward.12} parent=0 // loop_footer_branch
    %8 = sbr.rel target = $region3
  $region8: #{generator_forward.12} parent=0 // loop_exit
    _

// kernel: generator_forward.13
$region0: #{generator_forward.13}
  #allocation0 [shape = 'u32[]', space=smem, size = 0x4, offset = 0x4, fixed_abs, tag = 'smem constant byte address 0x4 - core index']
  #allocation1 [shape = 'u32[144,128]{1,0:T(1,128)}', space=vmem, size = 0x12000, scoped, tag = 'internal scratch']
  #allocation2 [shape = 'f32[1,1]{1,0:T(1,128)S(1)}', space=vmem, size = 0x200, scoped, tag = 'scoped memory for generator_forward.13']
  %s0 = inlined_call_operand.vmem [shape: bf16[2,32,64], index: 0, kind: input, shape index: {}]
  %s1 = inlined_call_operand.vmem [shape: bf16[7,64,1], index: 1, kind: input, shape index: {}]
  %s2 = inlined_call_operand.<no memory space> [shape: f32[1,1], index: 2, kind: input, shape index: {}]
  %s3 = inlined_call_operand.vmem [shape: f32[2,32,1], index: 3, kind: output, shape index: {}]
  %s4 = sld [smem:[#allocation0]]
  $region45: #{generator_forward.13} parent=0
    _
  %s6 = ssub.s32 1, %s4
  %s7 = scalar_select 0, %s6, %s4
  %v8 = vstv %s2
  %9 = vst [vmem:[#allocation2] sm:$0x1] %v8
  loop: start=0, step=1, limit=4
  $region2: #{generator_forward.13} parent=0 // loop_pre_header
    _
  $region3: #{generator_forward.13} parent=0 // loop_header
    %s11 = sphi 0, %s15
    %p12 = scmp.ge.s32.totalorder %s11, 4
    %s21 = sphi 0, %s23
    %s24 = sphi 0, %s21
    %s25 = sphi 0, %s24
    %s41 = sphi 0, %s25
    %s45 = sphi 0, %s45
    %s47 = sphi 0, %s45
    %s48 = sphi 0, %s47
    %s62 = sphi 0, %s48
    %s66 = sphi 0, %s66
    %s68 = sphi 0, %s66
    %s69 = sphi 0, %s68
    %s83 = sphi 0, %s69
    %s89 = sphi 0, %s91
    %s92 = sphi 0, %s89
    %s93 = sphi 0, %s92
    %s109 = sphi 0, %s93
  $region4: #{generator_forward.13} parent=0 // loop_header_branch
    %14 = sbr.rel (%p12) target = $region8
  $region5: #{generator_forward.13} parent=0 // loop_body
    %s16 = ssub.s32 %s11, 1
    %s17 = ssub.s32 %s11, 2
    %s18 = sadd.s32 %s11, 1
    %s19 = ssub.s32 %s11, %s18
    %p20 = scmp.eq.s32.totalorder %s19, 0
    %s22 = sadd.s32 %s21, 1
    %s23 = scalar_select %p20, %s21, %s22
    %p26 = pneg %p20
    %p27 = scmp.eq.s32.totalorder %s11, 1
    %p28 = por %p26, %p27
    %p29 = scmp.ne.s32.totalorder %s21, %s24
    %p30 = scmp.eq.s32.totalorder %s11, 0
    %p31 = por %p29, %p30
    %p32 = scmp.ne.s32.totalorder %s21, %s24
    %p33 = scmp.eq.s32.totalorder %s16, 1
    %p34 = por %p32, %p33
    %p35 = scmp.ne.s32.totalorder %s24, %s25
    %p36 = scmp.eq.s32.totalorder %s16, 0
    %p37 = por %p35, %p36
    %p38 = scmp.ne.s32.totalorder %s24, %s25
    %p39 = scmp.eq.s32.totalorder %s17, 1
    %p40 = por %p38, %p39
    %p42 = scmp.ne.s32.totalorder %s25, %s41
    %p43 = scmp.eq.s32.totalorder %s17, 0
    %p44 = por %p42, %p43
    %s46 = sadd.s32 %s45, 1
    %p49 = scmp.eq.s32.totalorder %s11, 1
    %p50 = scmp.ne.s32.totalorder %s45, %s47
    %p51 = scmp.eq.s32.totalorder %s11, 0
    %p52 = por %p50, %p51
    %p53 = scmp.ne.s32.totalorder %s45, %s47
    %p54 = scmp.eq.s32.totalorder %s16, 1
    %p55 = por %p53, %p54
    %p56 = scmp.ne.s32.totalorder %s47, %s48
    %p57 = scmp.eq.s32.totalorder %s16, 0
    %p58 = por %p56, %p57
    %p59 = scmp.ne.s32.totalorder %s47, %s48
    %p60 = scmp.eq.s32.totalorder %s17, 1
    %p61 = por %p59, %p60
    %p63 = scmp.ne.s32.totalorder %s48, %s62
    %p64 = scmp.eq.s32.totalorder %s17, 0
    %p65 = por %p63, %p64
    %s67 = sadd.s32 %s66, 1
    %p70 = scmp.eq.s32.totalorder %s11, 1
    %p71 = scmp.ne.s32.totalorder %s66, %s68
    %p72 = scmp.eq.s32.totalorder %s11, 0
    %p73 = por %p71, %p72
    %p74 = scmp.ne.s32.totalorder %s66, %s68
    %p75 = scmp.eq.s32.totalorder %s16, 1
    %p76 = por %p74, %p75
    %p77 = scmp.ne.s32.totalorder %s68, %s69
    %p78 = scmp.eq.s32.totalorder %s16, 0
    %p79 = por %p77, %p78
    %p80 = scmp.ne.s32.totalorder %s68, %s69
    %p81 = scmp.eq.s32.totalorder %s17, 1
    %p82 = por %p80, %p81
    %p84 = scmp.ne.s32.totalorder %s69, %s83
    %p85 = scmp.eq.s32.totalorder %s17, 0
    %p86 = por %p84, %p85
    %s87 = ssub.s32 %s11, %s18
    %p88 = scmp.eq.s32.totalorder %s87, 0
    %s90 = sadd.s32 %s89, 1
    %s91 = scalar_select %p88, %s89, %s90
    %p94 = pneg %p88
    %p95 = scmp.eq.s32.totalorder %s11, 1
    %p96 = por %p94, %p95
    %p97 = scmp.ne.s32.totalorder %s89, %s92
    %p98 = scmp.eq.s32.totalorder %s11, 0
    %p99 = por %p97, %p98
    %p100 = scmp.ne.s32.totalorder %s89, %s92
    %p101 = scmp.eq.s32.totalorder %s16, 1
    %p102 = por %p100, %p101
    %p103 = scmp.ne.s32.totalorder %s92, %s93
    %p104 = scmp.eq.s32.totalorder %s16, 0
    %p105 = por %p103, %p104
    %p106 = scmp.ne.s32.totalorder %s92, %s93
    %p107 = scmp.eq.s32.totalorder %s17, 1
    %p108 = por %p106, %p107
    %p110 = scmp.ne.s32.totalorder %s93, %s109
    %p111 = scmp.eq.s32.totalorder %s17, 0
    %p112 = por %p110, %p111
    %p113 = scmp.le.s32.totalorder 1, %s11
    %p114 = scmp.lt.s32.totalorder %s11, 3
    %p115 = pnand %p113, %p114
    %p116 = pneg %p115
    // Predicated region
    $region9: #{generator_forward.13} parent=5 // pred_check
      _
    $region10: #{generator_forward.13} parent=5 // pred_check_branch
      %118 = sbr.rel (%p115) target = $region12
    $region11: #{generator_forward.13} parent=5 // pred_region
      %s119 = ssub.s32 %s11, 1
      // Predicated region
      $region13: #{generator_forward.13} parent=11 // pred_check
        %p120 = pneg %p58
      $region14: #{generator_forward.13} parent=11 // pred_check_branch
        %122 = sbr.rel (%p120) target = $region16
      $region15: #{generator_forward.13} parent=11 // pred_region
        _
      $region16: #{generator_forward.13} parent=11 // pred_fallthru
        _
      // Predicated region
      $region17: #{generator_forward.13} parent=11 // pred_check
        %p123 = pneg %p79
      $region18: #{generator_forward.13} parent=11 // pred_check_branch
        %125 = sbr.rel (%p123) target = $region20
      $region19: #{generator_forward.13} parent=11 // pred_region
        _
      $region20: #{generator_forward.13} parent=11 // pred_fallthru
        _
    $region12: #{generator_forward.13} parent=5 // pred_fallthru
      _
    %p126 = scmp.lt.s32.totalorder %s11, 2
    // Predicated region
    $region21: #{generator_forward.13} parent=5 // pred_check
      %p127 = pneg %p126
    $region22: #{generator_forward.13} parent=5 // pred_check_branch
      %129 = sbr.rel (%p127) target = $region24
    $region23: #{generator_forward.13} parent=5 // pred_region
      // Predicated region
      $region25: #{generator_forward.13} parent=23 // pred_check
        %p130 = pneg %p31
      $region26: #{generator_forward.13} parent=23 // pred_check_branch
        %132 = sbr.rel (%p130) target = $region28
      $region27: #{generator_forward.13} parent=23 // pred_region
        %p133 = scmp.lt.s32.totalorder %s11, 1
        %s134 = scalar_select %p133, %s11, 1
        %s135 = smul.addr %s134, 4
        %s136 = smul.addr %s135, 4
        %s137 = scalar_lea.vmem %s0, %s136
      $region28: #{generator_forward.13} parent=23 // pred_fallthru
        _
    $region24: #{generator_forward.13} parent=5 // pred_fallthru
      _
    %p138 = scmp.le.s32.totalorder 1, %s11
    %p139 = scmp.lt.s32.totalorder %s11, 3
    %p140 = pnand %p138, %p139
    %p141 = pneg %p140
    // Predicated region
    $region29: #{generator_forward.13} parent=5 // pred_check
      _
    $region30: #{generator_forward.13} parent=5 // pred_check_branch
      %143 = sbr.rel (%p140) target = $region32
    $region31: #{generator_forward.13} parent=5 // pred_region
      %s144 = ssub.s32 %s11, 1
      %p145 = scmp.lt.s32.totalorder %s16, 1
      %s146 = scalar_select %p145, %s16, 1
      %s147 = smul.addr %s146, 4
      %s148 = smul.addr %s147, 4
      %s149 = scalar_lea.vmem %s0, %s148
      %p150 = pneg %p37
      %p151 = pneg %p34
      %p152 = pneg %p58
      %p153 = pneg %p55
      %p154 = pneg %p79
      %p155 = pneg %p76
      %p156 = pneg %p105
      %p157 = pneg %p102
      %p158 = scmp.lt.s32.totalorder %s16, 1
      %s159 = scalar_select %p158, %s16, 1
      %s160 = smul.addr %s159, 4
      %s161 = smul.addr %s160, 8
      %s162 = scalar_lea.vmem %s3, %s161
      %p163 = scmp.lt.s32.totalorder %s16, 1
      %s164 = scalar_select %p163, %s16, 1
      %s165 = smul.addr %s164, 4
      %s166 = smul.addr %s165, 4
      %s167 = scalar_lea.vmem %s0, %s166
      %p168 = scmp.lt.s32.totalorder %s16, 1
      %s169 = scalar_select %p168, %s16, 1
      %s170 = smul.addr %s169, 4
      %s171 = smul.addr %s170, 8
      %s172 = scalar_lea.vmem %s3, %s171
      %v174 = vld [vmem:[%s167] sm:$0xf]
      %v175 = vld [vmem:[%s167 + $0x4] sm:$0xf]
      %v176 = vld [vmem:[%s167 + $0x8] sm:$0xf]
      %v177 = vld [vmem:[%s167 + $0xc] sm:$0xf]
      %v178 = vlaneseq
      %v179 = vshrl.u32 %v178, 7
      %v180 = vadd.s32 %v179, 8
      %v181 = vadd.s32 %v179, 16
      %v182 = vadd.s32 %v179, 24
      %v183 = vld [vmem:[%s1] sm:$0xf]
      %v184 = vld [vmem:[%s1 + $0x4] sm:$0xf]
      %v185 = vld [vmem:[%s1 + $0x8] sm:$0xf]
      %v186 = vld [vmem:[%s1 + $0xc] sm:$0xf]
      %v187 = vld [vmem:[%s1 + $0x10] sm:$0xf]
      %v188 = vld [vmem:[%s1 + $0x14] sm:$0xf]
      %v189 = vld [vmem:[%s1 + $0x18] sm:$0xf]
      %v190 = vld [vmem:[%s1 + $0x1c] sm:$0xf]
      %v195 = vunpack.c.l.b16 %v174
      %v196 = vunpack.c.l.b16 %v175
      %v197 = vunpack.c.l.b16 %v176
      %v198 = vunpack.c.l.b16 %v177
      %v199 = vpack.c.b16 %v196, %v195
      %v200 = vpack.c.b16 %v198, %v197
      %v209 = vunpack.c.l.b16 %v183
      %v210 = vunpack.c.l.b16 %v184
      %v211 = vunpack.c.l.b16 %v185
      %v212 = vunpack.c.l.b16 %v186
      %v213 = vunpack.c.l.b16 %v187
      %v214 = vunpack.c.l.b16 %v188
      %v215 = vunpack.c.l.b16 %v189
      %v216 = vunpack.c.l.b16 %v190
      %v217 = vpack.c.b16 %v210, %v209
      %v218 = vpack.c.b16 %v212, %v211
      %v219 = vpack.c.b16 %v214, %v213
      %v220 = vpack.c.b16 %v216, %v215
      %vm225 = vcmask 523264
      %v227 = vsel %vm225, %v199, 0
      %v230 = vsel %vm225, %v200, 0
      %232 = vmatprep.subr.bf16.mxu0 0
      %233 = vmatpush1.bf16.msra.mxu0 0
      %234 = vmatprep.subr.bf16.mxu0 0
      %235 = vmatpush1.bf16.msra.mxu0 0
      %236 = vmatprep.subr.bf16.mxu0 0
      %237 = vmatpush1.bf16.msra.mxu0 0
      %238 = vmatprep.subr.bf16.mxu0 0
      %239 = vmatpush1.bf16.msra.mxu0 0
      %240 = vmatprep.subr.bf16.mxu0 0
      %241 = vmatpush1.bf16.msra.mxu0 %v220
      %242 = vmatprep.subr.bf16.mxu0 0
      %243 = vmatpush1.bf16.msra.mxu0 %v219
      %244 = vmatprep.subr.bf16.mxu0 0
      %245 = vmatpush1.bf16.msra.mxu0 %v218
      %246 = vmatprep.subr.bf16.mxu0 0
      %247 = vmatpush1.bf16.msra.mxu0 %v217
      %248 = vmatprep.subr.bf16.mxu0 0
      %249 = vmatpush2.bf16.msra.mxu0 0
      %250 = vmatprep.subr.bf16.mxu0 0
      %251 = vmatpush2.bf16.msra.mxu0 0
      %252 = vmatprep.subr.bf16.mxu0 0
      %253 = vmatpush2.bf16.msra.mxu0 0
      %254 = vmatprep.subr.bf16.mxu0 0
      %255 = vmatpush2.bf16.msra.mxu0 0
      %256 = vmatprep.subr.bf16.mxu0 0
      %257 = vmatpush2.bf16.msra.mxu0 0
      %258 = vmatprep.subr.bf16.mxu0 0
      %259 = vmatpush2.bf16.msra.mxu0 0
      %260 = vmatprep.subr.bf16.mxu0 0
      %261 = vmatpush2.bf16.msra.mxu0 0
      %262 = vmatprep.subr.bf16.mxu0 0
      %263 = vmatpush2.bf16.msra.mxu0 0
      %264 = vmatprep.mubr.bf16.mxu0 0
      %265 = vmatmul.mubr.bf16.gmra.mxu0 %v227
      %v266 = vpop.f32.mrf.mxu0
      %v267 = vadd.f32 0.0, %v266
      %v268 = vpop.f32.mrf.mxu0
      %v269 = vpop.f32.mrf.mxu0
      %v270 = vadd.f32 0.0, %v269
      %v271 = vpop.f32.mrf.mxu0
      %272 = vmatprep.mubr.bf16.mxu0 0
      %273 = vmatmul.mubr.bf16.gmra.mxu0 %v230
      %v274 = vpop.f32.mrf.mxu0
      %v275 = vadd.f32 0.0, %v274
      %v276 = vpop.f32.mrf.mxu0
      %v277 = vpop.f32.mrf.mxu0
      %v278 = vadd.f32 0.0, %v277
      %v279 = vpop.f32.mrf.mxu0
      %280 = vdwg.mxu0
      %vm281 = vcmp.lt.s32.totalorder %v179, 3
      %vm282 = vcmp.lt.s32.totalorder %v180, 3
      %vm283 = vcmp.lt.s32.totalorder %v181, 3
      %vm284 = vcmp.lt.s32.totalorder %v182, 3
      %v285 = vrot.slane %v267, 5
      %v286 = vrot.slane %v270, 5
      %v287 = vrot.slane %v275, 5
      %v288 = vrot.slane %v278, 5
      %v289 = vsel %vm281, %v287, %v288
      %v290 = vsel %vm281, %v286, %v287
      %v291 = vsel %vm281, %v285, %v286
      %v292 = vsel %vm281, %v288, %v285
      %v293 = vsel %vm281, 0.0, %v292
      %v294 = vsel %vm282, 0.0, %v291
      %v295 = vsel %vm283, 0.0, %v290
      %v296 = vsel %vm284, 0.0, %v289
      %v297 = vadd.f32 %v293, 0.0
      %v298 = vadd.f32 %v294, 0.0
      %v299 = vadd.f32 %v295, 0.0
      %v300 = vadd.f32 %v296, 0.0
      %s301 = scalar_lea.vmem %s1, 32
      %v302 = vld [vmem:[%s301] sm:$0xf]
      %v303 = vld [vmem:[%s301 + $0x4] sm:$0xf]
      %v304 = vld [vmem:[%s301 + $0x8] sm:$0xf]
      %v305 = vld [vmem:[%s301 + $0xc] sm:$0xf]
      %v306 = vld [vmem:[%s301 + $0x10] sm:$0xf]
      %v307 = vld [vmem:[%s301 + $0x14] sm:$0xf]
      %v308 = vld [vmem:[%s301 + $0x18] sm:$0xf]
      %v309 = vld [vmem:[%s301 + $0x1c] sm:$0xf]
      %v318 = vunpack.c.l.b16 %v302
      %v319 = vunpack.c.l.b16 %v303
      %v320 = vunpack.c.l.b16 %v304
      %v321 = vunpack.c.l.b16 %v305
      %v322 = vunpack.c.l.b16 %v306
      %v323 = vunpack.c.l.b16 %v307
      %v324 = vunpack.c.l.b16 %v308
      %v325 = vunpack.c.l.b16 %v309
      %v326 = vpack.c.b16 %v319, %v318
      %v327 = vpack.c.b16 %v321, %v320
      %v328 = vpack.c.b16 %v323, %v322
      %v329 = vpack.c.b16 %v325, %v324
      %334 = vmatprep.subr.bf16.mxu0 0
      %335 = vmatpush1.bf16.msra.mxu0 0
      %336 = vmatprep.subr.bf16.mxu0 0
      %337 = vmatpush1.bf16.msra.mxu0 0
      %338 = vmatprep.subr.bf16.mxu0 0
      %339 = vmatpush1.bf16.msra.mxu0 0
      %340 = vmatprep.subr.bf16.mxu0 0
      %341 = vmatpush1.bf16.msra.mxu0 0
      %342 = vmatprep.subr.bf16.mxu0 0
      %343 = vmatpush1.bf16.msra.mxu0 %v329
      %344 = vmatprep.subr.bf16.mxu0 0
      %345 = vmatpush1.bf16.msra.mxu0 %v328
      %346 = vmatprep.subr.bf16.mxu0 0
      %347 = vmatpush1.bf16.msra.mxu0 %v327
      %348 = vmatprep.subr.bf16.mxu0 0
      %349 = vmatpush1.bf16.msra.mxu0 %v326
      %350 = vmatprep.subr.bf16.mxu0 0
      %351 = vmatpush2.bf16.msra.mxu0 0
      %352 = vmatprep.subr.bf16.mxu0 0
      %353 = vmatpush2.bf16.msra.mxu0 0
      %354 = vmatprep.subr.bf16.mxu0 0
      %355 = vmatpush2.bf16.msra.mxu0 0
      %356 = vmatprep.subr.bf16.mxu0 0
      %357 = vmatpush2.bf16.msra.mxu0 0
      %358 = vmatprep.subr.bf16.mxu0 0
      %359 = vmatpush2.bf16.msra.mxu0 0
      %360 = vmatprep.subr.bf16.mxu0 0
      %361 = vmatpush2.bf16.msra.mxu0 0
      %362 = vmatprep.subr.bf16.mxu0 0
      %363 = vmatpush2.bf16.msra.mxu0 0
      %364 = vmatprep.subr.bf16.mxu0 0
      %365 = vmatpush2.bf16.msra.mxu0 0
      %366 = vmatprep.mubr.bf16.mxu0 0
      %367 = vmatmul.mubr.bf16.gmra.mxu0 %v227
      %v368 = vpop.f32.mrf.mxu0
      %v369 = vadd.f32 0.0, %v368
      %v370 = vpop.f32.mrf.mxu0
      %v371 = vpop.f32.mrf.mxu0
      %v372 = vadd.f32 0.0, %v371
      %v373 = vpop.f32.mrf.mxu0
      %374 = vmatprep.mubr.bf16.mxu0 0
      %375 = vmatmul.mubr.bf16.gmra.mxu0 %v230
      %v376 = vpop.f32.mrf.mxu0
      %v377 = vadd.f32 0.0, %v376
      %v378 = vpop.f32.mrf.mxu0
      %v379 = vpop.f32.mrf.mxu0
      %v380 = vadd.f32 0.0, %v379
      %v381 = vpop.f32.mrf.mxu0
      %382 = vdwg.mxu0
      %vm383 = vcmp.lt.s32.totalorder %v179, 2
      %vm384 = vcmp.lt.s32.totalorder %v180, 2
      %vm385 = vcmp.lt.s32.totalorder %v181, 2
      %vm386 = vcmp.lt.s32.totalorder %v182, 2
      %v387 = vrot.slane %v369, 6
      %v388 = vrot.slane %v372, 6
      %v389 = vrot.slane %v377, 6
      %v390 = vrot.slane %v380, 6
      %v391 = vsel %vm383, %v389, %v390
      %v392 = vsel %vm383, %v388, %v389
      %v393 = vsel %vm383, %v387, %v388
      %v394 = vsel %vm383, %v390, %v387
      %v395 = vsel %vm383, 0.0, %v394
      %v396 = vsel %vm384, 0.0, %v393
      %v397 = vsel %vm385, 0.0, %v392
      %v398 = vsel %vm386, 0.0, %v391
      %v399 = vadd.f32 %v297, %v395
      %v400 = vadd.f32 %v298, %v396
      %v401 = vadd.f32 %v299, %v397
      %v402 = vadd.f32 %v300, %v398
      %s403 = scalar_lea.vmem %s1, 64
      %v404 = vld [vmem:[%s403] sm:$0xf]
      %v405 = vld [vmem:[%s403 + $0x4] sm:$0xf]
      %v406 = vld [vmem:[%s403 + $0x8] sm:$0xf]
      %v407 = vld [vmem:[%s403 + $0xc] sm:$0xf]
      %v408 = vld [vmem:[%s403 + $0x10] sm:$0xf]
      %v409 = vld [vmem:[%s403 + $0x14] sm:$0xf]
      %v410 = vld [vmem:[%s403 + $0x18] sm:$0xf]
      %v411 = vld [vmem:[%s403 + $0x1c] sm:$0xf]
      %v420 = vunpack.c.l.b16 %v404
      %v421 = vunpack.c.l.b16 %v405
      %v422 = vunpack.c.l.b16 %v406
      %v423 = vunpack.c.l.b16 %v407
      %v424 = vunpack.c.l.b16 %v408
      %v425 = vunpack.c.l.b16 %v409
      %v426 = vunpack.c.l.b16 %v410
      %v427 = vunpack.c.l.b16 %v411
      %v428 = vpack.c.b16 %v421, %v420
      %v429 = vpack.c.b16 %v423, %v422
      %v430 = vpack.c.b16 %v425, %v424
      %v431 = vpack.c.b16 %v427, %v426
      %436 = vmatprep.subr.bf16.mxu0 0
      %437 = vmatpush1.bf16.msra.mxu0 0
      %438 = vmatprep.subr.bf16.mxu0 0
      %439 = vmatpush1.bf16.msra.mxu0 0
      %440 = vmatprep.subr.bf16.mxu0 0
      %441 = vmatpush1.bf16.msra.mxu0 0
      %442 = vmatprep.subr.bf16.mxu0 0
      %443 = vmatpush1.bf16.msra.mxu0 0
      %444 = vmatprep.subr.bf16.mxu0 0
      %445 = vmatpush1.bf16.msra.mxu0 %v431
      %446 = vmatprep.subr.bf16.mxu0 0
      %447 = vmatpush1.bf16.msra.mxu0 %v430
      %448 = vmatprep.subr.bf16.mxu0 0
      %449 = vmatpush1.bf16.msra.mxu0 %v429
      %450 = vmatprep.subr.bf16.mxu0 0
      %451 = vmatpush1.bf16.msra.mxu0 %v428
      %452 = vmatprep.subr.bf16.mxu0 0
      %453 = vmatpush2.bf16.msra.mxu0 0
      %454 = vmatprep.subr.bf16.mxu0 0
      %455 = vmatpush2.bf16.msra.mxu0 0
      %456 = vmatprep.subr.bf16.mxu0 0
      %457 = vmatpush2.bf16.msra.mxu0 0
      %458 = vmatprep.subr.bf16.mxu0 0
      %459 = vmatpush2.bf16.msra.mxu0 0
      %460 = vmatprep.subr.bf16.mxu0 0
      %461 = vmatpush2.bf16.msra.mxu0 0
      %462 = vmatprep.subr.bf16.mxu0 0
      %463 = vmatpush2.bf16.msra.mxu0 0
      %464 = vmatprep.subr.bf16.mxu0 0
      %465 = vmatpush2.bf16.msra.mxu0 0
      %466 = vmatprep.subr.bf16.mxu0 0
      %467 = vmatpush2.bf16.msra.mxu0 0
      %468 = vmatprep.mubr.bf16.mxu0 0
      %469 = vmatmul.mubr.bf16.gmra.mxu0 %v227
      %v470 = vpop.f32.mrf.mxu0
      %v471 = vadd.f32 0.0, %v470
      %v472 = vpop.f32.mrf.mxu0
      %v473 = vpop.f32.mrf.mxu0
      %v474 = vadd.f32 0.0, %v473
      %v475 = vpop.f32.mrf.mxu0
      %476 = vmatprep.mubr.bf16.mxu0 0
      %477 = vmatmul.mubr.bf16.gmra.mxu0 %v230
      %v478 = vpop.f32.mrf.mxu0
      %v479 = vadd.f32 0.0, %v478
      %v480 = vpop.f32.mrf.mxu0
      %v481 = vpop.f32.mrf.mxu0
      %v482 = vadd.f32 0.0, %v481
      %v483 = vpop.f32.mrf.mxu0
      %484 = vdwg.mxu0
      %vm485 = vcmp.lt.s32.totalorder %v179, 1
      %vm486 = vcmp.lt.s32.totalorder %v180, 1
      %vm487 = vcmp.lt.s32.totalorder %v181, 1
      %vm488 = vcmp.lt.s32.totalorder %v182, 1
      %v489 = vrot.slane %v471, 7
      %v490 = vrot.slane %v474, 7
      %v491 = vrot.slane %v479, 7
      %v492 = vrot.slane %v482, 7
      %v493 = vsel %vm485, %v491, %v492
      %v494 = vsel %vm485, %v490, %v491
      %v495 = vsel %vm485, %v489, %v490
      %v496 = vsel %vm485, %v492, %v489
      %v497 = vsel %vm485, 0.0, %v496
      %v498 = vsel %vm486, 0.0, %v495
      %v499 = vsel %vm487, 0.0, %v494
      %v500 = vsel %vm488, 0.0, %v493
      %v501 = vadd.f32 %v399, %v497
      %v502 = vadd.f32 %v400, %v498
      %v503 = vadd.f32 %v401, %v499
      %v504 = vadd.f32 %v402, %v500
      %s505 = scalar_lea.vmem %s1, 96
      %v506 = vld [vmem:[%s505] sm:$0xf]
      %v507 = vld [vmem:[%s505 + $0x4] sm:$0xf]
      %v508 = vld [vmem:[%s505 + $0x8] sm:$0xf]
      %v509 = vld [vmem:[%s505 + $0xc] sm:$0xf]
      %v510 = vld [vmem:[%s505 + $0x10] sm:$0xf]
      %v511 = vld [vmem:[%s505 + $0x14] sm:$0xf]
      %v512 = vld [vmem:[%s505 + $0x18] sm:$0xf]
      %v513 = vld [vmem:[%s505 + $0x1c] sm:$0xf]
      %v522 = vunpack.c.l.b16 %v506
      %v523 = vunpack.c.l.b16 %v507
      %v524 = vunpack.c.l.b16 %v508
      %v525 = vunpack.c.l.b16 %v509
      %v526 = vunpack.c.l.b16 %v510
      %v527 = vunpack.c.l.b16 %v511
      %v528 = vunpack.c.l.b16 %v512
      %v529 = vunpack.c.l.b16 %v513
      %v530 = vpack.c.b16 %v523, %v522
      %v531 = vpack.c.b16 %v525, %v524
      %v532 = vpack.c.b16 %v527, %v526
      %v533 = vpack.c.b16 %v529, %v528
      %538 = vmatprep.subr.bf16.mxu0 0
      %539 = vmatpush1.bf16.msra.mxu0 0
      %540 = vmatprep.subr.bf16.mxu0 0
      %541 = vmatpush1.bf16.msra.mxu0 0
      %542 = vmatprep.subr.bf16.mxu0 0
      %543 = vmatpush1.bf16.msra.mxu0 0
      %544 = vmatprep.subr.bf16.mxu0 0
      %545 = vmatpush1.bf16.msra.mxu0 0
      %546 = vmatprep.subr.bf16.mxu0 0
      %547 = vmatpush1.bf16.msra.mxu0 %v533
      %548 = vmatprep.subr.bf16.mxu0 0
      %549 = vmatpush1.bf16.msra.mxu0 %v532
      %550 = vmatprep.subr.bf16.mxu0 0
      %551 = vmatpush1.bf16.msra.mxu0 %v531
      %552 = vmatprep.subr.bf16.mxu0 0
      %553 = vmatpush1.bf16.msra.mxu0 %v530
      %554 = vmatprep.subr.bf16.mxu0 0
      %555 = vmatpush2.bf16.msra.mxu0 0
      %556 = vmatprep.subr.bf16.mxu0 0
      %557 = vmatpush2.bf16.msra.mxu0 0
      %558 = vmatprep.subr.bf16.mxu0 0
      %559 = vmatpush2.bf16.msra.mxu0 0
      %560 = vmatprep.subr.bf16.mxu0 0
      %561 = vmatpush2.bf16.msra.mxu0 0
      %562 = vmatprep.subr.bf16.mxu0 0
      %563 = vmatpush2.bf16.msra.mxu0 0
      %564 = vmatprep.subr.bf16.mxu0 0
      %565 = vmatpush2.bf16.msra.mxu0 0
      %566 = vmatprep.subr.bf16.mxu0 0
      %567 = vmatpush2.bf16.msra.mxu0 0
      %568 = vmatprep.subr.bf16.mxu0 0
      %569 = vmatpush2.bf16.msra.mxu0 0
      %570 = vmatprep.mubr.bf16.mxu0 0
      %571 = vmatmul.mubr.bf16.gmra.mxu0 %v227
      %v572 = vpop.f32.mrf.mxu0
      %v573 = vadd.f32 0.0, %v572
      %v574 = vpop.f32.mrf.mxu0
      %v575 = vpop.f32.mrf.mxu0
      %v576 = vadd.f32 0.0, %v575
      %v577 = vpop.f32.mrf.mxu0
      %578 = vmatprep.mubr.bf16.mxu0 0
      %579 = vmatmul.mubr.bf16.gmra.mxu0 %v230
      %v580 = vpop.f32.mrf.mxu0
      %v581 = vadd.f32 0.0, %v580
      %v582 = vpop.f32.mrf.mxu0
      %v583 = vpop.f32.mrf.mxu0
      %v584 = vadd.f32 0.0, %v583
      %v585 = vpop.f32.mrf.mxu0
      %586 = vdwg.mxu0
      %v587 = vadd.f32 %v501, %v573
      %v588 = vadd.f32 %v502, %v576
      %v589 = vadd.f32 %v503, %v581
      %v590 = vadd.f32 %v504, %v584
      %s591 = scalar_lea.vmem %s1, 128
      %v592 = vld [vmem:[%s591] sm:$0xf]
      %v593 = vld [vmem:[%s591 + $0x4] sm:$0xf]
      %v594 = vld [vmem:[%s591 + $0x8] sm:$0xf]
      %v595 = vld [vmem:[%s591 + $0xc] sm:$0xf]
      %v596 = vld [vmem:[%s591 + $0x10] sm:$0xf]
      %v597 = vld [vmem:[%s591 + $0x14] sm:$0xf]
      %v598 = vld [vmem:[%s591 + $0x18] sm:$0xf]
      %v599 = vld [vmem:[%s591 + $0x1c] sm:$0xf]
      %v608 = vunpack.c.l.b16 %v592
      %v609 = vunpack.c.l.b16 %v593
      %v610 = vunpack.c.l.b16 %v594
      %v611 = vunpack.c.l.b16 %v595
      %v612 = vunpack.c.l.b16 %v596
      %v613 = vunpack.c.l.b16 %v597
      %v614 = vunpack.c.l.b16 %v598
      %v615 = vunpack.c.l.b16 %v599
      %v616 = vpack.c.b16 %v609, %v608
      %v617 = vpack.c.b16 %v611, %v610
      %v618 = vpack.c.b16 %v613, %v612
      %v619 = vpack.c.b16 %v615, %v614
      %624 = vmatprep.subr.bf16.mxu0 0
      %625 = vmatpush1.bf16.msra.mxu0 0
      %626 = vmatprep.subr.bf16.mxu0 0
      %627 = vmatpush1.bf16.msra.mxu0 0
      %628 = vmatprep.subr.bf16.mxu0 0
      %629 = vmatpush1.bf16.msra.mxu0 0
      %630 = vmatprep.subr.bf16.mxu0 0
      %631 = vmatpush1.bf16.msra.mxu0 0
      %632 = vmatprep.subr.bf16.mxu0 0
      %633 = vmatpush1.bf16.msra.mxu0 %v619
      %634 = vmatprep.subr.bf16.mxu0 0
      %635 = vmatpush1.bf16.msra.mxu0 %v618
      %636 = vmatprep.subr.bf16.mxu0 0
      %637 = vmatpush1.bf16.msra.mxu0 %v617
      %638 = vmatprep.subr.bf16.mxu0 0
      %639 = vmatpush1.bf16.msra.mxu0 %v616
      %640 = vmatprep.subr.bf16.mxu0 0
      %641 = vmatpush2.bf16.msra.mxu0 0
      %642 = vmatprep.subr.bf16.mxu0 0
      %643 = vmatpush2.bf16.msra.mxu0 0
      %644 = vmatprep.subr.bf16.mxu0 0
      %645 = vmatpush2.bf16.msra.mxu0 0
      %646 = vmatprep.subr.bf16.mxu0 0
      %647 = vmatpush2.bf16.msra.mxu0 0
      %648 = vmatprep.subr.bf16.mxu0 0
      %649 = vmatpush2.bf16.msra.mxu0 0
      %650 = vmatprep.subr.bf16.mxu0 0
      %651 = vmatpush2.bf16.msra.mxu0 0
      %652 = vmatprep.subr.bf16.mxu0 0
      %653 = vmatpush2.bf16.msra.mxu0 0
      %654 = vmatprep.subr.bf16.mxu0 0
      %655 = vmatpush2.bf16.msra.mxu0 0
      %656 = vmatprep.mubr.bf16.mxu0 0
      %657 = vmatmul.mubr.bf16.gmra.mxu0 %v227
      %v658 = vpop.f32.mrf.mxu0
      %v659 = vadd.f32 0.0, %v658
      %v660 = vpop.f32.mrf.mxu0
      %v661 = vpop.f32.mrf.mxu0
      %v662 = vadd.f32 0.0, %v661
      %v663 = vpop.f32.mrf.mxu0
      %664 = vmatprep.mubr.bf16.mxu0 0
      %665 = vmatmul.mubr.bf16.gmra.mxu0 %v230
      %v666 = vpop.f32.mrf.mxu0
      %v667 = vadd.f32 0.0, %v666
      %v668 = vpop.f32.mrf.mxu0
      %v669 = vpop.f32.mrf.mxu0
      %v670 = vadd.f32 0.0, %v669
      %v671 = vpop.f32.mrf.mxu0
      %672 = vdwg.mxu0
      %vm673 = vcmp.ge.s32.totalorder %v179, 31
      %vm674 = vcmp.ge.s32.totalorder %v180, 31
      %vm675 = vcmp.ge.s32.totalorder %v181, 31
      %vm676 = vcmp.ge.s32.totalorder %v182, 31
      %v677 = vrot.slane %v659, 1
      %v678 = vrot.slane %v662, 1
      %v679 = vrot.slane %v667, 1
      %v680 = vrot.slane %v670, 1
      %vm681 = vcmp.lt.s32.totalorder %v179, 7
      %v682 = vsel %vm681, %v679, %v680
      %v683 = vsel %vm681, %v678, %v679
      %v684 = vsel %vm681, %v677, %v678
      %v685 = vsel %vm681, %v680, %v677
      %v686 = vsel %vm673, 0.0, %v684
      %v687 = vsel %vm674, 0.0, %v683
      %v688 = vsel %vm675, 0.0, %v682
      %v689 = vsel %vm676, 0.0, %v685
      %v690 = vadd.f32 %v587, %v686
      %v691 = vadd.f32 %v588, %v687
      %v692 = vadd.f32 %v589, %v688
      %v693 = vadd.f32 %v590, %v689
      %s694 = scalar_lea.vmem %s1, 160
      %v695 = vld [vmem:[%s694] sm:$0xf]
      %v696 = vld [vmem:[%s694 + $0x4] sm:$0xf]
      %v697 = vld [vmem:[%s694 + $0x8] sm:$0xf]
      %v698 = vld [vmem:[%s694 + $0xc] sm:$0xf]
      %v699 = vld [vmem:[%s694 + $0x10] sm:$0xf]
      %v700 = vld [vmem:[%s694 + $0x14] sm:$0xf]
      %v701 = vld [vmem:[%s694 + $0x18] sm:$0xf]
      %v702 = vld [vmem:[%s694 + $0x1c] sm:$0xf]
      %v711 = vunpack.c.l.b16 %v695
      %v712 = vunpack.c.l.b16 %v696
      %v713 = vunpack.c.l.b16 %v697
      %v714 = vunpack.c.l.b16 %v698
      %v715 = vunpack.c.l.b16 %v699
      %v716 = vunpack.c.l.b16 %v700
      %v717 = vunpack.c.l.b16 %v701
      %v718 = vunpack.c.l.b16 %v702
      %v719 = vpack.c.b16 %v712, %v711
      %v720 = vpack.c.b16 %v714, %v713
      %v721 = vpack.c.b16 %v716, %v715
      %v722 = vpack.c.b16 %v718, %v717
      %727 = vmatprep.subr.bf16.mxu0 0
      %728 = vmatpush1.bf16.msra.mxu0 0
      %729 = vmatprep.subr.bf16.mxu0 0
      %730 = vmatpush1.bf16.msra.mxu0 0
      %731 = vmatprep.subr.bf16.mxu0 0
      %732 = vmatpush1.bf16.msra.mxu0 0
      %733 = vmatprep.subr.bf16.mxu0 0
      %734 = vmatpush1.bf16.msra.mxu0 0
      %735 = vmatprep.subr.bf16.mxu0 0
      %736 = vmatpush1.bf16.msra.mxu0 %v722
      %737 = vmatprep.subr.bf16.mxu0 0
      %738 = vmatpush1.bf16.msra.mxu0 %v721
      %739 = vmatprep.subr.bf16.mxu0 0
      %740 = vmatpush1.bf16.msra.mxu0 %v720
      %741 = vmatprep.subr.bf16.mxu0 0
      %742 = vmatpush1.bf16.msra.mxu0 %v719
      %743 = vmatprep.subr.bf16.mxu0 0
      %744 = vmatpush2.bf16.msra.mxu0 0
      %745 = vmatprep.subr.bf16.mxu0 0
      %746 = vmatpush2.bf16.msra.mxu0 0
      %747 = vmatprep.subr.bf16.mxu0 0
      %748 = vmatpush2.bf16.msra.mxu0 0
      %749 = vmatprep.subr.bf16.mxu0 0
      %750 = vmatpush2.bf16.msra.mxu0 0
      %751 = vmatprep.subr.bf16.mxu0 0
      %752 = vmatpush2.bf16.msra.mxu0 0
      %753 = vmatprep.subr.bf16.mxu0 0
      %754 = vmatpush2.bf16.msra.mxu0 0
      %755 = vmatprep.subr.bf16.mxu0 0
      %756 = vmatpush2.bf16.msra.mxu0 0
      %757 = vmatprep.subr.bf16.mxu0 0
      %758 = vmatpush2.bf16.msra.mxu0 0
      %759 = vmatprep.mubr.bf16.mxu0 0
      %760 = vmatmul.mubr.bf16.gmra.mxu0 %v227
      %v761 = vpop.f32.mrf.mxu0
      %v762 = vadd.f32 0.0, %v761
      %v763 = vpop.f32.mrf.mxu0
      %v764 = vpop.f32.mrf.mxu0
      %v765 = vadd.f32 0.0, %v764
      %v766 = vpop.f32.mrf.mxu0
      %767 = vmatprep.mubr.bf16.mxu0 0
      %768 = vmatmul.mubr.bf16.gmra.mxu0 %v230
      %v769 = vpop.f32.mrf.mxu0
      %v770 = vadd.f32 0.0, %v769
      %v771 = vpop.f32.mrf.mxu0
      %v772 = vpop.f32.mrf.mxu0
      %v773 = vadd.f32 0.0, %v772
      %v774 = vpop.f32.mrf.mxu0
      %775 = vdwg.mxu0
      %vm776 = vcmp.ge.s32.totalorder %v179, 30
      %vm777 = vcmp.ge.s32.totalorder %v180, 30
      %vm778 = vcmp.ge.s32.totalorder %v181, 30
      %vm779 = vcmp.ge.s32.totalorder %v182, 30
      %v780 = vrot.slane %v762, 2
      %v781 = vrot.slane %v765, 2
      %v782 = vrot.slane %v770, 2
      %v783 = vrot.slane %v773, 2
      %vm784 = vcmp.lt.s32.totalorder %v179, 6
      %v785 = vsel %vm784, %v782, %v783
      %v786 = vsel %vm784, %v781, %v782
      %v787 = vsel %vm784, %v780, %v781
      %v788 = vsel %vm784, %v783, %v780
      %v789 = vsel %vm776, 0.0, %v787
      %v790 = vsel %vm777, 0.0, %v786
      %v791 = vsel %vm778, 0.0, %v785
      %v792 = vsel %vm779, 0.0, %v788
      %v793 = vadd.f32 %v690, %v789
      %v794 = vadd.f32 %v691, %v790
      %v795 = vadd.f32 %v692, %v791
      %v796 = vadd.f32 %v693, %v792
      %s797 = scalar_lea.vmem %s1, 192
      %v798 = vld [vmem:[%s797] sm:$0xf]
      %v799 = vld [vmem:[%s797 + $0x4] sm:$0xf]
      %v800 = vld [vmem:[%s797 + $0x8] sm:$0xf]
      %v801 = vld [vmem:[%s797 + $0xc] sm:$0xf]
      %v802 = vld [vmem:[%s797 + $0x10] sm:$0xf]
      %v803 = vld [vmem:[%s797 + $0x14] sm:$0xf]
      %v804 = vld [vmem:[%s797 + $0x18] sm:$0xf]
      %v805 = vld [vmem:[%s797 + $0x1c] sm:$0xf]
      %v814 = vunpack.c.l.b16 %v798
      %v815 = vunpack.c.l.b16 %v799
      %v816 = vunpack.c.l.b16 %v800
      %v817 = vunpack.c.l.b16 %v801
      %v818 = vunpack.c.l.b16 %v802
      %v819 = vunpack.c.l.b16 %v803
      %v820 = vunpack.c.l.b16 %v804
      %v821 = vunpack.c.l.b16 %v805
      %v822 = vpack.c.b16 %v815, %v814
      %v823 = vpack.c.b16 %v817, %v816
      %v824 = vpack.c.b16 %v819, %v818
      %v825 = vpack.c.b16 %v821, %v820
      %830 = vmatprep.subr.bf16.mxu0 0
      %831 = vmatpush1.bf16.msra.mxu0 0
      %832 = vmatprep.subr.bf16.mxu0 0
      %833 = vmatpush1.bf16.msra.mxu0 0
      %834 = vmatprep.subr.bf16.mxu0 0
      %835 = vmatpush1.bf16.msra.mxu0 0
      %836 = vmatprep.subr.bf16.mxu0 0
      %837 = vmatpush1.bf16.msra.mxu0 0
      %838 = vmatprep.subr.bf16.mxu0 0
      %839 = vmatpush1.bf16.msra.mxu0 %v825
      %840 = vmatprep.subr.bf16.mxu0 0
      %841 = vmatpush1.bf16.msra.mxu0 %v824
      %842 = vmatprep.subr.bf16.mxu0 0
      %843 = vmatpush1.bf16.msra.mxu0 %v823
      %844 = vmatprep.subr.bf16.mxu0 0
      %845 = vmatpush1.bf16.msra.mxu0 %v822
      %846 = vmatprep.subr.bf16.mxu0 0
      %847 = vmatpush2.bf16.msra.mxu0 0
      %848 = vmatprep.subr.bf16.mxu0 0
      %849 = vmatpush2.bf16.msra.mxu0 0
      %850 = vmatprep.subr.bf16.mxu0 0
      %851 = vmatpush2.bf16.msra.mxu0 0
      %852 = vmatprep.subr.bf16.mxu0 0
      %853 = vmatpush2.bf16.msra.mxu0 0
      %854 = vmatprep.subr.bf16.mxu0 0
      %855 = vmatpush2.bf16.msra.mxu0 0
      %856 = vmatprep.subr.bf16.mxu0 0
      %857 = vmatpush2.bf16.msra.mxu0 0
      %858 = vmatprep.subr.bf16.mxu0 0
      %859 = vmatpush2.bf16.msra.mxu0 0
      %860 = vmatprep.subr.bf16.mxu0 0
      %861 = vmatpush2.bf16.msra.mxu0 0
      %862 = vmatprep.mubr.bf16.mxu0 0
      %863 = vmatmul.mubr.bf16.gmra.mxu0 %v227
      %v864 = vpop.f32.mrf.mxu0
      %v865 = vadd.f32 0.0, %v864
      %v866 = vpop.f32.mrf.mxu0
      %v867 = vpop.f32.mrf.mxu0
      %v868 = vadd.f32 0.0, %v867
      %v869 = vpop.f32.mrf.mxu0
      %870 = vmatprep.mubr.bf16.mxu0 0
      %871 = vmatmul.mubr.bf16.gmra.mxu0 %v230
      %v872 = vpop.f32.mrf.mxu0
      %v873 = vadd.f32 0.0, %v872
      %v874 = vpop.f32.mrf.mxu0
      %v875 = vpop.f32.mrf.mxu0
      %v876 = vadd.f32 0.0, %v875
      %v877 = vpop.f32.mrf.mxu0
      %878 = vdwg.mxu0
      %vm879 = vcmp.ge.s32.totalorder %v179, 29
      %vm880 = vcmp.ge.s32.totalorder %v180, 29
      %vm881 = vcmp.ge.s32.totalorder %v181, 29
      %vm882 = vcmp.ge.s32.totalorder %v182, 29
      %v883 = vrot.slane %v865, 3
      %v884 = vrot.slane %v868, 3
      %v885 = vrot.slane %v873, 3
      %v886 = vrot.slane %v876, 3
      %vm887 = vcmp.lt.s32.totalorder %v179, 5
      %v888 = vsel %vm887, %v885, %v886
      %v889 = vsel %vm887, %v884, %v885
      %v890 = vsel %vm887, %v883, %v884
      %v891 = vsel %vm887, %v886, %v883
      %v892 = vsel %vm879, 0.0, %v890
      %v893 = vsel %vm880, 0.0, %v889
      %v894 = vsel %vm881, 0.0, %v888
      %v895 = vsel %vm882, 0.0, %v891
      %v896 = vadd.f32 %v793, %v892
      %v897 = vadd.f32 %v794, %v893
      %v898 = vadd.f32 %v795, %v894
      %v899 = vadd.f32 %v796, %v895
      %v900 = vld [vmem:[#allocation2] sm:$0x1]
      %v902 = vlaneseq
      %v903 = vshrl.u32 %v902, 7
      %v904 = vsub.s32 0, %v903
      %v905 = vrot.slane %v900, %v904
      %v907 = vadd.f32 %v896, %v905
      %v908 = vadd.f32 %v897, %v905
      %v909 = vadd.f32 %v898, %v905
      %v910 = vadd.f32 %v899, %v905
      %v911 = vtanh.pop %v907
      %v912 = vtanh.pop %v908
      %v913 = vtanh.pop %v909
      %v914 = vtanh.pop %v910
      %vm915 = vcmask 7168
      %916 = vst.msk [vmem:[%s172] sm:$0xff] %vm915, %v911
      %917 = vst.msk [vmem:[%s172 + $0x8] sm:$0xff] %vm915, %v912
      %918 = vst.msk [vmem:[%s172 + $0x10] sm:$0xff] %vm915, %v913
      %919 = vst.msk [vmem:[%s172 + $0x18] sm:$0xff] %vm915, %v914
      %p920 = scmp.lt.s32.totalorder %s16, 1
      %s921 = scalar_select %p920, %s16, 1
      %s922 = smul.addr %s921, 4
      %s923 = smul.addr %s922, 8
      %s924 = scalar_lea.vmem %s3, %s923
      // Predicated region
      $region33: #{generator_forward.13} parent=31 // pred_check
        %p925 = pneg %p102
      $region34: #{generator_forward.13} parent=31 // pred_check_branch
        %927 = sbr.rel (%p925) target = $region36
      $region35: #{generator_forward.13} parent=31 // pred_region
        _
      $region36: #{generator_forward.13} parent=31 // pred_fallthru
        _
    $region32: #{generator_forward.13} parent=5 // pred_fallthru
      _
    %p928 = scmp.le.s32.totalorder 2, %s11
    // Predicated region
    $region37: #{generator_forward.13} parent=5 // pred_check
      %p929 = pneg %p928
    $region38: #{generator_forward.13} parent=5 // pred_check_branch
      %931 = sbr.rel (%p929) target = $region40
    $region39: #{generator_forward.13} parent=5 // pred_region
      %s932 = ssub.s32 %s11, 2
      // Predicated region
      $region41: #{generator_forward.13} parent=39 // pred_check
        %p933 = pneg %p108
      $region42: #{generator_forward.13} parent=39 // pred_check_branch
        %935 = sbr.rel (%p933) target = $region44
      $region43: #{generator_forward.13} parent=39 // pred_region
        %p936 = scmp.lt.s32.totalorder %s17, 1
        %s937 = scalar_select %p936, %s17, 1
        %s938 = smul.addr %s937, 4
        %s939 = smul.addr %s938, 8
        %s940 = scalar_lea.vmem %s3, %s939
      $region44: #{generator_forward.13} parent=39 // pred_fallthru
        _
    $region40: #{generator_forward.13} parent=5 // pred_fallthru
      _
  $region6: #{generator_forward.13} parent=0 // loop_footer
    %s15 = sadd.s32 1, %s11
  $region7: #{generator_forward.13} parent=0 // loop_footer_branch
    %10 = sbr.rel target = $region3
  $region8: #{generator_forward.13} parent=0 // loop_exit
    _

</llo_original>
